<compile_context>
chip_gen: v7x
topology: tpu7x:2x2x1
jax: 0.10.0
libtpu: 0.0.40
codegen_flags: <defaults>
</compile_context>

<pallas_src>
import functools

import jax
import jax.numpy as jnp
from jax import lax
from jax.experimental import pallas as pl
from jax.experimental.pallas import tpu as pltpu

NEG_SLOPE = 0.01          # torch.nn.LeakyReLU default
SEQ_LEN = 32              # 5 stride-2 convs reduce length 32 -> 1 (dense needs it)
N_LAYERS = 5
KSIZE = 4
TB = 8                    # batch elements per grid step (== sublane width)


def _leaky_relu(x):
    return jnp.where(x >= 0.0, x, NEG_SLOPE * x)


def _lane_pad(c):
    return 128 * pl.cdiv(c, 128)


# ----------------------------------------------------------------------------
# Fused kernel: one grid step == TB batch elements.
#   x_ref       : (L0+2, TB, C0_pad)   temporal-major, zero-padded, lane-dense
#   w{1..5}_ref : (4*Cin_pad_i, Cout_pad_i)  bf16, taps stacked along rows
#   convb_ref   : (5, Cout_max)        f32 per-layer biases (zero padded)
#   densew_ref  : (C5_pad, 128)        bf16, only column 0 real
#   denseb_ref  : (1, 128)             f32, only lane 0 real
#   out_ref     : (TB, 128)            f32, lane/sublane dense
#   buf_a/buf_b : (La, TB, Cscr)/(Lb, TB, Cscr) f32 ping-pong activations
# ----------------------------------------------------------------------------
def _fused_disc_kernel(x_ref, w1_ref, w2_ref, w3_ref, w4_ref, w5_ref,
                       convb_ref, densew_ref, denseb_ref,
                       out_ref, buf_a, buf_b):
    tb = x_ref.shape[1]
    conv_ws = (w1_ref, w2_ref, w3_ref, w4_ref, w5_ref)
    bufs = (buf_a, buf_b)

    src = x_ref
    length = x_ref.shape[0] - 2              # 32
    act = None
    for layer in range(N_LAYERS):
        w_ref = conv_ws[layer]
        cin = w_ref.shape[0] // KSIZE        # lane-padded C_in of this layer
        cout = w_ref.shape[1]                # lane-padded C_out of this layer
        l_out = length // 2
        m = l_out * tb

        # im2col: tap k of output position j (all TB batch rows at once) reads
        # temporal planes k, k+2, ... -> whole (TB, cin) tiles (outer-dim
        # strided read, no sublane gathers).  Merging the leading dims of the
        # (l_out, TB, cin) load is a no-op reshape because TB == 8 sublanes.
        taps = [
            src[pl.ds(k, l_out, stride=2), pl.ds(0, tb), pl.ds(0, cin)]
            .reshape(m, cin)
            for k in range(KSIZE)
        ]
        # Merge the 4 taps into the contraction dim -> ONE MXU GEMM per layer.
        col = jnp.concatenate(taps, axis=-1).astype(jnp.bfloat16)   # (m, 4*cin)
        y = jnp.dot(col, w_ref[...], preferred_element_type=jnp.float32)
        y = y + convb_ref[pl.ds(layer, 1), pl.ds(0, cout)]           # (1, cout)
        y = _leaky_relu(y)                                           # (m, cout) f32

        if layer + 1 < N_LAYERS:
            # Write back (temporal-major) with the zero padding planes the
            # next conv expects at temporal positions 0 and l_out + 1.
            dst = bufs[layer % 2]
            zero_plane = jnp.zeros((1, tb, cout), jnp.float32)
            dst[pl.ds(0, 1), pl.ds(0, tb), pl.ds(0, cout)] = zero_plane
            dst[pl.ds(1, l_out), pl.ds(0, tb), pl.ds(0, cout)] = (
                y.reshape(l_out, tb, cout))
            dst[pl.ds(l_out + 1, 1), pl.ds(0, tb), pl.ds(0, cout)] = zero_plane
            src = dst
        else:
            act = y                                                  # (tb, cout)
        length = l_out

    # Flatten (final temporal length == 1, so features == channels) + dense.
    dout = jnp.dot(act.astype(jnp.bfloat16), densew_ref[...],
                   preferred_element_type=jnp.float32)               # (tb, 128)
    dout = dout + denseb_ref[...]
    out_ref[...] = _leaky_relu(dout)


# ----------------------------------------------------------------------------
# Parameter init (deterministic, PyTorch-like uniform fan-in bounds)
# ----------------------------------------------------------------------------
def init_params(key, n_assets):
    params = {}
    chans = [n_assets] + [(2 ** (i + 1)) * n_assets for i in range(N_LAYERS)]
    for i in range(N_LAYERS):
        c_in, c_out = chans[i], chans[i + 1]
        key, kw, kb = jax.random.split(key, 3)
        bound = 1.0 / jnp.sqrt(c_in * float(KSIZE))
        params[f"conv{i+1}_w"] = jax.random.uniform(
            kw, (c_out, c_in, KSIZE), jnp.float32, -bound, bound)
        params[f"conv{i+1}_b"] = jax.random.uniform(
            kb, (c_out,), jnp.float32, -bound, bound)
    key, kw, kb = jax.random.split(key, 3)
    d_in = 32 * n_assets
    bound = 1.0 / jnp.sqrt(float(d_in))
    params["dense_w"] = jax.random.uniform(kw, (1, d_in), jnp.float32, -bound, bound)
    params["dense_b"] = jax.random.uniform(kb, (1,), jnp.float32, -bound, bound)
    return params


# ----------------------------------------------------------------------------
# One-time packing into per-layer lane-padded, tap-merged bf16 GEMM form.
# (Done once outside the hot path; weights are static.)
# ----------------------------------------------------------------------------
def pack_params(params, n_assets):
    chans = [n_assets] + [(2 ** (i + 1)) * n_assets for i in range(N_LAYERS)]
    c_out_max = max(_lane_pad(c) for c in chans[1:])
    conv_ws = []
    conv_b = jnp.zeros((N_LAYERS, c_out_max), jnp.float32)
    for i in range(N_LAYERS):
        w = params[f"conv{i+1}_w"]                # (C_out, C_in, 4) torch layout
        b = params[f"conv{i+1}_b"]
        c_out, c_in, _ = w.shape
        ci_p, co_p = _lane_pad(c_in), _lane_pad(c_out)
        wk = jnp.transpose(w, (2, 1, 0))          # (4, C_in, C_out): W_k[cin, cout]
        wp = jnp.zeros((KSIZE, ci_p, co_p), jnp.float32)
        wp = wp.at[:, :c_in, :c_out].set(wk)
        # Taps stacked along the contraction dim: row index = k*ci_p + ci.
        conv_ws.append(wp.reshape(KSIZE * ci_p, co_p).astype(jnp.bfloat16))
        conv_b = conv_b.at[i, :c_out].set(b)
    d_in = params["dense_w"].shape[1]             # 32 * n_assets
    d_in_pad = _lane_pad(d_in)
    dense_w = (jnp.zeros((d_in_pad, 128), jnp.float32)
               .at[:d_in, 0].set(params["dense_w"][0]).astype(jnp.bfloat16))
    dense_b = jnp.zeros((1, 128), jnp.float32).at[0, 0].set(params["dense_b"][0])
    return tuple(conv_ws), conv_b, dense_w, dense_b


# ----------------------------------------------------------------------------
# Full forward pass (single pallas_call)
# ----------------------------------------------------------------------------
@functools.partial(jax.jit, static_argnames=("tb",))
def discriminator_forward(packed, x, *, tb=TB):
    conv_ws, conv_b, dense_w, dense_b = packed
    b_sz, c_in, length = x.shape
    assert length == SEQ_LEN, "architecture requires temporal length 32"
    c0_pad = _lane_pad(c_in)                       # pad channels only to 128k
    b_pad = tb * pl.cdiv(b_sz, tb)
    l_pad = SEQ_LEN + 2

    # NCL -> temporal-major / batch-minor / channels-last, zero padded:
    # temporal pad=1 both sides (layer 1 reads it directly), batch padded to a
    # multiple of TB, channels padded to the next multiple of 128 only.
    x_t = jnp.transpose(x, (2, 0, 1))              # (L, B, C)
    x_t = jnp.pad(x_t, ((1, 1), (0, b_pad - b_sz), (0, c0_pad - c_in)))

    # Ping-pong scratch buffers: layer i output needs SEQ_LEN//2**(i+1) + 2
    # temporal planes; outputs alternate buf_a / buf_b.
    out_lens = [SEQ_LEN // (2 ** (i + 1)) for i in range(N_LAYERS - 1)]  # 16,8,4,2
    planes_a = max(out_lens[0::2]) + 2             # 18
    planes_b = max(out_lens[1::2]) + 2             # 10
    c_scr = max(w.shape[1] for w in conv_ws[:N_LAYERS - 1])

    # Explicit VMEM budget (tiny here, but make the scoped limit explicit and
    # scale it with real usage so larger n_assets keeps weights VMEM-resident).
    weight_bytes = sum(w.size * w.dtype.itemsize for w in conv_ws)
    weight_bytes += (conv_b.size * conv_b.dtype.itemsize
                     + dense_w.size * dense_w.dtype.itemsize
                     + dense_b.size * dense_b.dtype.itemsize)
    block_bytes = (l_pad * tb * c0_pad + tb * 128) * 4
    scratch_bytes = (planes_a + planes_b) * tb * c_scr * 4
    need = 2 * (block_bytes + weight_bytes) + scratch_bytes
    vmem_limit = int(min(max(2 * need, 16 * 2 ** 20), 48 * 2 ** 20))

    const = lambda g: (0, 0)
    out = pl.pallas_call(
        _fused_disc_kernel,
        out_shape=jax.ShapeDtypeStruct((b_pad, 128), jnp.float32),
        grid_spec=pltpu.PrefetchScalarGridSpec(
            num_scalar_prefetch=0,
            grid=(b_pad // tb,),
            in_specs=[
                pl.BlockSpec((l_pad, tb, c0_pad), lambda g: (0, g, 0)),
                pl.BlockSpec(conv_ws[0].shape, const),
                pl.BlockSpec(conv_ws[1].shape, const),
                pl.BlockSpec(conv_ws[2].shape, const),
                pl.BlockSpec(conv_ws[3].shape, const),
                pl.BlockSpec(conv_ws[4].shape, const),
                pl.BlockSpec(conv_b.shape, const),
                pl.BlockSpec(dense_w.shape, const),
                pl.BlockSpec(dense_b.shape, const),
            ],
            out_specs=pl.BlockSpec((tb, 128), lambda g: (g, 0)),
            scratch_shapes=[
                pltpu.VMEM((planes_a, tb, c_scr), jnp.float32),
                pltpu.VMEM((planes_b, tb, c_scr), jnp.float32),
            ],
        ),
        compiler_params=pltpu.CompilerParams(
            dimension_semantics=("parallel",),
            vmem_limit_bytes=vmem_limit),
    )(x_t, *conv_ws, conv_b, dense_w, dense_b)

    return out[:b_sz, :1]                          # (B, 1)


# ----------------------------------------------------------------------------
# Pure-JAX reference (mirrors the PyTorch forward) for the correctness check.
# ----------------------------------------------------------------------------
def reference_forward(params, x):
    out = x
    for i in range(N_LAYERS):
        w = params[f"conv{i+1}_w"]
        b = params[f"conv{i+1}_b"]
        out = lax.conv_general_dilated(
            out, w, window_strides=(2,), padding=((1, 1),),
            dimension_numbers=("NCH", "OIH", "NCH"),
            precision=lax.Precision.HIGHEST)
        out = _leaky_relu(out + b[None, :, None])
    bsz = out.shape[0]
    out = out.reshape(bsz, -1)                     # flatten(1, 2)
    out = jnp.dot(out, params["dense_w"].T,
                  precision=lax.Precision.HIGHEST) + params["dense_b"]
    return _leaky_relu(out)


if __name__ == "__main__":
    n_assets = 4
    batch = 16           # 2 batch-tiles of TB=8 -> grid=(2,), both v7x TCs busy

    key = jax.random.PRNGKey(0)
    key, kx = jax.random.split(key)
    x = jax.random.normal(kx, (batch, n_assets, SEQ_LEN), jnp.float32)

    params = init_params(key, n_assets)
    packed = pack_params(params, n_assets)

    out = discriminator_forward(packed, x, tb=TB)
    jax.block_until_ready(out)
    assert out.shape == (batch, 1), out.shape

    ref = reference_forward(params, x)
    err = float(jnp.max(jnp.abs(out - ref)))
    # bf16 GEMM operands with f32 accumulation -> loosened (but safe) tolerance.
    assert jnp.allclose(out, ref, atol=1e-2, rtol=1e-2), ("mismatch vs reference", err)

    print("KERNEL_OK")
</pallas_src>

<mosaic_0001>
module attributes {stable_mosaic.version = 11 : i64} {
  func.func @_fused_disc_kernel(%arg0: i32, %arg1: memref<34x8x128xf32, #tpu.memory_space<vmem>>, %arg2: memref<512x128xbf16, #tpu.memory_space<vmem>>, %arg3: memref<512x128xbf16, #tpu.memory_space<vmem>>, %arg4: memref<512x128xbf16, #tpu.memory_space<vmem>>, %arg5: memref<512x128xbf16, #tpu.memory_space<vmem>>, %arg6: memref<512x128xbf16, #tpu.memory_space<vmem>>, %arg7: memref<5x128xf32, #tpu.memory_space<vmem>>, %arg8: memref<128x128xbf16, #tpu.memory_space<vmem>>, %arg9: memref<1x128xf32, #tpu.memory_space<vmem>>, %arg10: memref<8x128xf32, #tpu.memory_space<vmem>>, %arg11: memref<18x8x128xf32, #tpu.memory_space<vmem>>, %arg12: memref<10x8x128xf32, #tpu.memory_space<vmem>>) attributes {dimension_semantics = [#tpu.dimension_semantics<parallel>], iteration_bounds = array<i64: 2>, scalar_prefetch = 0 : i64, scratch_operands = 2 : i64, tpu.core_type = #tpu.core_type<tc>, window_params = [{transform_indices = @transform_0, window_bounds = array<i64: 34, 8, 128>}, {pipeline_mode = #tpu.pipeline_mode<synchronous>, transform_indices = @transform_1, window_bounds = array<i64: 512, 128>}, {pipeline_mode = #tpu.pipeline_mode<synchronous>, transform_indices = @transform_2, window_bounds = array<i64: 512, 128>}, {pipeline_mode = #tpu.pipeline_mode<synchronous>, transform_indices = @transform_3, window_bounds = array<i64: 512, 128>}, {pipeline_mode = #tpu.pipeline_mode<synchronous>, transform_indices = @transform_4, window_bounds = array<i64: 512, 128>}, {pipeline_mode = #tpu.pipeline_mode<synchronous>, transform_indices = @transform_5, window_bounds = array<i64: 512, 128>}, {pipeline_mode = #tpu.pipeline_mode<synchronous>, transform_indices = @transform_6, window_bounds = array<i64: 5, 128>}, {pipeline_mode = #tpu.pipeline_mode<synchronous>, transform_indices = @transform_7, window_bounds = array<i64: 128, 128>}, {pipeline_mode = #tpu.pipeline_mode<synchronous>, transform_indices = @transform_8, window_bounds = array<i64: 1, 128>}, {transform_indices = @transform_9, window_bounds = array<i64: 8, 128>}]} {
    %c0 = arith.constant 0 : index
    %c0_0 = arith.constant 0 : index
    %c0_1 = arith.constant 0 : index
    %0 = tpu.strided_load %arg1[%c0, %c0_0, %c0_1] {strides = array<i32: 2, 1, 1>} : memref<34x8x128xf32, #tpu.memory_space<vmem>>, vector<16x8x128xf32>
    %1 = vector.shape_cast %0 : vector<16x8x128xf32> to vector<128x128xf32>
    %c1 = arith.constant 1 : index
    %c0_2 = arith.constant 0 : index
    %c0_3 = arith.constant 0 : index
    %2 = tpu.strided_load %arg1[%c1, %c0_2, %c0_3] {strides = array<i32: 2, 1, 1>} : memref<34x8x128xf32, #tpu.memory_space<vmem>>, vector<16x8x128xf32>
    %3 = vector.shape_cast %2 : vector<16x8x128xf32> to vector<128x128xf32>
    %c2 = arith.constant 2 : index
    %c0_4 = arith.constant 0 : index
    %c0_5 = arith.constant 0 : index
    %4 = tpu.strided_load %arg1[%c2, %c0_4, %c0_5] {strides = array<i32: 2, 1, 1>} : memref<34x8x128xf32, #tpu.memory_space<vmem>>, vector<16x8x128xf32>
    %5 = vector.shape_cast %4 : vector<16x8x128xf32> to vector<128x128xf32>
    %c3 = arith.constant 3 : index
    %c0_6 = arith.constant 0 : index
    %c0_7 = arith.constant 0 : index
    %6 = tpu.strided_load %arg1[%c3, %c0_6, %c0_7] {strides = array<i32: 2, 1, 1>} : memref<34x8x128xf32, #tpu.memory_space<vmem>>, vector<16x8x128xf32>
    %7 = vector.shape_cast %6 : vector<16x8x128xf32> to vector<128x128xf32>
    %8 = tpu.concatenate %1, %3, %5, %7 in 1 : vector<128x128xf32>, vector<128x128xf32>, vector<128x128xf32>, vector<128x128xf32> -> vector<128x512xf32>
    %9 = arith.truncf %8 : vector<128x512xf32> to vector<128x512xbf16>
    %c0_8 = arith.constant 0 : index
    %c0_9 = arith.constant 0 : index
    %10 = vector.load %arg2[%c0_8, %c0_9] : memref<512x128xbf16, #tpu.memory_space<vmem>>, vector<512x128xbf16>
    %cst = arith.constant dense<0.000000e+00> : vector<128x128xf32>
    %11 = tpu.matmul %9, %10, %cst {dimension_numbers = #tpu.dot_dimension_numbers<[1], [0], [0], [1], [0, 0, 1, 1], [], []>} : vector<128x512xbf16>, vector<512x128xbf16>, vector<128x128xf32> -> vector<128x128xf32>
    %c0_10 = arith.constant 0 : index
    %c0_11 = arith.constant 0 : index
    %12 = vector.load %arg7[%c0_10, %c0_11] : memref<5x128xf32, #tpu.memory_space<vmem>>, vector<1x128xf32>
    %13 = vector.broadcast %12 : vector<1x128xf32> to vector<128x128xf32>
    %14 = arith.addf %11, %13 : vector<128x128xf32>
    %cst_12 = arith.constant 0.000000e+00 : f32
    %15 = vector.broadcast %cst_12 : f32 to vector<128x128xf32>
    %16 = arith.cmpf oge, %14, %15 : vector<128x128xf32>
    %cst_13 = arith.constant 0.00999999977 : f32
    %17 = vector.broadcast %cst_13 : f32 to vector<128x128xf32>
    %18 = arith.mulf %17, %14 : vector<128x128xf32>
    %19 = arith.select %16, %14, %18 : vector<128x128xi1>, vector<128x128xf32>
    %cst_14 = arith.constant 0.000000e+00 : f32
    %20 = vector.broadcast %cst_14 : f32 to vector<1x8x128xf32>
    %c0_15 = arith.constant 0 : index
    %c0_16 = arith.constant 0 : index
    %c0_17 = arith.constant 0 : index
    %21 = vector.load %arg11[%c0_15, %c0_16, %c0_17] : memref<18x8x128xf32, #tpu.memory_space<vmem>>, vector<1x8x128xf32>
    tpu.vector_store %arg11[%c0_15, %c0_16, %c0_17], %20 {strides = array<i32>} : memref<18x8x128xf32, #tpu.memory_space<vmem>>, vector<1x8x128xf32>,
    %22 = vector.shape_cast %19 : vector<128x128xf32> to vector<16x8x128xf32>
    %c1_18 = arith.constant 1 : index
    %c0_19 = arith.constant 0 : index
    %c0_20 = arith.constant 0 : index
    %23 = vector.load %arg11[%c1_18, %c0_19, %c0_20] : memref<18x8x128xf32, #tpu.memory_space<vmem>>, vector<16x8x128xf32>
    tpu.vector_store %arg11[%c1_18, %c0_19, %c0_20], %22 {strides = array<i32>} : memref<18x8x128xf32, #tpu.memory_space<vmem>>, vector<16x8x128xf32>,
    %c17 = arith.constant 17 : index
    %c0_21 = arith.constant 0 : index
    %c0_22 = arith.constant 0 : index
    %24 = vector.load %arg11[%c17, %c0_21, %c0_22] : memref<18x8x128xf32, #tpu.memory_space<vmem>>, vector<1x8x128xf32>
    tpu.vector_store %arg11[%c17, %c0_21, %c0_22], %20 {strides = array<i32>} : memref<18x8x128xf32, #tpu.memory_space<vmem>>, vector<1x8x128xf32>,
    %c0_23 = arith.constant 0 : index
    %c0_24 = arith.constant 0 : index
    %c0_25 = arith.constant 0 : index
    %25 = tpu.strided_load %arg11[%c0_23, %c0_24, %c0_25] {strides = array<i32: 2, 1, 1>} : memref<18x8x128xf32, #tpu.memory_space<vmem>>, vector<8x8x128xf32>
    %26 = vector.shape_cast %25 : vector<8x8x128xf32> to vector<64x128xf32>
    %c1_26 = arith.constant 1 : index
    %c0_27 = arith.constant 0 : index
    %c0_28 = arith.constant 0 : index
    %27 = tpu.strided_load %arg11[%c1_26, %c0_27, %c0_28] {strides = array<i32: 2, 1, 1>} : memref<18x8x128xf32, #tpu.memory_space<vmem>>, vector<8x8x128xf32>
    %28 = vector.shape_cast %27 : vector<8x8x128xf32> to vector<64x128xf32>
    %c2_29 = arith.constant 2 : index
    %c0_30 = arith.constant 0 : index
    %c0_31 = arith.constant 0 : index
    %29 = tpu.strided_load %arg11[%c2_29, %c0_30, %c0_31] {strides = array<i32: 2, 1, 1>} : memref<18x8x128xf32, #tpu.memory_space<vmem>>, vector<8x8x128xf32>
    %30 = vector.shape_cast %29 : vector<8x8x128xf32> to vector<64x128xf32>
    %c3_32 = arith.constant 3 : index
    %c0_33 = arith.constant 0 : index
    %c0_34 = arith.constant 0 : index
    %31 = tpu.strided_load %arg11[%c3_32, %c0_33, %c0_34] {strides = array<i32: 2, 1, 1>} : memref<18x8x128xf32, #tpu.memory_space<vmem>>, vector<8x8x128xf32>
    %32 = vector.shape_cast %31 : vector<8x8x128xf32> to vector<64x128xf32>
    %33 = tpu.concatenate %26, %28, %30, %32 in 1 : vector<64x128xf32>, vector<64x128xf32>, vector<64x128xf32>, vector<64x128xf32> -> vector<64x512xf32>
    %34 = arith.truncf %33 : vector<64x512xf32> to vector<64x512xbf16>
    %c0_35 = arith.constant 0 : index
    %c0_36 = arith.constant 0 : index
    %35 = vector.load %arg3[%c0_35, %c0_36] : memref<512x128xbf16, #tpu.memory_space<vmem>>, vector<512x128xbf16>
    %cst_37 = arith.constant dense<0.000000e+00> : vector<64x128xf32>
    %36 = tpu.matmul %34, %35, %cst_37 {dimension_numbers = #tpu.dot_dimension_numbers<[1], [0], [0], [1], [0, 0, 1, 1], [], []>} : vector<64x512xbf16>, vector<512x128xbf16>, vector<64x128xf32> -> vector<64x128xf32>
    %c1_38 = arith.constant 1 : index
    %c0_39 = arith.constant 0 : index
    %37 = vector.load %arg7[%c1_38, %c0_39] : memref<5x128xf32, #tpu.memory_space<vmem>>, vector<1x128xf32>
    %38 = vector.broadcast %37 : vector<1x128xf32> to vector<64x128xf32>
    %39 = arith.addf %36, %38 : vector<64x128xf32>
    %cst_40 = arith.constant 0.000000e+00 : f32
    %40 = vector.broadcast %cst_40 : f32 to vector<64x128xf32>
    %41 = arith.cmpf oge, %39, %40 : vector<64x128xf32>
    %cst_41 = arith.constant 0.00999999977 : f32
    %42 = vector.broadcast %cst_41 : f32 to vector<64x128xf32>
    %43 = arith.mulf %42, %39 : vector<64x128xf32>
    %44 = arith.select %41, %39, %43 : vector<64x128xi1>, vector<64x128xf32>
    %cst_42 = arith.constant 0.000000e+00 : f32
    %45 = vector.broadcast %cst_42 : f32 to vector<1x8x128xf32>
    %c0_43 = arith.constant 0 : index
    %c0_44 = arith.constant 0 : index
    %c0_45 = arith.constant 0 : index
    %46 = vector.load %arg12[%c0_43, %c0_44, %c0_45] : memref<10x8x128xf32, #tpu.memory_space<vmem>>, vector<1x8x128xf32>
    tpu.vector_store %arg12[%c0_43, %c0_44, %c0_45], %45 {strides = array<i32>} : memref<10x8x128xf32, #tpu.memory_space<vmem>>, vector<1x8x128xf32>,
    %47 = vector.shape_cast %44 : vector<64x128xf32> to vector<8x8x128xf32>
    %c1_46 = arith.constant 1 : index
    %c0_47 = arith.constant 0 : index
    %c0_48 = arith.constant 0 : index
    %48 = vector.load %arg12[%c1_46, %c0_47, %c0_48] : memref<10x8x128xf32, #tpu.memory_space<vmem>>, vector<8x8x128xf32>
    tpu.vector_store %arg12[%c1_46, %c0_47, %c0_48], %47 {strides = array<i32>} : memref<10x8x128xf32, #tpu.memory_space<vmem>>, vector<8x8x128xf32>,
    %c9 = arith.constant 9 : index
    %c0_49 = arith.constant 0 : index
    %c0_50 = arith.constant 0 : index
    %49 = vector.load %arg12[%c9, %c0_49, %c0_50] : memref<10x8x128xf32, #tpu.memory_space<vmem>>, vector<1x8x128xf32>
    tpu.vector_store %arg12[%c9, %c0_49, %c0_50], %45 {strides = array<i32>} : memref<10x8x128xf32, #tpu.memory_space<vmem>>, vector<1x8x128xf32>,
    %c0_51 = arith.constant 0 : index
    %c0_52 = arith.constant 0 : index
    %c0_53 = arith.constant 0 : index
    %50 = tpu.strided_load %arg12[%c0_51, %c0_52, %c0_53] {strides = array<i32: 2, 1, 1>} : memref<10x8x128xf32, #tpu.memory_space<vmem>>, vector<4x8x128xf32>
    %51 = vector.shape_cast %50 : vector<4x8x128xf32> to vector<32x128xf32>
    %c1_54 = arith.constant 1 : index
    %c0_55 = arith.constant 0 : index
    %c0_56 = arith.constant 0 : index
    %52 = tpu.strided_load %arg12[%c1_54, %c0_55, %c0_56] {strides = array<i32: 2, 1, 1>} : memref<10x8x128xf32, #tpu.memory_space<vmem>>, vector<4x8x128xf32>
    %53 = vector.shape_cast %52 : vector<4x8x128xf32> to vector<32x128xf32>
    %c2_57 = arith.constant 2 : index
    %c0_58 = arith.constant 0 : index
    %c0_59 = arith.constant 0 : index
    %54 = tpu.strided_load %arg12[%c2_57, %c0_58, %c0_59] {strides = array<i32: 2, 1, 1>} : memref<10x8x128xf32, #tpu.memory_space<vmem>>, vector<4x8x128xf32>
    %55 = vector.shape_cast %54 : vector<4x8x128xf32> to vector<32x128xf32>
    %c3_60 = arith.constant 3 : index
    %c0_61 = arith.constant 0 : index
    %c0_62 = arith.constant 0 : index
    %56 = tpu.strided_load %arg12[%c3_60, %c0_61, %c0_62] {strides = array<i32: 2, 1, 1>} : memref<10x8x128xf32, #tpu.memory_space<vmem>>, vector<4x8x128xf32>
    %57 = vector.shape_cast %56 : vector<4x8x128xf32> to vector<32x128xf32>
    %58 = tpu.concatenate %51, %53, %55, %57 in 1 : vector<32x128xf32>, vector<32x128xf32>, vector<32x128xf32>, vector<32x128xf32> -> vector<32x512xf32>
    %59 = arith.truncf %58 : vector<32x512xf32> to vector<32x512xbf16>
    %c0_63 = arith.constant 0 : index
    %c0_64 = arith.constant 0 : index
    %60 = vector.load %arg4[%c0_63, %c0_64] : memref<512x128xbf16, #tpu.memory_space<vmem>>, vector<512x128xbf16>
    %cst_65 = arith.constant dense<0.000000e+00> : vector<32x128xf32>
    %61 = tpu.matmul %59, %60, %cst_65 {dimension_numbers = #tpu.dot_dimension_numbers<[1], [0], [0], [1], [0, 0, 1, 1], [], []>} : vector<32x512xbf16>, vector<512x128xbf16>, vector<32x128xf32> -> vector<32x128xf32>
    %c2_66 = arith.constant 2 : index
    %c0_67 = arith.constant 0 : index
    %62 = vector.load %arg7[%c2_66, %c0_67] : memref<5x128xf32, #tpu.memory_space<vmem>>, vector<1x128xf32>
    %63 = vector.broadcast %62 : vector<1x128xf32> to vector<32x128xf32>
    %64 = arith.addf %61, %63 : vector<32x128xf32>
    %cst_68 = arith.constant 0.000000e+00 : f32
    %65 = vector.broadcast %cst_68 : f32 to vector<32x128xf32>
    %66 = arith.cmpf oge, %64, %65 : vector<32x128xf32>
    %cst_69 = arith.constant 0.00999999977 : f32
    %67 = vector.broadcast %cst_69 : f32 to vector<32x128xf32>
    %68 = arith.mulf %67, %64 : vector<32x128xf32>
    %69 = arith.select %66, %64, %68 : vector<32x128xi1>, vector<32x128xf32>
    %cst_70 = arith.constant 0.000000e+00 : f32
    %70 = vector.broadcast %cst_70 : f32 to vector<1x8x128xf32>
    %c0_71 = arith.constant 0 : index
    %c0_72 = arith.constant 0 : index
    %c0_73 = arith.constant 0 : index
    %71 = vector.load %arg11[%c0_71, %c0_72, %c0_73] : memref<18x8x128xf32, #tpu.memory_space<vmem>>, vector<1x8x128xf32>
    tpu.vector_store %arg11[%c0_71, %c0_72, %c0_73], %70 {strides = array<i32>} : memref<18x8x128xf32, #tpu.memory_space<vmem>>, vector<1x8x128xf32>,
    %72 = vector.shape_cast %69 : vector<32x128xf32> to vector<4x8x128xf32>
    %c1_74 = arith.constant 1 : index
    %c0_75 = arith.constant 0 : index
    %c0_76 = arith.constant 0 : index
    %73 = vector.load %arg11[%c1_74, %c0_75, %c0_76] : memref<18x8x128xf32, #tpu.memory_space<vmem>>, vector<4x8x128xf32>
    tpu.vector_store %arg11[%c1_74, %c0_75, %c0_76], %72 {strides = array<i32>} : memref<18x8x128xf32, #tpu.memory_space<vmem>>, vector<4x8x128xf32>,
    %c5 = arith.constant 5 : index
    %c0_77 = arith.constant 0 : index
    %c0_78 = arith.constant 0 : index
    %74 = vector.load %arg11[%c5, %c0_77, %c0_78] : memref<18x8x128xf32, #tpu.memory_space<vmem>>, vector<1x8x128xf32>
    tpu.vector_store %arg11[%c5, %c0_77, %c0_78], %70 {strides = array<i32>} : memref<18x8x128xf32, #tpu.memory_space<vmem>>, vector<1x8x128xf32>,
    %c0_79 = arith.constant 0 : index
    %c0_80 = arith.constant 0 : index
    %c0_81 = arith.constant 0 : index
    %75 = tpu.strided_load %arg11[%c0_79, %c0_80, %c0_81] {strides = array<i32: 2, 1, 1>} : memref<18x8x128xf32, #tpu.memory_space<vmem>>, vector<2x8x128xf32>
    %76 = vector.shape_cast %75 : vector<2x8x128xf32> to vector<16x128xf32>
    %c1_82 = arith.constant 1 : index
    %c0_83 = arith.constant 0 : index
    %c0_84 = arith.constant 0 : index
    %77 = tpu.strided_load %arg11[%c1_82, %c0_83, %c0_84] {strides = array<i32: 2, 1, 1>} : memref<18x8x128xf32, #tpu.memory_space<vmem>>, vector<2x8x128xf32>
    %78 = vector.shape_cast %77 : vector<2x8x128xf32> to vector<16x128xf32>
    %c2_85 = arith.constant 2 : index
    %c0_86 = arith.constant 0 : index
    %c0_87 = arith.constant 0 : index
    %79 = tpu.strided_load %arg11[%c2_85, %c0_86, %c0_87] {strides = array<i32: 2, 1, 1>} : memref<18x8x128xf32, #tpu.memory_space<vmem>>, vector<2x8x128xf32>
    %80 = vector.shape_cast %79 : vector<2x8x128xf32> to vector<16x128xf32>
    %c3_88 = arith.constant 3 : index
    %c0_89 = arith.constant 0 : index
    %c0_90 = arith.constant 0 : index
    %81 = tpu.strided_load %arg11[%c3_88, %c0_89, %c0_90] {strides = array<i32: 2, 1, 1>} : memref<18x8x128xf32, #tpu.memory_space<vmem>>, vector<2x8x128xf32>
    %82 = vector.shape_cast %81 : vector<2x8x128xf32> to vector<16x128xf32>
    %83 = tpu.concatenate %76, %78, %80, %82 in 1 : vector<16x128xf32>, vector<16x128xf32>, vector<16x128xf32>, vector<16x128xf32> -> vector<16x512xf32>
    %84 = arith.truncf %83 : vector<16x512xf32> to vector<16x512xbf16>
    %c0_91 = arith.constant 0 : index
    %c0_92 = arith.constant 0 : index
    %85 = vector.load %arg5[%c0_91, %c0_92] : memref<512x128xbf16, #tpu.memory_space<vmem>>, vector<512x128xbf16>
    %cst_93 = arith.constant dense<0.000000e+00> : vector<16x128xf32>
    %86 = tpu.matmul %84, %85, %cst_93 {dimension_numbers = #tpu.dot_dimension_numbers<[1], [0], [0], [1], [0, 0, 1, 1], [], []>} : vector<16x512xbf16>, vector<512x128xbf16>, vector<16x128xf32> -> vector<16x128xf32>
    %c3_94 = arith.constant 3 : index
    %c0_95 = arith.constant 0 : index
    %87 = vector.load %arg7[%c3_94, %c0_95] : memref<5x128xf32, #tpu.memory_space<vmem>>, vector<1x128xf32>
    %88 = vector.broadcast %87 : vector<1x128xf32> to vector<16x128xf32>
    %89 = arith.addf %86, %88 : vector<16x128xf32>
    %cst_96 = arith.constant 0.000000e+00 : f32
    %90 = vector.broadcast %cst_96 : f32 to vector<16x128xf32>
    %91 = arith.cmpf oge, %89, %90 : vector<16x128xf32>
    %cst_97 = arith.constant 0.00999999977 : f32
    %92 = vector.broadcast %cst_97 : f32 to vector<16x128xf32>
    %93 = arith.mulf %92, %89 : vector<16x128xf32>
    %94 = arith.select %91, %89, %93 : vector<16x128xi1>, vector<16x128xf32>
    %cst_98 = arith.constant 0.000000e+00 : f32
    %95 = vector.broadcast %cst_98 : f32 to vector<1x8x128xf32>
    %c0_99 = arith.constant 0 : index
    %c0_100 = arith.constant 0 : index
    %c0_101 = arith.constant 0 : index
    %96 = vector.load %arg12[%c0_99, %c0_100, %c0_101] : memref<10x8x128xf32, #tpu.memory_space<vmem>>, vector<1x8x128xf32>
    tpu.vector_store %arg12[%c0_99, %c0_100, %c0_101], %95 {strides = array<i32>} : memref<10x8x128xf32, #tpu.memory_space<vmem>>, vector<1x8x128xf32>,
    %97 = vector.shape_cast %94 : vector<16x128xf32> to vector<2x8x128xf32>
    %c1_102 = arith.constant 1 : index
    %c0_103 = arith.constant 0 : index
    %c0_104 = arith.constant 0 : index
    %98 = vector.load %arg12[%c1_102, %c0_103, %c0_104] : memref<10x8x128xf32, #tpu.memory_space<vmem>>, vector<2x8x128xf32>
    tpu.vector_store %arg12[%c1_102, %c0_103, %c0_104], %97 {strides = array<i32>} : memref<10x8x128xf32, #tpu.memory_space<vmem>>, vector<2x8x128xf32>,
    %c3_105 = arith.constant 3 : index
    %c0_106 = arith.constant 0 : index
    %c0_107 = arith.constant 0 : index
    %99 = vector.load %arg12[%c3_105, %c0_106, %c0_107] : memref<10x8x128xf32, #tpu.memory_space<vmem>>, vector<1x8x128xf32>
    tpu.vector_store %arg12[%c3_105, %c0_106, %c0_107], %95 {strides = array<i32>} : memref<10x8x128xf32, #tpu.memory_space<vmem>>, vector<1x8x128xf32>,
    %c0_108 = arith.constant 0 : index
    %c0_109 = arith.constant 0 : index
    %c0_110 = arith.constant 0 : index
    %100 = tpu.strided_load %arg12[%c0_108, %c0_109, %c0_110] {strides = array<i32: 2, 1, 1>} : memref<10x8x128xf32, #tpu.memory_space<vmem>>, vector<1x8x128xf32>
    %101 = vector.shape_cast %100 : vector<1x8x128xf32> to vector<8x128xf32>
    %c1_111 = arith.constant 1 : index
    %c0_112 = arith.constant 0 : index
    %c0_113 = arith.constant 0 : index
    %102 = tpu.strided_load %arg12[%c1_111, %c0_112, %c0_113] {strides = array<i32: 2, 1, 1>} : memref<10x8x128xf32, #tpu.memory_space<vmem>>, vector<1x8x128xf32>
    %103 = vector.shape_cast %102 : vector<1x8x128xf32> to vector<8x128xf32>
    %c2_114 = arith.constant 2 : index
    %c0_115 = arith.constant 0 : index
    %c0_116 = arith.constant 0 : index
    %104 = tpu.strided_load %arg12[%c2_114, %c0_115, %c0_116] {strides = array<i32: 2, 1, 1>} : memref<10x8x128xf32, #tpu.memory_space<vmem>>, vector<1x8x128xf32>
    %105 = vector.shape_cast %104 : vector<1x8x128xf32> to vector<8x128xf32>
    %c3_117 = arith.constant 3 : index
    %c0_118 = arith.constant 0 : index
    %c0_119 = arith.constant 0 : index
    %106 = tpu.strided_load %arg12[%c3_117, %c0_118, %c0_119] {strides = array<i32: 2, 1, 1>} : memref<10x8x128xf32, #tpu.memory_space<vmem>>, vector<1x8x128xf32>
    %107 = vector.shape_cast %106 : vector<1x8x128xf32> to vector<8x128xf32>
    %108 = tpu.concatenate %101, %103, %105, %107 in 1 : vector<8x128xf32>, vector<8x128xf32>, vector<8x128xf32>, vector<8x128xf32> -> vector<8x512xf32>
    %109 = arith.truncf %108 : vector<8x512xf32> to vector<8x512xbf16>
    %c0_120 = arith.constant 0 : index
    %c0_121 = arith.constant 0 : index
    %110 = vector.load %arg6[%c0_120, %c0_121] : memref<512x128xbf16, #tpu.memory_space<vmem>>, vector<512x128xbf16>
    %cst_122 = arith.constant dense<0.000000e+00> : vector<8x128xf32>
    %111 = tpu.matmul %109, %110, %cst_122 {dimension_numbers = #tpu.dot_dimension_numbers<[1], [0], [0], [1], [0, 0, 1, 1], [], []>} : vector<8x512xbf16>, vector<512x128xbf16>, vector<8x128xf32> -> vector<8x128xf32>
    %c4 = arith.constant 4 : index
    %c0_123 = arith.constant 0 : index
    %112 = vector.load %arg7[%c4, %c0_123] : memref<5x128xf32, #tpu.memory_space<vmem>>, vector<1x128xf32>
    %113 = vector.broadcast %112 : vector<1x128xf32> to vector<8x128xf32>
    %114 = arith.addf %111, %113 : vector<8x128xf32>
    %cst_124 = arith.constant 0.000000e+00 : f32
    %115 = vector.broadcast %cst_124 : f32 to vector<8x128xf32>
    %116 = arith.cmpf oge, %114, %115 : vector<8x128xf32>
    %cst_125 = arith.constant 0.00999999977 : f32
    %117 = vector.broadcast %cst_125 : f32 to vector<8x128xf32>
    %118 = arith.mulf %117, %114 : vector<8x128xf32>
    %119 = arith.select %116, %114, %118 : vector<8x128xi1>, vector<8x128xf32>
    %120 = arith.truncf %119 : vector<8x128xf32> to vector<8x128xbf16>
    %c0_126 = arith.constant 0 : index
    %c0_127 = arith.constant 0 : index
    %121 = vector.load %arg8[%c0_126, %c0_127] : memref<128x128xbf16, #tpu.memory_space<vmem>>, vector<128x128xbf16>
    %cst_128 = arith.constant dense<0.000000e+00> : vector<8x128xf32>
    %122 = tpu.matmul %120, %121, %cst_128 {dimension_numbers = #tpu.dot_dimension_numbers<[1], [0], [0], [1], [0, 0, 1, 1], [], []>} : vector<8x128xbf16>, vector<128x128xbf16>, vector<8x128xf32> -> vector<8x128xf32>
    %c0_129 = arith.constant 0 : index
    %c0_130 = arith.constant 0 : index
    %123 = vector.load %arg9[%c0_129, %c0_130] : memref<1x128xf32, #tpu.memory_space<vmem>>, vector<1x128xf32>
    %124 = vector.broadcast %123 : vector<1x128xf32> to vector<8x128xf32>
    %125 = arith.addf %122, %124 : vector<8x128xf32>
    %cst_131 = arith.constant 0.000000e+00 : f32
    %126 = vector.broadcast %cst_131 : f32 to vector<8x128xf32>
    %127 = arith.cmpf oge, %125, %126 : vector<8x128xf32>
    %cst_132 = arith.constant 0.00999999977 : f32
    %128 = vector.broadcast %cst_132 : f32 to vector<8x128xf32>
    %129 = arith.mulf %128, %125 : vector<8x128xf32>
    %130 = arith.select %127, %125, %129 : vector<8x128xi1>, vector<8x128xf32>
    %c0_133 = arith.constant 0 : index
    %c0_134 = arith.constant 0 : index
    %131 = vector.load %arg10[%c0_133, %c0_134] : memref<8x128xf32, #tpu.memory_space<vmem>>, vector<8x128xf32>
    tpu.vector_store %arg10[%c0_133, %c0_134], %130 {strides = array<i32>} : memref<8x128xf32, #tpu.memory_space<vmem>>, vector<8x128xf32>,
    return
  }
  func.func @transform_0(%arg0: i32) -> (i32, i32, i32) {
    %c0_i32 = arith.constant 0 : i32
    %c0_i32_0 = arith.constant 0 : i32
    %c0_i32_1 = arith.constant 0 : i32
    return %c0_i32, %arg0, %c0_i32_0 : i32, i32, i32
  }
  func.func @transform_1(%arg0: i32) -> (i32, i32) {
    %c0_i32 = arith.constant 0 : i32
    %c0_i32_0 = arith.constant 0 : i32
    %c0_i32_1 = arith.constant 0 : i32
    return %c0_i32, %c0_i32_0 : i32, i32
  }
  func.func @transform_2(%arg0: i32) -> (i32, i32) {
    %c0_i32 = arith.constant 0 : i32
    %c0_i32_0 = arith.constant 0 : i32
    %c0_i32_1 = arith.constant 0 : i32
    return %c0_i32, %c0_i32_0 : i32, i32
  }
  func.func @transform_3(%arg0: i32) -> (i32, i32) {
    %c0_i32 = arith.constant 0 : i32
    %c0_i32_0 = arith.constant 0 : i32
    %c0_i32_1 = arith.constant 0 : i32
    return %c0_i32, %c0_i32_0 : i32, i32
  }
  func.func @transform_4(%arg0: i32) -> (i32, i32) {
    %c0_i32 = arith.constant 0 : i32
    %c0_i32_0 = arith.constant 0 : i32
    %c0_i32_1 = arith.constant 0 : i32
    return %c0_i32, %c0_i32_0 : i32, i32
  }
  func.func @transform_5(%arg0: i32) -> (i32, i32) {
    %c0_i32 = arith.constant 0 : i32
    %c0_i32_0 = arith.constant 0 : i32
    %c0_i32_1 = arith.constant 0 : i32
    return %c0_i32, %c0_i32_0 : i32, i32
  }
  func.func @transform_6(%arg0: i32) -> (i32, i32) {
    %c0_i32 = arith.constant 0 : i32
    %c0_i32_0 = arith.constant 0 : i32
    %c0_i32_1 = arith.constant 0 : i32
    return %c0_i32, %c0_i32_0 : i32, i32
  }
  func.func @transform_7(%arg0: i32) -> (i32, i32) {
    %c0_i32 = arith.constant 0 : i32
    %c0_i32_0 = arith.constant 0 : i32
    %c0_i32_1 = arith.constant 0 : i32
    return %c0_i32, %c0_i32_0 : i32, i32
  }
  func.func @transform_8(%arg0: i32) -> (i32, i32) {
    %c0_i32 = arith.constant 0 : i32
    %c0_i32_0 = arith.constant 0 : i32
    %c0_i32_1 = arith.constant 0 : i32
    return %c0_i32, %c0_i32_0 : i32, i32
  }
  func.func @transform_9(%arg0: i32) -> (i32, i32) {
    %c0_i32 = arith.constant 0 : i32
    %c0_i32_0 = arith.constant 0 : i32
    return %arg0, %c0_i32 : i32, i32
  }
}

</mosaic_0001>

<llo_original>
// kernel: discriminator_forward.1
$region0: #{discriminator_forward.1}
  #allocation0 [shape = 'u32[]', space=smem, size = 0x4, offset = 0x4, fixed_abs, tag = 'smem constant byte address 0x4 - core index']
  #allocation1 [shape = 'u32[144,128]{1,0:T(1,128)}', space=vmem, size = 0x12000, scoped, tag = 'internal scratch']
  #allocation2 [shape = 'f32[18,8,128]{2,1,0:T(8,128)}', space=vmem, size = 0x12000, scoped, tag = 'scratch operand']
  #allocation3 [shape = 'f32[10,8,128]{2,1,0:T(8,128)}', space=vmem, size = 0xa000, scoped, tag = 'scratch operand']
  %s0 = inlined_call_operand.vmem [shape: f32[34,16,128], index: 0, kind: input, shape index: {}]
  %s1 = inlined_call_operand.vmem [shape: bf16[512,128], index: 1, kind: input, shape index: {}]
  %s2 = inlined_call_operand.vmem [shape: bf16[512,128], index: 2, kind: input, shape index: {}]
  %s3 = inlined_call_operand.vmem [shape: bf16[512,128], index: 3, kind: input, shape index: {}]
  %s4 = inlined_call_operand.vmem [shape: bf16[512,128], index: 4, kind: input, shape index: {}]
  %s5 = inlined_call_operand.vmem [shape: bf16[512,128], index: 5, kind: input, shape index: {}]
  %s6 = inlined_call_operand.vmem [shape: f32[5,128], index: 6, kind: input, shape index: {}]
  %s7 = inlined_call_operand.vmem [shape: bf16[128,128], index: 7, kind: input, shape index: {}]
  %s8 = inlined_call_operand.vmem [shape: f32[1,128], index: 8, kind: input, shape index: {}]
  %s9 = inlined_call_operand.vmem [shape: f32[16,128], index: 9, kind: output, shape index: {}]
  %s10 = sld [smem:[#allocation0]]
  $region107: #{discriminator_forward.1} parent=0
    _
  %s12 = ssub.s32 1, %s10
  %s13 = scalar_select 0, %s12, %s10
  $region1: #{discriminator_forward.1} parent=0
    #allocation4 [shape = 'u8[278528]{0}', space=vmem, size = 0x44000, scoped, tag = 'input window, operand 0']
    loop: start=0, step=1, limit=4
    $region2: #{discriminator_forward.1} parent=1 // loop_pre_header
      _
    $region3: #{discriminator_forward.1} parent=1 // loop_header
      %s15 = sphi 0, %s19
      %p16 = scmp.ge.s32.totalorder %s15, 4
      %s25 = sphi 0, %s27
      %s28 = sphi 0, %s25
      %s29 = sphi 0, %s28
      %s45 = sphi 0, %s29
      %s49 = sphi 0, %s49
      %s51 = sphi 0, %s49
      %s52 = sphi 0, %s51
      %s66 = sphi 0, %s52
      %s70 = sphi 0, %s70
      %s72 = sphi 0, %s70
      %s73 = sphi 0, %s72
      %s87 = sphi 0, %s73
      %s91 = sphi 0, %s91
      %s93 = sphi 0, %s91
      %s94 = sphi 0, %s93
      %s108 = sphi 0, %s94
      %s112 = sphi 0, %s112
      %s114 = sphi 0, %s112
      %s115 = sphi 0, %s114
      %s129 = sphi 0, %s115
      %s133 = sphi 0, %s133
      %s135 = sphi 0, %s133
      %s136 = sphi 0, %s135
      %s150 = sphi 0, %s136
      %s154 = sphi 0, %s154
      %s156 = sphi 0, %s154
      %s157 = sphi 0, %s156
      %s171 = sphi 0, %s157
      %s175 = sphi 0, %s175
      %s177 = sphi 0, %s175
      %s178 = sphi 0, %s177
      %s192 = sphi 0, %s178
      %s196 = sphi 0, %s196
      %s198 = sphi 0, %s196
      %s199 = sphi 0, %s198
      %s213 = sphi 0, %s199
      %s219 = sphi 0, %s221
      %s222 = sphi 0, %s219
      %s223 = sphi 0, %s222
      %s239 = sphi 0, %s223
    $region4: #{discriminator_forward.1} parent=1 // loop_header_branch
      %18 = sbr.rel (%p16) target = $region8
    $region5: #{discriminator_forward.1} parent=1 // loop_body
      %s20 = ssub.s32 %s15, 1
      %s21 = ssub.s32 %s15, 2
      %s22 = sadd.s32 %s15, 1
      %s23 = ssub.s32 %s15, %s22
      %p24 = scmp.eq.s32.totalorder %s23, 0
      %s26 = sadd.s32 %s25, 1
      %s27 = scalar_select %p24, %s25, %s26
      %p30 = pneg %p24
      %p31 = scmp.eq.s32.totalorder %s15, 1
      %p32 = por %p30, %p31
      %p33 = scmp.ne.s32.totalorder %s25, %s28
      %p34 = scmp.eq.s32.totalorder %s15, 0
      %p35 = por %p33, %p34
      %p36 = scmp.ne.s32.totalorder %s25, %s28
      %p37 = scmp.eq.s32.totalorder %s20, 1
      %p38 = por %p36, %p37
      %p39 = scmp.ne.s32.totalorder %s28, %s29
      %p40 = scmp.eq.s32.totalorder %s20, 0
      %p41 = por %p39, %p40
      %p42 = scmp.ne.s32.totalorder %s28, %s29
      %p43 = scmp.eq.s32.totalorder %s21, 1
      %p44 = por %p42, %p43
      %p46 = scmp.ne.s32.totalorder %s29, %s45
      %p47 = scmp.eq.s32.totalorder %s21, 0
      %p48 = por %p46, %p47
      %s50 = sadd.s32 %s49, 1
      %p53 = scmp.eq.s32.totalorder %s15, 1
      %p54 = scmp.ne.s32.totalorder %s49, %s51
      %p55 = scmp.eq.s32.totalorder %s15, 0
      %p56 = por %p54, %p55
      %p57 = scmp.ne.s32.totalorder %s49, %s51
      %p58 = scmp.eq.s32.totalorder %s20, 1
      %p59 = por %p57, %p58
      %p60 = scmp.ne.s32.totalorder %s51, %s52
      %p61 = scmp.eq.s32.totalorder %s20, 0
      %p62 = por %p60, %p61
      %p63 = scmp.ne.s32.totalorder %s51, %s52
      %p64 = scmp.eq.s32.totalorder %s21, 1
      %p65 = por %p63, %p64
      %p67 = scmp.ne.s32.totalorder %s52, %s66
      %p68 = scmp.eq.s32.totalorder %s21, 0
      %p69 = por %p67, %p68
      %s71 = sadd.s32 %s70, 1
      %p74 = scmp.eq.s32.totalorder %s15, 1
      %p75 = scmp.ne.s32.totalorder %s70, %s72
      %p76 = scmp.eq.s32.totalorder %s15, 0
      %p77 = por %p75, %p76
      %p78 = scmp.ne.s32.totalorder %s70, %s72
      %p79 = scmp.eq.s32.totalorder %s20, 1
      %p80 = por %p78, %p79
      %p81 = scmp.ne.s32.totalorder %s72, %s73
      %p82 = scmp.eq.s32.totalorder %s20, 0
      %p83 = por %p81, %p82
      %p84 = scmp.ne.s32.totalorder %s72, %s73
      %p85 = scmp.eq.s32.totalorder %s21, 1
      %p86 = por %p84, %p85
      %p88 = scmp.ne.s32.totalorder %s73, %s87
      %p89 = scmp.eq.s32.totalorder %s21, 0
      %p90 = por %p88, %p89
      %s92 = sadd.s32 %s91, 1
      %p95 = scmp.eq.s32.totalorder %s15, 1
      %p96 = scmp.ne.s32.totalorder %s91, %s93
      %p97 = scmp.eq.s32.totalorder %s15, 0
      %p98 = por %p96, %p97
      %p99 = scmp.ne.s32.totalorder %s91, %s93
      %p100 = scmp.eq.s32.totalorder %s20, 1
      %p101 = por %p99, %p100
      %p102 = scmp.ne.s32.totalorder %s93, %s94
      %p103 = scmp.eq.s32.totalorder %s20, 0
      %p104 = por %p102, %p103
      %p105 = scmp.ne.s32.totalorder %s93, %s94
      %p106 = scmp.eq.s32.totalorder %s21, 1
      %p107 = por %p105, %p106
      %p109 = scmp.ne.s32.totalorder %s94, %s108
      %p110 = scmp.eq.s32.totalorder %s21, 0
      %p111 = por %p109, %p110
      %s113 = sadd.s32 %s112, 1
      %p116 = scmp.eq.s32.totalorder %s15, 1
      %p117 = scmp.ne.s32.totalorder %s112, %s114
      %p118 = scmp.eq.s32.totalorder %s15, 0
      %p119 = por %p117, %p118
      %p120 = scmp.ne.s32.totalorder %s112, %s114
      %p121 = scmp.eq.s32.totalorder %s20, 1
      %p122 = por %p120, %p121
      %p123 = scmp.ne.s32.totalorder %s114, %s115
      %p124 = scmp.eq.s32.totalorder %s20, 0
      %p125 = por %p123, %p124
      %p126 = scmp.ne.s32.totalorder %s114, %s115
      %p127 = scmp.eq.s32.totalorder %s21, 1
      %p128 = por %p126, %p127
      %p130 = scmp.ne.s32.totalorder %s115, %s129
      %p131 = scmp.eq.s32.totalorder %s21, 0
      %p132 = por %p130, %p131
      %s134 = sadd.s32 %s133, 1
      %p137 = scmp.eq.s32.totalorder %s15, 1
      %p138 = scmp.ne.s32.totalorder %s133, %s135
      %p139 = scmp.eq.s32.totalorder %s15, 0
      %p140 = por %p138, %p139
      %p141 = scmp.ne.s32.totalorder %s133, %s135
      %p142 = scmp.eq.s32.totalorder %s20, 1
      %p143 = por %p141, %p142
      %p144 = scmp.ne.s32.totalorder %s135, %s136
      %p145 = scmp.eq.s32.totalorder %s20, 0
      %p146 = por %p144, %p145
      %p147 = scmp.ne.s32.totalorder %s135, %s136
      %p148 = scmp.eq.s32.totalorder %s21, 1
      %p149 = por %p147, %p148
      %p151 = scmp.ne.s32.totalorder %s136, %s150
      %p152 = scmp.eq.s32.totalorder %s21, 0
      %p153 = por %p151, %p152
      %s155 = sadd.s32 %s154, 1
      %p158 = scmp.eq.s32.totalorder %s15, 1
      %p159 = scmp.ne.s32.totalorder %s154, %s156
      %p160 = scmp.eq.s32.totalorder %s15, 0
      %p161 = por %p159, %p160
      %p162 = scmp.ne.s32.totalorder %s154, %s156
      %p163 = scmp.eq.s32.totalorder %s20, 1
      %p164 = por %p162, %p163
      %p165 = scmp.ne.s32.totalorder %s156, %s157
      %p166 = scmp.eq.s32.totalorder %s20, 0
      %p167 = por %p165, %p166
      %p168 = scmp.ne.s32.totalorder %s156, %s157
      %p169 = scmp.eq.s32.totalorder %s21, 1
      %p170 = por %p168, %p169
      %p172 = scmp.ne.s32.totalorder %s157, %s171
      %p173 = scmp.eq.s32.totalorder %s21, 0
      %p174 = por %p172, %p173
      %s176 = sadd.s32 %s175, 1
      %p179 = scmp.eq.s32.totalorder %s15, 1
      %p180 = scmp.ne.s32.totalorder %s175, %s177
      %p181 = scmp.eq.s32.totalorder %s15, 0
      %p182 = por %p180, %p181
      %p183 = scmp.ne.s32.totalorder %s175, %s177
      %p184 = scmp.eq.s32.totalorder %s20, 1
      %p185 = por %p183, %p184
      %p186 = scmp.ne.s32.totalorder %s177, %s178
      %p187 = scmp.eq.s32.totalorder %s20, 0
      %p188 = por %p186, %p187
      %p189 = scmp.ne.s32.totalorder %s177, %s178
      %p190 = scmp.eq.s32.totalorder %s21, 1
      %p191 = por %p189, %p190
      %p193 = scmp.ne.s32.totalorder %s178, %s192
      %p194 = scmp.eq.s32.totalorder %s21, 0
      %p195 = por %p193, %p194
      %s197 = sadd.s32 %s196, 1
      %p200 = scmp.eq.s32.totalorder %s15, 1
      %p201 = scmp.ne.s32.totalorder %s196, %s198
      %p202 = scmp.eq.s32.totalorder %s15, 0
      %p203 = por %p201, %p202
      %p204 = scmp.ne.s32.totalorder %s196, %s198
      %p205 = scmp.eq.s32.totalorder %s20, 1
      %p206 = por %p204, %p205
      %p207 = scmp.ne.s32.totalorder %s198, %s199
      %p208 = scmp.eq.s32.totalorder %s20, 0
      %p209 = por %p207, %p208
      %p210 = scmp.ne.s32.totalorder %s198, %s199
      %p211 = scmp.eq.s32.totalorder %s21, 1
      %p212 = por %p210, %p211
      %p214 = scmp.ne.s32.totalorder %s199, %s213
      %p215 = scmp.eq.s32.totalorder %s21, 0
      %p216 = por %p214, %p215
      %s217 = ssub.s32 %s15, %s22
      %p218 = scmp.eq.s32.totalorder %s217, 0
      %s220 = sadd.s32 %s219, 1
      %s221 = scalar_select %p218, %s219, %s220
      %p224 = pneg %p218
      %p225 = scmp.eq.s32.totalorder %s15, 1
      %p226 = por %p224, %p225
      %p227 = scmp.ne.s32.totalorder %s219, %s222
      %p228 = scmp.eq.s32.totalorder %s15, 0
      %p229 = por %p227, %p228
      %p230 = scmp.ne.s32.totalorder %s219, %s222
      %p231 = scmp.eq.s32.totalorder %s20, 1
      %p232 = por %p230, %p231
      %p233 = scmp.ne.s32.totalorder %s222, %s223
      %p234 = scmp.eq.s32.totalorder %s20, 0
      %p235 = por %p233, %p234
      %p236 = scmp.ne.s32.totalorder %s222, %s223
      %p237 = scmp.eq.s32.totalorder %s21, 1
      %p238 = por %p236, %p237
      %p240 = scmp.ne.s32.totalorder %s223, %s239
      %p241 = scmp.eq.s32.totalorder %s21, 0
      %p242 = por %p240, %p241
      %p243 = scmp.le.s32.totalorder 1, %s15
      %p244 = scmp.lt.s32.totalorder %s15, 3
      %p245 = pnand %p243, %p244
      %p246 = pneg %p245
      // Predicated region
      $region9: #{discriminator_forward.1} parent=5 // pred_check
        _
      $region10: #{discriminator_forward.1} parent=5 // pred_check_branch
        %248 = sbr.rel (%p245) target = $region12
      $region11: #{discriminator_forward.1} parent=5 // pred_region
        %s249 = ssub.s32 %s15, 1
        // Predicated region
        $region13: #{discriminator_forward.1} parent=11 // pred_check
          %p250 = pneg %p62
        $region14: #{discriminator_forward.1} parent=11 // pred_check_branch
          %252 = sbr.rel (%p250) target = $region16
        $region15: #{discriminator_forward.1} parent=11 // pred_region
          _
        $region16: #{discriminator_forward.1} parent=11 // pred_fallthru
          _
        // Predicated region
        $region17: #{discriminator_forward.1} parent=11 // pred_check
          %p253 = pneg %p83
        $region18: #{discriminator_forward.1} parent=11 // pred_check_branch
          %255 = sbr.rel (%p253) target = $region20
        $region19: #{discriminator_forward.1} parent=11 // pred_region
          _
        $region20: #{discriminator_forward.1} parent=11 // pred_fallthru
          _
        // Predicated region
        $region21: #{discriminator_forward.1} parent=11 // pred_check
          %p256 = pneg %p104
        $region22: #{discriminator_forward.1} parent=11 // pred_check_branch
          %258 = sbr.rel (%p256) target = $region24
        $region23: #{discriminator_forward.1} parent=11 // pred_region
          _
        $region24: #{discriminator_forward.1} parent=11 // pred_fallthru
          _
        // Predicated region
        $region25: #{discriminator_forward.1} parent=11 // pred_check
          %p259 = pneg %p125
        $region26: #{discriminator_forward.1} parent=11 // pred_check_branch
          %261 = sbr.rel (%p259) target = $region28
        $region27: #{discriminator_forward.1} parent=11 // pred_region
          _
        $region28: #{discriminator_forward.1} parent=11 // pred_fallthru
          _
        // Predicated region
        $region29: #{discriminator_forward.1} parent=11 // pred_check
          %p262 = pneg %p146
        $region30: #{discriminator_forward.1} parent=11 // pred_check_branch
          %264 = sbr.rel (%p262) target = $region32
        $region31: #{discriminator_forward.1} parent=11 // pred_region
          _
        $region32: #{discriminator_forward.1} parent=11 // pred_fallthru
          _
        // Predicated region
        $region33: #{discriminator_forward.1} parent=11 // pred_check
          %p265 = pneg %p167
        $region34: #{discriminator_forward.1} parent=11 // pred_check_branch
          %267 = sbr.rel (%p265) target = $region36
        $region35: #{discriminator_forward.1} parent=11 // pred_region
          _
        $region36: #{discriminator_forward.1} parent=11 // pred_fallthru
          _
        // Predicated region
        $region37: #{discriminator_forward.1} parent=11 // pred_check
          %p268 = pneg %p188
        $region38: #{discriminator_forward.1} parent=11 // pred_check_branch
          %270 = sbr.rel (%p268) target = $region40
        $region39: #{discriminator_forward.1} parent=11 // pred_region
          _
        $region40: #{discriminator_forward.1} parent=11 // pred_fallthru
          _
        // Predicated region
        $region41: #{discriminator_forward.1} parent=11 // pred_check
          %p271 = pneg %p209
        $region42: #{discriminator_forward.1} parent=11 // pred_check_branch
          %273 = sbr.rel (%p271) target = $region44
        $region43: #{discriminator_forward.1} parent=11 // pred_region
          _
        $region44: #{discriminator_forward.1} parent=11 // pred_fallthru
          _
      $region12: #{discriminator_forward.1} parent=5 // pred_fallthru
        _
      %p274 = scmp.lt.s32.totalorder %s15, 2
      // Predicated region
      $region45: #{discriminator_forward.1} parent=5 // pred_check
        %p275 = pneg %p274
      $region46: #{discriminator_forward.1} parent=5 // pred_check_branch
        %277 = sbr.rel (%p275) target = $region48
      $region47: #{discriminator_forward.1} parent=5 // pred_region
        // Predicated region
        $region49: #{discriminator_forward.1} parent=47 // pred_check
          %p278 = pneg %p35
        $region50: #{discriminator_forward.1} parent=47 // pred_check_branch
          %280 = sbr.rel (%p278) target = $region52
        $region51: #{discriminator_forward.1} parent=47 // pred_region
          %s281 = sand.u32 %s25, 1
          %s282 = sand.u32 %s25, 1
          %s283 = smul.addr %s282, 272
          %s284 = scalar_lea.vmem [#allocation4], %s283
          %s285 = smul.addr %s15, 8
          %s286 = scalar_lea.vmem %s0, %s285
          // Predicated region
          $region53: #{discriminator_forward.1} parent=51 // pred_check
            _
          $region54: #{discriminator_forward.1} parent=51 // pred_check_branch
            %288 = sbr.rel (0) target = $region56
          $region55: #{discriminator_forward.1} parent=51 // pred_region
            // Predicated region
            $region57: #{discriminator_forward.1} parent=55 // pred_check
              _
            $region58: #{discriminator_forward.1} parent=55 // pred_check_branch
              %290 = sbr.rel (0) target = $region60
            $region59: #{discriminator_forward.1} parent=55 // pred_region
              // Predicated region
              $region72: #{discriminator_forward.1} parent=59 // pred_check
                _
              $region73: #{discriminator_forward.1} parent=59 // pred_check_branch
                %371 = sbr.rel (0) target = $region75
              $region74: #{discriminator_forward.1} parent=59 // pred_region
                loop: start=0, step=1, limit=1
                $region76: #{discriminator_forward.1} parent=74 // loop_pre_header
                  _
                $region77: #{discriminator_forward.1} parent=74 // loop_header
                  %s373 = sphi 0, %s377
                  %p374 = scmp.ge.s32.totalorder %s373, 1
                  %s378 = sphi %s286, %s286
                  %s379 = sphi %s284, %s284
                $region78: #{discriminator_forward.1} parent=74 // loop_header_branch
                  %376 = sbr.rel (%p374) target = $region82
                $region79: #{discriminator_forward.1} parent=74 // loop_body
                  %v380 = vld [vmem:[%s378] sm:$0xff]
                  %381 = vst [vmem:[%s379] sm:$0xff] %v380
                  %v382 = vld [vmem:[%s378 + $0x10] sm:$0xff]
                  %383 = vst [vmem:[%s379 + $0x8] sm:$0xff] %v382
                  %v384 = vld [vmem:[%s378 + $0x20] sm:$0xff]
                  %385 = vst [vmem:[%s379 + $0x10] sm:$0xff] %v384
                  %v386 = vld [vmem:[%s378 + $0x30] sm:$0xff]
                  %387 = vst [vmem:[%s379 + $0x18] sm:$0xff] %v386
                  %v388 = vld [vmem:[%s378 + $0x40] sm:$0xff]
                  %389 = vst [vmem:[%s379 + $0x20] sm:$0xff] %v388
                  %v390 = vld [vmem:[%s378 + $0x50] sm:$0xff]
                  %391 = vst [vmem:[%s379 + $0x28] sm:$0xff] %v390
                  %v392 = vld [vmem:[%s378 + $0x60] sm:$0xff]
                  %393 = vst [vmem:[%s379 + $0x30] sm:$0xff] %v392
                  %v394 = vld [vmem:[%s378 + $0x70] sm:$0xff]
                  %395 = vst [vmem:[%s379 + $0x38] sm:$0xff] %v394
                  %v396 = vld [vmem:[%s378 + $0x80] sm:$0xff]
                  %397 = vst [vmem:[%s379 + $0x40] sm:$0xff] %v396
                  %v398 = vld [vmem:[%s378 + $0x90] sm:$0xff]
                  %399 = vst [vmem:[%s379 + $0x48] sm:$0xff] %v398
                  %v400 = vld [vmem:[%s378 + $0xa0] sm:$0xff]
                  %401 = vst [vmem:[%s379 + $0x50] sm:$0xff] %v400
                  %v402 = vld [vmem:[%s378 + $0xb0] sm:$0xff]
                  %403 = vst [vmem:[%s379 + $0x58] sm:$0xff] %v402
                  %v404 = vld [vmem:[%s378 + $0xc0] sm:$0xff]
                  %405 = vst [vmem:[%s379 + $0x60] sm:$0xff] %v404
                  %v406 = vld [vmem:[%s378 + $0xd0] sm:$0xff]
                  %407 = vst [vmem:[%s379 + $0x68] sm:$0xff] %v406
                  %v408 = vld [vmem:[%s378 + $0xe0] sm:$0xff]
                  %409 = vst [vmem:[%s379 + $0x70] sm:$0xff] %v408
                  %v410 = vld [vmem:[%s378 + $0xf0] sm:$0xff]
                  %411 = vst [vmem:[%s379 + $0x78] sm:$0xff] %v410
                  %v412 = vld [vmem:[%s378 + $0x100] sm:$0xff]
                  %413 = vst [vmem:[%s379 + $0x80] sm:$0xff] %v412
                  %v414 = vld [vmem:[%s378 + $0x110] sm:$0xff]
                  %415 = vst [vmem:[%s379 + $0x88] sm:$0xff] %v414
                  %v416 = vld [vmem:[%s378 + $0x120] sm:$0xff]
                  %417 = vst [vmem:[%s379 + $0x90] sm:$0xff] %v416
                  %v418 = vld [vmem:[%s378 + $0x130] sm:$0xff]
                  %419 = vst [vmem:[%s379 + $0x98] sm:$0xff] %v418
                  %v420 = vld [vmem:[%s378 + $0x140] sm:$0xff]
                  %421 = vst [vmem:[%s379 + $0xa0] sm:$0xff] %v420
                  %v422 = vld [vmem:[%s378 + $0x150] sm:$0xff]
                  %423 = vst [vmem:[%s379 + $0xa8] sm:$0xff] %v422
                  %v424 = vld [vmem:[%s378 + $0x160] sm:$0xff]
                  %425 = vst [vmem:[%s379 + $0xb0] sm:$0xff] %v424
                  %v426 = vld [vmem:[%s378 + $0x170] sm:$0xff]
                  %427 = vst [vmem:[%s379 + $0xb8] sm:$0xff] %v426
                  %v428 = vld [vmem:[%s378 + $0x180] sm:$0xff]
                  %429 = vst [vmem:[%s379 + $0xc0] sm:$0xff] %v428
                  %v430 = vld [vmem:[%s378 + $0x190] sm:$0xff]
                  %431 = vst [vmem:[%s379 + $0xc8] sm:$0xff] %v430
                  %v432 = vld [vmem:[%s378 + $0x1a0] sm:$0xff]
                  %433 = vst [vmem:[%s379 + $0xd0] sm:$0xff] %v432
                  %v434 = vld [vmem:[%s378 + $0x1b0] sm:$0xff]
                  %435 = vst [vmem:[%s379 + $0xd8] sm:$0xff] %v434
                  %v436 = vld [vmem:[%s378 + $0x1c0] sm:$0xff]
                  %437 = vst [vmem:[%s379 + $0xe0] sm:$0xff] %v436
                  %v438 = vld [vmem:[%s378 + $0x1d0] sm:$0xff]
                  %439 = vst [vmem:[%s379 + $0xe8] sm:$0xff] %v438
                  %v440 = vld [vmem:[%s378 + $0x1e0] sm:$0xff]
                  %441 = vst [vmem:[%s379 + $0xf0] sm:$0xff] %v440
                  %v442 = vld [vmem:[%s378 + $0x1f0] sm:$0xff]
                  %443 = vst [vmem:[%s379 + $0xf8] sm:$0xff] %v442
                  %v444 = vld [vmem:[%s378 + $0x200] sm:$0xff]
                  %445 = vst [vmem:[%s379 + $0x100] sm:$0xff] %v444
                  %v446 = vld [vmem:[%s378 + $0x210] sm:$0xff]
                  %447 = vst [vmem:[%s379 + $0x108] sm:$0xff] %v446
                $region80: #{discriminator_forward.1} parent=74 // loop_footer
                  %s377 = sadd.s32 1, %s373
                $region81: #{discriminator_forward.1} parent=74 // loop_footer_branch
                  %372 = sbr.rel target = $region77
                $region82: #{discriminator_forward.1} parent=74 // loop_exit
                  _
              $region75: #{discriminator_forward.1} parent=59 // pred_fallthru
                _
              // Predicated region
              $region83: #{discriminator_forward.1} parent=59 // pred_check
                _
              $region84: #{discriminator_forward.1} parent=59 // pred_check_branch
                %449 = sbr.rel target = $region86
              $region85: #{discriminator_forward.1} parent=59 // pred_region
                _
              $region86: #{discriminator_forward.1} parent=59 // pred_fallthru
                _
            $region60: #{discriminator_forward.1} parent=55 // pred_fallthru
              _
            // Predicated region
            $region61: #{discriminator_forward.1} parent=55 // pred_check
              _
            $region62: #{discriminator_forward.1} parent=55 // pred_check_branch
              %292 = sbr.rel target = $region64
            $region63: #{discriminator_forward.1} parent=55 // pred_region
              loop: start=0, step=1, limit=1
              $region65: #{discriminator_forward.1} parent=63 // loop_pre_header
                _
              $region66: #{discriminator_forward.1} parent=63 // loop_header
                %s295 = sphi 0, %s299
                %p296 = scmp.ge.s32.totalorder %s295, 1
                %s300 = sphi %s286, %s286
                %s301 = sphi %s284, %s284
              $region67: #{discriminator_forward.1} parent=63 // loop_header_branch
                %298 = sbr.rel (%p296) target = $region71
              $region68: #{discriminator_forward.1} parent=63 // loop_body
                %v302 = vld [vmem:[%s300] sm:$0xff]
                %303 = vst [vmem:[%s301] sm:$0xff] %v302
                %v304 = vld [vmem:[%s300 + $0x10] sm:$0xff]
                %305 = vst [vmem:[%s301 + $0x8] sm:$0xff] %v304
                %v306 = vld [vmem:[%s300 + $0x20] sm:$0xff]
                %307 = vst [vmem:[%s301 + $0x10] sm:$0xff] %v306
                %v308 = vld [vmem:[%s300 + $0x30] sm:$0xff]
                %309 = vst [vmem:[%s301 + $0x18] sm:$0xff] %v308
                %v310 = vld [vmem:[%s300 + $0x40] sm:$0xff]
                %311 = vst [vmem:[%s301 + $0x20] sm:$0xff] %v310
                %v312 = vld [vmem:[%s300 + $0x50] sm:$0xff]
                %313 = vst [vmem:[%s301 + $0x28] sm:$0xff] %v312
                %v314 = vld [vmem:[%s300 + $0x60] sm:$0xff]
                %315 = vst [vmem:[%s301 + $0x30] sm:$0xff] %v314
                %v316 = vld [vmem:[%s300 + $0x70] sm:$0xff]
                %317 = vst [vmem:[%s301 + $0x38] sm:$0xff] %v316
                %v318 = vld [vmem:[%s300 + $0x80] sm:$0xff]
                %319 = vst [vmem:[%s301 + $0x40] sm:$0xff] %v318
                %v320 = vld [vmem:[%s300 + $0x90] sm:$0xff]
                %321 = vst [vmem:[%s301 + $0x48] sm:$0xff] %v320
                %v322 = vld [vmem:[%s300 + $0xa0] sm:$0xff]
                %323 = vst [vmem:[%s301 + $0x50] sm:$0xff] %v322
                %v324 = vld [vmem:[%s300 + $0xb0] sm:$0xff]
                %325 = vst [vmem:[%s301 + $0x58] sm:$0xff] %v324
                %v326 = vld [vmem:[%s300 + $0xc0] sm:$0xff]
                %327 = vst [vmem:[%s301 + $0x60] sm:$0xff] %v326
                %v328 = vld [vmem:[%s300 + $0xd0] sm:$0xff]
                %329 = vst [vmem:[%s301 + $0x68] sm:$0xff] %v328
                %v330 = vld [vmem:[%s300 + $0xe0] sm:$0xff]
                %331 = vst [vmem:[%s301 + $0x70] sm:$0xff] %v330
                %v332 = vld [vmem:[%s300 + $0xf0] sm:$0xff]
                %333 = vst [vmem:[%s301 + $0x78] sm:$0xff] %v332
                %v334 = vld [vmem:[%s300 + $0x100] sm:$0xff]
                %335 = vst [vmem:[%s301 + $0x80] sm:$0xff] %v334
                %v336 = vld [vmem:[%s300 + $0x110] sm:$0xff]
                %337 = vst [vmem:[%s301 + $0x88] sm:$0xff] %v336
                %v338 = vld [vmem:[%s300 + $0x120] sm:$0xff]
                %339 = vst [vmem:[%s301 + $0x90] sm:$0xff] %v338
                %v340 = vld [vmem:[%s300 + $0x130] sm:$0xff]
                %341 = vst [vmem:[%s301 + $0x98] sm:$0xff] %v340
                %v342 = vld [vmem:[%s300 + $0x140] sm:$0xff]
                %343 = vst [vmem:[%s301 + $0xa0] sm:$0xff] %v342
                %v344 = vld [vmem:[%s300 + $0x150] sm:$0xff]
                %345 = vst [vmem:[%s301 + $0xa8] sm:$0xff] %v344
                %v346 = vld [vmem:[%s300 + $0x160] sm:$0xff]
                %347 = vst [vmem:[%s301 + $0xb0] sm:$0xff] %v346
                %v348 = vld [vmem:[%s300 + $0x170] sm:$0xff]
                %349 = vst [vmem:[%s301 + $0xb8] sm:$0xff] %v348
                %v350 = vld [vmem:[%s300 + $0x180] sm:$0xff]
                %351 = vst [vmem:[%s301 + $0xc0] sm:$0xff] %v350
                %v352 = vld [vmem:[%s300 + $0x190] sm:$0xff]
                %353 = vst [vmem:[%s301 + $0xc8] sm:$0xff] %v352
                %v354 = vld [vmem:[%s300 + $0x1a0] sm:$0xff]
                %355 = vst [vmem:[%s301 + $0xd0] sm:$0xff] %v354
                %v356 = vld [vmem:[%s300 + $0x1b0] sm:$0xff]
                %357 = vst [vmem:[%s301 + $0xd8] sm:$0xff] %v356
                %v358 = vld [vmem:[%s300 + $0x1c0] sm:$0xff]
                %359 = vst [vmem:[%s301 + $0xe0] sm:$0xff] %v358
                %v360 = vld [vmem:[%s300 + $0x1d0] sm:$0xff]
                %361 = vst [vmem:[%s301 + $0xe8] sm:$0xff] %v360
                %v362 = vld [vmem:[%s300 + $0x1e0] sm:$0xff]
                %363 = vst [vmem:[%s301 + $0xf0] sm:$0xff] %v362
                %v364 = vld [vmem:[%s300 + $0x1f0] sm:$0xff]
                %365 = vst [vmem:[%s301 + $0xf8] sm:$0xff] %v364
                %v366 = vld [vmem:[%s300 + $0x200] sm:$0xff]
                %367 = vst [vmem:[%s301 + $0x100] sm:$0xff] %v366
                %v368 = vld [vmem:[%s300 + $0x210] sm:$0xff]
                %369 = vst [vmem:[%s301 + $0x108] sm:$0xff] %v368
              $region69: #{discriminator_forward.1} parent=63 // loop_footer
                %s299 = sadd.s32 1, %s295
              $region70: #{discriminator_forward.1} parent=63 // loop_footer_branch
                %294 = sbr.rel target = $region66
              $region71: #{discriminator_forward.1} parent=63 // loop_exit
                _
            $region64: #{discriminator_forward.1} parent=55 // pred_fallthru
              _
          $region56: #{discriminator_forward.1} parent=51 // pred_fallthru
            _
          %450 = vnop
        $region52: #{discriminator_forward.1} parent=47 // pred_fallthru
          _
      $region48: #{discriminator_forward.1} parent=5 // pred_fallthru
        _
      %p451 = scmp.le.s32.totalorder 1, %s15
      %p452 = scmp.lt.s32.totalorder %s15, 3
      %p453 = pnand %p451, %p452
      %p454 = pneg %p453
      // Predicated region
      $region87: #{discriminator_forward.1} parent=5 // pred_check
        _
      $region88: #{discriminator_forward.1} parent=5 // pred_check_branch
        %456 = sbr.rel (%p453) target = $region90
      $region89: #{discriminator_forward.1} parent=5 // pred_region
        %s457 = ssub.s32 %s15, 1
        %s458 = sand.u32 %s28, 1
        %s459 = sand.u32 %s28, 1
        %s460 = smul.addr %s459, 272
        %s461 = scalar_lea.vmem [#allocation4], %s460
        // Predicated region
        $region91: #{discriminator_forward.1} parent=89 // pred_check
          %p462 = pneg %p41
        $region92: #{discriminator_forward.1} parent=89 // pred_check_branch
          %464 = sbr.rel (%p462) target = $region94
        $region93: #{discriminator_forward.1} parent=89 // pred_region
          _
        $region94: #{discriminator_forward.1} parent=89 // pred_fallthru
          _
        %s465 = sand.u32 %s28, 1
        %s466 = sand.u32 %s28, 1
        %s467 = smul.addr %s466, 272
        %s468 = scalar_lea.vmem [#allocation4], %s467
        %p469 = pneg %p41
        %p470 = pneg %p38
        %p471 = pneg %p62
        %p472 = pneg %p59
        %p473 = pneg %p83
        %p474 = pneg %p80
        %p475 = pneg %p104
        %p476 = pneg %p101
        %p477 = pneg %p125
        %p478 = pneg %p122
        %p479 = pneg %p146
        %p480 = pneg %p143
        %p481 = pneg %p167
        %p482 = pneg %p164
        %p483 = pneg %p188
        %p484 = pneg %p185
        %p485 = pneg %p209
        %p486 = pneg %p206
        %p487 = pneg %p235
        %p488 = pneg %p232
        %p489 = scmp.lt.s32.totalorder %s20, 1
        %s490 = scalar_select %p489, %s20, 1
        %s491 = smul.addr %s490, 8
        %s492 = scalar_lea.vmem %s9, %s491
        %p493 = scmp.lt.s32.totalorder %s20, 1
        %s494 = scalar_select %p493, %s20, 1
        %s495 = smul.addr %s494, 8
        %s496 = scalar_lea.vmem %s9, %s495
        %v498 = vld [vmem:[%s461] sm:$0xff]
        %v499 = vld [vmem:[%s461 + $0x10] sm:$0xff]
        %v500 = vld [vmem:[%s461 + $0x20] sm:$0xff]
        %v501 = vld [vmem:[%s461 + $0x30] sm:$0xff]
        %v502 = vld [vmem:[%s461 + $0x40] sm:$0xff]
        %v503 = vld [vmem:[%s461 + $0x50] sm:$0xff]
        %v504 = vld [vmem:[%s461 + $0x60] sm:$0xff]
        %v505 = vld [vmem:[%s461 + $0x70] sm:$0xff]
        %v506 = vld [vmem:[%s461 + $0x80] sm:$0xff]
        %v507 = vld [vmem:[%s461 + $0x90] sm:$0xff]
        %v508 = vld [vmem:[%s461 + $0xa0] sm:$0xff]
        %v509 = vld [vmem:[%s461 + $0xb0] sm:$0xff]
        %v510 = vld [vmem:[%s461 + $0xc0] sm:$0xff]
        %v511 = vld [vmem:[%s461 + $0xd0] sm:$0xff]
        %v512 = vld [vmem:[%s461 + $0xe0] sm:$0xff]
        %v513 = vld [vmem:[%s461 + $0xf0] sm:$0xff]
        %s514 = scalar_lea.vmem %s461, 8 [#allocation4]
        %v515 = vld [vmem:[%s514] sm:$0xff]
        %v516 = vld [vmem:[%s514 + $0x10] sm:$0xff]
        %v517 = vld [vmem:[%s514 + $0x20] sm:$0xff]
        %v518 = vld [vmem:[%s514 + $0x30] sm:$0xff]
        %v519 = vld [vmem:[%s514 + $0x40] sm:$0xff]
        %v520 = vld [vmem:[%s514 + $0x50] sm:$0xff]
        %v521 = vld [vmem:[%s514 + $0x60] sm:$0xff]
        %v522 = vld [vmem:[%s514 + $0x70] sm:$0xff]
        %v523 = vld [vmem:[%s514 + $0x80] sm:$0xff]
        %v524 = vld [vmem:[%s514 + $0x90] sm:$0xff]
        %v525 = vld [vmem:[%s514 + $0xa0] sm:$0xff]
        %v526 = vld [vmem:[%s514 + $0xb0] sm:$0xff]
        %v527 = vld [vmem:[%s514 + $0xc0] sm:$0xff]
        %v528 = vld [vmem:[%s514 + $0xd0] sm:$0xff]
        %v529 = vld [vmem:[%s514 + $0xe0] sm:$0xff]
        %v530 = vld [vmem:[%s514 + $0xf0] sm:$0xff]
        %s531 = scalar_lea.vmem %s461, 16 [#allocation4]
        %v532 = vld [vmem:[%s531] sm:$0xff]
        %v533 = vld [vmem:[%s531 + $0x10] sm:$0xff]
        %v534 = vld [vmem:[%s531 + $0x20] sm:$0xff]
        %v535 = vld [vmem:[%s531 + $0x30] sm:$0xff]
        %v536 = vld [vmem:[%s531 + $0x40] sm:$0xff]
        %v537 = vld [vmem:[%s531 + $0x50] sm:$0xff]
        %v538 = vld [vmem:[%s531 + $0x60] sm:$0xff]
        %v539 = vld [vmem:[%s531 + $0x70] sm:$0xff]
        %v540 = vld [vmem:[%s531 + $0x80] sm:$0xff]
        %v541 = vld [vmem:[%s531 + $0x90] sm:$0xff]
        %v542 = vld [vmem:[%s531 + $0xa0] sm:$0xff]
        %v543 = vld [vmem:[%s531 + $0xb0] sm:$0xff]
        %v544 = vld [vmem:[%s531 + $0xc0] sm:$0xff]
        %v545 = vld [vmem:[%s531 + $0xd0] sm:$0xff]
        %v546 = vld [vmem:[%s531 + $0xe0] sm:$0xff]
        %v547 = vld [vmem:[%s531 + $0xf0] sm:$0xff]
        %s548 = scalar_lea.vmem %s461, 24 [#allocation4]
        %v549 = vld [vmem:[%s548] sm:$0xff]
        %v550 = vld [vmem:[%s548 + $0x10] sm:$0xff]
        %v551 = vld [vmem:[%s548 + $0x20] sm:$0xff]
        %v552 = vld [vmem:[%s548 + $0x30] sm:$0xff]
        %v553 = vld [vmem:[%s548 + $0x40] sm:$0xff]
        %v554 = vld [vmem:[%s548 + $0x50] sm:$0xff]
        %v555 = vld [vmem:[%s548 + $0x60] sm:$0xff]
        %v556 = vld [vmem:[%s548 + $0x70] sm:$0xff]
        %v557 = vld [vmem:[%s548 + $0x80] sm:$0xff]
        %v558 = vld [vmem:[%s548 + $0x90] sm:$0xff]
        %v559 = vld [vmem:[%s548 + $0xa0] sm:$0xff]
        %v560 = vld [vmem:[%s548 + $0xb0] sm:$0xff]
        %v561 = vld [vmem:[%s548 + $0xc0] sm:$0xff]
        %v562 = vld [vmem:[%s548 + $0xd0] sm:$0xff]
        %v563 = vld [vmem:[%s548 + $0xe0] sm:$0xff]
        %v564 = vld [vmem:[%s548 + $0xf0] sm:$0xff]
        %v565 = vpack.c.bf16 %v499, %v498
        %v566 = vpack.c.bf16 %v516, %v515
        %v567 = vpack.c.bf16 %v533, %v532
        %v568 = vpack.c.bf16 %v550, %v549
        %v569 = vpack.c.bf16 %v501, %v500
        %v570 = vpack.c.bf16 %v518, %v517
        %v571 = vpack.c.bf16 %v535, %v534
        %v572 = vpack.c.bf16 %v552, %v551
        %v573 = vpack.c.bf16 %v503, %v502
        %v574 = vpack.c.bf16 %v520, %v519
        %v575 = vpack.c.bf16 %v537, %v536
        %v576 = vpack.c.bf16 %v554, %v553
        %v577 = vpack.c.bf16 %v505, %v504
        %v578 = vpack.c.bf16 %v522, %v521
        %v579 = vpack.c.bf16 %v539, %v538
        %v580 = vpack.c.bf16 %v556, %v555
        %v581 = vpack.c.bf16 %v507, %v506
        %v582 = vpack.c.bf16 %v524, %v523
        %v583 = vpack.c.bf16 %v541, %v540
        %v584 = vpack.c.bf16 %v558, %v557
        %v585 = vpack.c.bf16 %v509, %v508
        %v586 = vpack.c.bf16 %v526, %v525
        %v587 = vpack.c.bf16 %v543, %v542
        %v588 = vpack.c.bf16 %v560, %v559
        %v589 = vpack.c.bf16 %v511, %v510
        %v590 = vpack.c.bf16 %v528, %v527
        %v591 = vpack.c.bf16 %v545, %v544
        %v592 = vpack.c.bf16 %v562, %v561
        %v593 = vpack.c.bf16 %v513, %v512
        %v594 = vpack.c.bf16 %v530, %v529
        %v595 = vpack.c.bf16 %v547, %v546
        %v596 = vpack.c.bf16 %v564, %v563
        %v597 = vld [vmem:[%s1] sm:$0xf]
        %v598 = vld [vmem:[%s1 + $0x4] sm:$0xf]
        %v599 = vld [vmem:[%s1 + $0x8] sm:$0xf]
        %v600 = vld [vmem:[%s1 + $0xc] sm:$0xf]
        %v601 = vld [vmem:[%s1 + $0x10] sm:$0xf]
        %v602 = vld [vmem:[%s1 + $0x14] sm:$0xf]
        %v603 = vld [vmem:[%s1 + $0x18] sm:$0xf]
        %v604 = vld [vmem:[%s1 + $0x1c] sm:$0xf]
        %v605 = vld [vmem:[%s1 + $0x20] sm:$0xf]
        %v606 = vld [vmem:[%s1 + $0x24] sm:$0xf]
        %v607 = vld [vmem:[%s1 + $0x28] sm:$0xf]
        %v608 = vld [vmem:[%s1 + $0x2c] sm:$0xf]
        %v609 = vld [vmem:[%s1 + $0x30] sm:$0xf]
        %v610 = vld [vmem:[%s1 + $0x34] sm:$0xf]
        %v611 = vld [vmem:[%s1 + $0x38] sm:$0xf]
        %v612 = vld [vmem:[%s1 + $0x3c] sm:$0xf]
        %v613 = vld [vmem:[%s1 + $0x40] sm:$0xf]
        %v614 = vld [vmem:[%s1 + $0x44] sm:$0xf]
        %v615 = vld [vmem:[%s1 + $0x48] sm:$0xf]
        %v616 = vld [vmem:[%s1 + $0x4c] sm:$0xf]
        %v617 = vld [vmem:[%s1 + $0x50] sm:$0xf]
        %v618 = vld [vmem:[%s1 + $0x54] sm:$0xf]
        %v619 = vld [vmem:[%s1 + $0x58] sm:$0xf]
        %v620 = vld [vmem:[%s1 + $0x5c] sm:$0xf]
        %v621 = vld [vmem:[%s1 + $0x60] sm:$0xf]
        %v622 = vld [vmem:[%s1 + $0x64] sm:$0xf]
        %v623 = vld [vmem:[%s1 + $0x68] sm:$0xf]
        %v624 = vld [vmem:[%s1 + $0x6c] sm:$0xf]
        %v625 = vld [vmem:[%s1 + $0x70] sm:$0xf]
        %v626 = vld [vmem:[%s1 + $0x74] sm:$0xf]
        %v627 = vld [vmem:[%s1 + $0x78] sm:$0xf]
        %v628 = vld [vmem:[%s1 + $0x7c] sm:$0xf]
        %v629 = vld [vmem:[%s1 + $0x80] sm:$0xf]
        %v630 = vld [vmem:[%s1 + $0x84] sm:$0xf]
        %v631 = vld [vmem:[%s1 + $0x88] sm:$0xf]
        %v632 = vld [vmem:[%s1 + $0x8c] sm:$0xf]
        %v633 = vld [vmem:[%s1 + $0x90] sm:$0xf]
        %v634 = vld [vmem:[%s1 + $0x94] sm:$0xf]
        %v635 = vld [vmem:[%s1 + $0x98] sm:$0xf]
        %v636 = vld [vmem:[%s1 + $0x9c] sm:$0xf]
        %v637 = vld [vmem:[%s1 + $0xa0] sm:$0xf]
        %v638 = vld [vmem:[%s1 + $0xa4] sm:$0xf]
        %v639 = vld [vmem:[%s1 + $0xa8] sm:$0xf]
        %v640 = vld [vmem:[%s1 + $0xac] sm:$0xf]
        %v641 = vld [vmem:[%s1 + $0xb0] sm:$0xf]
        %v642 = vld [vmem:[%s1 + $0xb4] sm:$0xf]
        %v643 = vld [vmem:[%s1 + $0xb8] sm:$0xf]
        %v644 = vld [vmem:[%s1 + $0xbc] sm:$0xf]
        %v645 = vld [vmem:[%s1 + $0xc0] sm:$0xf]
        %v646 = vld [vmem:[%s1 + $0xc4] sm:$0xf]
        %v647 = vld [vmem:[%s1 + $0xc8] sm:$0xf]
        %v648 = vld [vmem:[%s1 + $0xcc] sm:$0xf]
        %v649 = vld [vmem:[%s1 + $0xd0] sm:$0xf]
        %v650 = vld [vmem:[%s1 + $0xd4] sm:$0xf]
        %v651 = vld [vmem:[%s1 + $0xd8] sm:$0xf]
        %v652 = vld [vmem:[%s1 + $0xdc] sm:$0xf]
        %v653 = vld [vmem:[%s1 + $0xe0] sm:$0xf]
        %v654 = vld [vmem:[%s1 + $0xe4] sm:$0xf]
        %v655 = vld [vmem:[%s1 + $0xe8] sm:$0xf]
        %v656 = vld [vmem:[%s1 + $0xec] sm:$0xf]
        %v657 = vld [vmem:[%s1 + $0xf0] sm:$0xf]
        %v658 = vld [vmem:[%s1 + $0xf4] sm:$0xf]
        %v659 = vld [vmem:[%s1 + $0xf8] sm:$0xf]
        %v660 = vld [vmem:[%s1 + $0xfc] sm:$0xf]
        %v661 = vld [vmem:[%s6] sm:$0x1]
        %v662 = vlaneseq
        %v663 = vshrl.u32 %v662, 7
        %v664 = vsub.s32 0, %v663
        %v665 = vrot.slane %v661, %v664
        %v730 = vunpack.c.l.b16 %v597
        %v731 = vunpack.c.l.b16 %v598
        %v732 = vunpack.c.l.b16 %v599
        %v733 = vunpack.c.l.b16 %v600
        %v734 = vunpack.c.l.b16 %v601
        %v735 = vunpack.c.l.b16 %v602
        %v736 = vunpack.c.l.b16 %v603
        %v737 = vunpack.c.l.b16 %v604
        %v738 = vunpack.c.l.b16 %v605
        %v739 = vunpack.c.l.b16 %v606
        %v740 = vunpack.c.l.b16 %v607
        %v741 = vunpack.c.l.b16 %v608
        %v742 = vunpack.c.l.b16 %v609
        %v743 = vunpack.c.l.b16 %v610
        %v744 = vunpack.c.l.b16 %v611
        %v745 = vunpack.c.l.b16 %v612
        %v746 = vunpack.c.l.b16 %v613
        %v747 = vunpack.c.l.b16 %v614
        %v748 = vunpack.c.l.b16 %v615
        %v749 = vunpack.c.l.b16 %v616
        %v750 = vunpack.c.l.b16 %v617
        %v751 = vunpack.c.l.b16 %v618
        %v752 = vunpack.c.l.b16 %v619
        %v753 = vunpack.c.l.b16 %v620
        %v754 = vunpack.c.l.b16 %v621
        %v755 = vunpack.c.l.b16 %v622
        %v756 = vunpack.c.l.b16 %v623
        %v757 = vunpack.c.l.b16 %v624
        %v758 = vunpack.c.l.b16 %v625
        %v759 = vunpack.c.l.b16 %v626
        %v760 = vunpack.c.l.b16 %v627
        %v761 = vunpack.c.l.b16 %v628
        %v762 = vunpack.c.l.b16 %v629
        %v763 = vunpack.c.l.b16 %v630
        %v764 = vunpack.c.l.b16 %v631
        %v765 = vunpack.c.l.b16 %v632
        %v766 = vunpack.c.l.b16 %v633
        %v767 = vunpack.c.l.b16 %v634
        %v768 = vunpack.c.l.b16 %v635
        %v769 = vunpack.c.l.b16 %v636
        %v770 = vunpack.c.l.b16 %v637
        %v771 = vunpack.c.l.b16 %v638
        %v772 = vunpack.c.l.b16 %v639
        %v773 = vunpack.c.l.b16 %v640
        %v774 = vunpack.c.l.b16 %v641
        %v775 = vunpack.c.l.b16 %v642
        %v776 = vunpack.c.l.b16 %v643
        %v777 = vunpack.c.l.b16 %v644
        %v778 = vunpack.c.l.b16 %v645
        %v779 = vunpack.c.l.b16 %v646
        %v780 = vunpack.c.l.b16 %v647
        %v781 = vunpack.c.l.b16 %v648
        %v782 = vunpack.c.l.b16 %v649
        %v783 = vunpack.c.l.b16 %v650
        %v784 = vunpack.c.l.b16 %v651
        %v785 = vunpack.c.l.b16 %v652
        %v786 = vunpack.c.l.b16 %v653
        %v787 = vunpack.c.l.b16 %v654
        %v788 = vunpack.c.l.b16 %v655
        %v789 = vunpack.c.l.b16 %v656
        %v790 = vunpack.c.l.b16 %v657
        %v791 = vunpack.c.l.b16 %v658
        %v792 = vunpack.c.l.b16 %v659
        %v793 = vunpack.c.l.b16 %v660
        %v794 = vpack.c.b16 %v731, %v730
        %v795 = vpack.c.b16 %v733, %v732
        %v796 = vpack.c.b16 %v735, %v734
        %v797 = vpack.c.b16 %v737, %v736
        %v798 = vpack.c.b16 %v739, %v738
        %v799 = vpack.c.b16 %v741, %v740
        %v800 = vpack.c.b16 %v743, %v742
        %v801 = vpack.c.b16 %v745, %v744
        %v802 = vpack.c.b16 %v747, %v746
        %v803 = vpack.c.b16 %v749, %v748
        %v804 = vpack.c.b16 %v751, %v750
        %v805 = vpack.c.b16 %v753, %v752
        %v806 = vpack.c.b16 %v755, %v754
        %v807 = vpack.c.b16 %v757, %v756
        %v808 = vpack.c.b16 %v759, %v758
        %v809 = vpack.c.b16 %v761, %v760
        %v810 = vpack.c.b16 %v763, %v762
        %v811 = vpack.c.b16 %v765, %v764
        %v812 = vpack.c.b16 %v767, %v766
        %v813 = vpack.c.b16 %v769, %v768
        %v814 = vpack.c.b16 %v771, %v770
        %v815 = vpack.c.b16 %v773, %v772
        %v816 = vpack.c.b16 %v775, %v774
        %v817 = vpack.c.b16 %v777, %v776
        %v818 = vpack.c.b16 %v779, %v778
        %v819 = vpack.c.b16 %v781, %v780
        %v820 = vpack.c.b16 %v783, %v782
        %v821 = vpack.c.b16 %v785, %v784
        %v822 = vpack.c.b16 %v787, %v786
        %v823 = vpack.c.b16 %v789, %v788
        %v824 = vpack.c.b16 %v791, %v790
        %v825 = vpack.c.b16 %v793, %v792
        %858 = vmatprep.subr.bf16.mxu0 0
        %859 = vmatpush1.bf16.msra.mxu0 %v794
        %860 = vmatprep.subr.bf16.mxu0 0
        %861 = vmatpush1.bf16.msra.mxu0 %v795
        %862 = vmatprep.subr.bf16.mxu0 0
        %863 = vmatpush1.bf16.msra.mxu0 %v796
        %864 = vmatprep.subr.bf16.mxu0 0
        %865 = vmatpush1.bf16.msra.mxu0 %v797
        %866 = vmatprep.subr.bf16.mxu0 0
        %867 = vmatpush1.bf16.msra.mxu0 %v798
        %868 = vmatprep.subr.bf16.mxu0 0
        %869 = vmatpush1.bf16.msra.mxu0 %v799
        %870 = vmatprep.subr.bf16.mxu0 0
        %871 = vmatpush1.bf16.msra.mxu0 %v800
        %872 = vmatprep.subr.bf16.mxu0 0
        %873 = vmatpush1.bf16.msra.mxu0 %v801
        %874 = vmatprep.subr.bf16.mxu0 0
        %875 = vmatpush1.bf16.msra.mxu0 %v802
        %876 = vmatprep.subr.bf16.mxu0 0
        %877 = vmatpush1.bf16.msra.mxu0 %v803
        %878 = vmatprep.subr.bf16.mxu0 0
        %879 = vmatpush1.bf16.msra.mxu0 %v804
        %880 = vmatprep.subr.bf16.mxu0 0
        %881 = vmatpush1.bf16.msra.mxu0 %v805
        %882 = vmatprep.subr.bf16.mxu0 0
        %883 = vmatpush1.bf16.msra.mxu0 %v806
        %884 = vmatprep.subr.bf16.mxu0 0
        %885 = vmatpush1.bf16.msra.mxu0 %v807
        %886 = vmatprep.subr.bf16.mxu0 0
        %887 = vmatpush1.bf16.msra.mxu0 %v808
        %888 = vmatprep.subr.bf16.mxu0 0
        %889 = vmatpush1.bf16.msra.mxu0 %v809
        %890 = vmatprep.mubr.bf16.mxu0 %v566
        %891 = vmatmul.mubr.bf16.gmra.mrb[0].mxu0 %v565
        %v892 = vpop.f32.mrb[0].mxu0
        %v893 = vadd.f32 %v665, %v892
        %v894 = vpop.f32.mrb[0].mxu0
        %v895 = vpop.f32.mrb[0].mxu0
        %v896 = vadd.f32 %v665, %v895
        %v897 = vpop.f32.mrb[0].mxu0
        %898 = vmatprep.mubr.bf16.mxu0 %v570
        %899 = vmatmul.mubr.bf16.gmra.mrb[0].mxu0 %v569
        %v900 = vpop.f32.mrb[0].mxu0
        %v901 = vadd.f32 %v665, %v900
        %v902 = vpop.f32.mrb[0].mxu0
        %v903 = vpop.f32.mrb[0].mxu0
        %v904 = vadd.f32 %v665, %v903
        %v905 = vpop.f32.mrb[0].mxu0
        %906 = vmatprep.mubr.bf16.mxu0 %v574
        %907 = vmatmul.mubr.bf16.gmra.mrb[0].mxu0 %v573
        %v908 = vpop.f32.mrb[0].mxu0
        %v909 = vadd.f32 %v665, %v908
        %v910 = vpop.f32.mrb[0].mxu0
        %v911 = vpop.f32.mrb[0].mxu0
        %v912 = vadd.f32 %v665, %v911
        %v913 = vpop.f32.mrb[0].mxu0
        %914 = vmatprep.mubr.bf16.mxu0 %v578
        %915 = vmatmul.mubr.bf16.gmra.mrb[0].mxu0 %v577
        %v916 = vpop.f32.mrb[0].mxu0
        %v917 = vadd.f32 %v665, %v916
        %v918 = vpop.f32.mrb[0].mxu0
        %v919 = vpop.f32.mrb[0].mxu0
        %v920 = vadd.f32 %v665, %v919
        %v921 = vpop.f32.mrb[0].mxu0
        %922 = vmatprep.mubr.bf16.mxu0 %v582
        %923 = vmatmul.mubr.bf16.gmra.mrb[0].mxu0 %v581
        %v924 = vpop.f32.mrb[0].mxu0
        %v925 = vadd.f32 %v665, %v924
        %v926 = vpop.f32.mrb[0].mxu0
        %v927 = vpop.f32.mrb[0].mxu0
        %v928 = vadd.f32 %v665, %v927
        %v929 = vpop.f32.mrb[0].mxu0
        %930 = vmatprep.mubr.bf16.mxu0 %v586
        %931 = vmatmul.mubr.bf16.gmra.mrb[0].mxu0 %v585
        %v932 = vpop.f32.mrb[0].mxu0
        %v933 = vadd.f32 %v665, %v932
        %v934 = vpop.f32.mrb[0].mxu0
        %v935 = vpop.f32.mrb[0].mxu0
        %v936 = vadd.f32 %v665, %v935
        %v937 = vpop.f32.mrb[0].mxu0
        %938 = vmatprep.mubr.bf16.mxu0 %v590
        %939 = vmatmul.mubr.bf16.gmra.mrb[0].mxu0 %v589
        %v940 = vpop.f32.mrb[0].mxu0
        %v941 = vadd.f32 %v665, %v940
        %v942 = vpop.f32.mrb[0].mxu0
        %v943 = vpop.f32.mrb[0].mxu0
        %v944 = vadd.f32 %v665, %v943
        %v945 = vpop.f32.mrb[0].mxu0
        %946 = vmatprep.mubr.bf16.mxu0 %v594
        %947 = vmatmul.mubr.bf16.gmra.mrb[0].mxu0 %v593
        %v948 = vpop.f32.mrb[0].mxu0
        %v949 = vadd.f32 %v665, %v948
        %v950 = vpop.f32.mrb[0].mxu0
        %v951 = vpop.f32.mrb[0].mxu0
        %v952 = vadd.f32 %v665, %v951
        %v953 = vpop.f32.mrb[0].mxu0
        %954 = vdwg.mxu0
        %955 = vmatprep.subr.bf16.mxu0 0
        %956 = vmatpush1.bf16.msra.mxu0 %v810
        %957 = vmatprep.subr.bf16.mxu0 0
        %958 = vmatpush1.bf16.msra.mxu0 %v811
        %959 = vmatprep.subr.bf16.mxu0 0
        %960 = vmatpush1.bf16.msra.mxu0 %v812
        %961 = vmatprep.subr.bf16.mxu0 0
        %962 = vmatpush1.bf16.msra.mxu0 %v813
        %963 = vmatprep.subr.bf16.mxu0 0
        %964 = vmatpush1.bf16.msra.mxu0 %v814
        %965 = vmatprep.subr.bf16.mxu0 0
        %966 = vmatpush1.bf16.msra.mxu0 %v815
        %967 = vmatprep.subr.bf16.mxu0 0
        %968 = vmatpush1.bf16.msra.mxu0 %v816
        %969 = vmatprep.subr.bf16.mxu0 0
        %970 = vmatpush1.bf16.msra.mxu0 %v817
        %971 = vmatprep.subr.bf16.mxu0 0
        %972 = vmatpush1.bf16.msra.mxu0 %v818
        %973 = vmatprep.subr.bf16.mxu0 0
        %974 = vmatpush1.bf16.msra.mxu0 %v819
        %975 = vmatprep.subr.bf16.mxu0 0
        %976 = vmatpush1.bf16.msra.mxu0 %v820
        %977 = vmatprep.subr.bf16.mxu0 0
        %978 = vmatpush1.bf16.msra.mxu0 %v821
        %979 = vmatprep.subr.bf16.mxu0 0
        %980 = vmatpush1.bf16.msra.mxu0 %v822
        %981 = vmatprep.subr.bf16.mxu0 0
        %982 = vmatpush1.bf16.msra.mxu0 %v823
        %983 = vmatprep.subr.bf16.mxu0 0
        %984 = vmatpush1.bf16.msra.mxu0 %v824
        %985 = vmatprep.subr.bf16.mxu0 0
        %986 = vmatpush1.bf16.msra.mxu0 %v825
        %987 = vmatprep.mubr.bf16.mxu0 %v568
        %988 = vmatmul.mubr.bf16.gmra.mrb[0].mxu0 %v567
        %v989 = vpop.f32.mrb[0].mxu0
        %v990 = vadd.f32 %v893, %v989
        %v991 = vpop.f32.mrb[0].mxu0
        %v992 = vpop.f32.mrb[0].mxu0
        %v993 = vadd.f32 %v896, %v992
        %v994 = vpop.f32.mrb[0].mxu0
        %995 = vmatprep.mubr.bf16.mxu0 %v572
        %996 = vmatmul.mubr.bf16.gmra.mrb[0].mxu0 %v571
        %v997 = vpop.f32.mrb[0].mxu0
        %v998 = vadd.f32 %v901, %v997
        %v999 = vpop.f32.mrb[0].mxu0
        %v1000 = vpop.f32.mrb[0].mxu0
        %v1001 = vadd.f32 %v904, %v1000
        %v1002 = vpop.f32.mrb[0].mxu0
        %1003 = vmatprep.mubr.bf16.mxu0 %v576
        %1004 = vmatmul.mubr.bf16.gmra.mrb[0].mxu0 %v575
        %v1005 = vpop.f32.mrb[0].mxu0
        %v1006 = vadd.f32 %v909, %v1005
        %v1007 = vpop.f32.mrb[0].mxu0
        %v1008 = vpop.f32.mrb[0].mxu0
        %v1009 = vadd.f32 %v912, %v1008
        %v1010 = vpop.f32.mrb[0].mxu0
        %1011 = vmatprep.mubr.bf16.mxu0 %v580
        %1012 = vmatmul.mubr.bf16.gmra.mrb[0].mxu0 %v579
        %v1013 = vpop.f32.mrb[0].mxu0
        %v1014 = vadd.f32 %v917, %v1013
        %v1015 = vpop.f32.mrb[0].mxu0
        %v1016 = vpop.f32.mrb[0].mxu0
        %v1017 = vadd.f32 %v920, %v1016
        %v1018 = vpop.f32.mrb[0].mxu0
        %1019 = vmatprep.mubr.bf16.mxu0 %v584
        %1020 = vmatmul.mubr.bf16.gmra.mrb[0].mxu0 %v583
        %v1021 = vpop.f32.mrb[0].mxu0
        %v1022 = vadd.f32 %v925, %v1021
        %v1023 = vpop.f32.mrb[0].mxu0
        %v1024 = vpop.f32.mrb[0].mxu0
        %v1025 = vadd.f32 %v928, %v1024
        %v1026 = vpop.f32.mrb[0].mxu0
        %1027 = vmatprep.mubr.bf16.mxu0 %v588
        %1028 = vmatmul.mubr.bf16.gmra.mrb[0].mxu0 %v587
        %v1029 = vpop.f32.mrb[0].mxu0
        %v1030 = vadd.f32 %v933, %v1029
        %v1031 = vpop.f32.mrb[0].mxu0
        %v1032 = vpop.f32.mrb[0].mxu0
        %v1033 = vadd.f32 %v936, %v1032
        %v1034 = vpop.f32.mrb[0].mxu0
        %1035 = vmatprep.mubr.bf16.mxu0 %v592
        %1036 = vmatmul.mubr.bf16.gmra.mrb[0].mxu0 %v591
        %v1037 = vpop.f32.mrb[0].mxu0
        %v1038 = vadd.f32 %v941, %v1037
        %v1039 = vpop.f32.mrb[0].mxu0
        %v1040 = vpop.f32.mrb[0].mxu0
        %v1041 = vadd.f32 %v944, %v1040
        %v1042 = vpop.f32.mrb[0].mxu0
        %1043 = vmatprep.mubr.bf16.mxu0 %v596
        %1044 = vmatmul.mubr.bf16.gmra.mrb[0].mxu0 %v595
        %v1045 = vpop.f32.mrb[0].mxu0
        %v1046 = vadd.f32 %v949, %v1045
        %v1047 = vpop.f32.mrb[0].mxu0
        %v1048 = vpop.f32.mrb[0].mxu0
        %v1049 = vadd.f32 %v952, %v1048
        %v1050 = vpop.f32.mrb[0].mxu0
        %1051 = vdwg.mxu0
        %vm1052 = vcmp.ge.f32.partialorder %v990, 0.0
        %vm1053 = vcmp.ge.f32.partialorder %v993, 0.0
        %vm1054 = vcmp.ge.f32.partialorder %v998, 0.0
        %vm1055 = vcmp.ge.f32.partialorder %v1001, 0.0
        %vm1056 = vcmp.ge.f32.partialorder %v1006, 0.0
        %vm1057 = vcmp.ge.f32.partialorder %v1009, 0.0
        %vm1058 = vcmp.ge.f32.partialorder %v1014, 0.0
        %vm1059 = vcmp.ge.f32.partialorder %v1017, 0.0
        %vm1060 = vcmp.ge.f32.partialorder %v1022, 0.0
        %vm1061 = vcmp.ge.f32.partialorder %v1025, 0.0
        %vm1062 = vcmp.ge.f32.partialorder %v1030, 0.0
        %vm1063 = vcmp.ge.f32.partialorder %v1033, 0.0
        %vm1064 = vcmp.ge.f32.partialorder %v1038, 0.0
        %vm1065 = vcmp.ge.f32.partialorder %v1041, 0.0
        %vm1066 = vcmp.ge.f32.partialorder %v1046, 0.0
        %vm1067 = vcmp.ge.f32.partialorder %v1049, 0.0
        %v1068 = vmul.f32 %v990, 0.01
        %v1069 = vmul.f32 %v993, 0.01
        %v1070 = vmul.f32 %v998, 0.01
        %v1071 = vmul.f32 %v1001, 0.01
        %v1072 = vmul.f32 %v1006, 0.01
        %v1073 = vmul.f32 %v1009, 0.01
        %v1074 = vmul.f32 %v1014, 0.01
        %v1075 = vmul.f32 %v1017, 0.01
        %v1076 = vmul.f32 %v1022, 0.01
        %v1077 = vmul.f32 %v1025, 0.01
        %v1078 = vmul.f32 %v1030, 0.01
        %v1079 = vmul.f32 %v1033, 0.01
        %v1080 = vmul.f32 %v1038, 0.01
        %v1081 = vmul.f32 %v1041, 0.01
        %v1082 = vmul.f32 %v1046, 0.01
        %v1083 = vmul.f32 %v1049, 0.01
        %v1084 = vsel %vm1052, %v990, %v1068
        %v1085 = vsel %vm1053, %v993, %v1069
        %v1086 = vsel %vm1054, %v998, %v1070
        %v1087 = vsel %vm1055, %v1001, %v1071
        %v1088 = vsel %vm1056, %v1006, %v1072
        %v1089 = vsel %vm1057, %v1009, %v1073
        %v1090 = vsel %vm1058, %v1014, %v1074
        %v1091 = vsel %vm1059, %v1017, %v1075
        %v1092 = vsel %vm1060, %v1022, %v1076
        %v1093 = vsel %vm1061, %v1025, %v1077
        %v1094 = vsel %vm1062, %v1030, %v1078
        %v1095 = vsel %vm1063, %v1033, %v1079
        %v1096 = vsel %vm1064, %v1038, %v1080
        %v1097 = vsel %vm1065, %v1041, %v1081
        %v1098 = vsel %vm1066, %v1046, %v1082
        %v1099 = vsel %vm1067, %v1049, %v1083
        %1100 = vst [vmem:[#allocation2] sm:$0xff] 0.0
        %s1101 = scalar_lea.vmem [#allocation2], 8
        %1102 = vst [vmem:[%s1101] sm:$0xff] %v1084
        %1103 = vst [vmem:[%s1101 + $0x8] sm:$0xff] %v1085
        %1104 = vst [vmem:[%s1101 + $0x10] sm:$0xff] %v1086
        %1105 = vst [vmem:[%s1101 + $0x18] sm:$0xff] %v1087
        %1106 = vst [vmem:[%s1101 + $0x20] sm:$0xff] %v1088
        %1107 = vst [vmem:[%s1101 + $0x28] sm:$0xff] %v1089
        %1108 = vst [vmem:[%s1101 + $0x30] sm:$0xff] %v1090
        %1109 = vst [vmem:[%s1101 + $0x38] sm:$0xff] %v1091
        %1110 = vst [vmem:[%s1101 + $0x40] sm:$0xff] %v1092
        %1111 = vst [vmem:[%s1101 + $0x48] sm:$0xff] %v1093
        %1112 = vst [vmem:[%s1101 + $0x50] sm:$0xff] %v1094
        %1113 = vst [vmem:[%s1101 + $0x58] sm:$0xff] %v1095
        %1114 = vst [vmem:[%s1101 + $0x60] sm:$0xff] %v1096
        %1115 = vst [vmem:[%s1101 + $0x68] sm:$0xff] %v1097
        %1116 = vst [vmem:[%s1101 + $0x70] sm:$0xff] %v1098
        %1117 = vst [vmem:[%s1101 + $0x78] sm:$0xff] %v1099
        %s1118 = scalar_lea.vmem [#allocation2], 136
        %1119 = vst [vmem:[%s1118] sm:$0xff] 0.0
        %v1120 = vld [vmem:[#allocation2] sm:$0xff]
        %v1121 = vld [vmem:[#allocation2 + $0x10] sm:$0xff]
        %v1122 = vld [vmem:[#allocation2 + $0x20] sm:$0xff]
        %v1123 = vld [vmem:[#allocation2 + $0x30] sm:$0xff]
        %v1124 = vld [vmem:[#allocation2 + $0x40] sm:$0xff]
        %v1125 = vld [vmem:[#allocation2 + $0x50] sm:$0xff]
        %v1126 = vld [vmem:[#allocation2 + $0x60] sm:$0xff]
        %v1127 = vld [vmem:[#allocation2 + $0x70] sm:$0xff]
        %v1128 = vld [vmem:[%s1101] sm:$0xff]
        %v1129 = vld [vmem:[%s1101 + $0x10] sm:$0xff]
        %v1130 = vld [vmem:[%s1101 + $0x20] sm:$0xff]
        %v1131 = vld [vmem:[%s1101 + $0x30] sm:$0xff]
        %v1132 = vld [vmem:[%s1101 + $0x40] sm:$0xff]
        %v1133 = vld [vmem:[%s1101 + $0x50] sm:$0xff]
        %v1134 = vld [vmem:[%s1101 + $0x60] sm:$0xff]
        %v1135 = vld [vmem:[%s1101 + $0x70] sm:$0xff]
        %s1136 = scalar_lea.vmem [#allocation2], 16
        %v1137 = vld [vmem:[%s1136] sm:$0xff]
        %v1138 = vld [vmem:[%s1136 + $0x10] sm:$0xff]
        %v1139 = vld [vmem:[%s1136 + $0x20] sm:$0xff]
        %v1140 = vld [vmem:[%s1136 + $0x30] sm:$0xff]
        %v1141 = vld [vmem:[%s1136 + $0x40] sm:$0xff]
        %v1142 = vld [vmem:[%s1136 + $0x50] sm:$0xff]
        %v1143 = vld [vmem:[%s1136 + $0x60] sm:$0xff]
        %v1144 = vld [vmem:[%s1136 + $0x70] sm:$0xff]
        %s1145 = scalar_lea.vmem [#allocation2], 24
        %v1146 = vld [vmem:[%s1145] sm:$0xff]
        %v1147 = vld [vmem:[%s1145 + $0x10] sm:$0xff]
        %v1148 = vld [vmem:[%s1145 + $0x20] sm:$0xff]
        %v1149 = vld [vmem:[%s1145 + $0x30] sm:$0xff]
        %v1150 = vld [vmem:[%s1145 + $0x40] sm:$0xff]
        %v1151 = vld [vmem:[%s1145 + $0x50] sm:$0xff]
        %v1152 = vld [vmem:[%s1145 + $0x60] sm:$0xff]
        %v1153 = vld [vmem:[%s1145 + $0x70] sm:$0xff]
        %v1154 = vpack.c.bf16 %v1121, %v1120
        %v1155 = vpack.c.bf16 %v1129, %v1128
        %v1156 = vpack.c.bf16 %v1138, %v1137
        %v1157 = vpack.c.bf16 %v1147, %v1146
        %v1158 = vpack.c.bf16 %v1123, %v1122
        %v1159 = vpack.c.bf16 %v1131, %v1130
        %v1160 = vpack.c.bf16 %v1140, %v1139
        %v1161 = vpack.c.bf16 %v1149, %v1148
        %v1162 = vpack.c.bf16 %v1125, %v1124
        %v1163 = vpack.c.bf16 %v1133, %v1132
        %v1164 = vpack.c.bf16 %v1142, %v1141
        %v1165 = vpack.c.bf16 %v1151, %v1150
        %v1166 = vpack.c.bf16 %v1127, %v1126
        %v1167 = vpack.c.bf16 %v1135, %v1134
        %v1168 = vpack.c.bf16 %v1144, %v1143
        %v1169 = vpack.c.bf16 %v1153, %v1152
        %v1170 = vld [vmem:[%s2] sm:$0xf]
        %v1171 = vld [vmem:[%s2 + $0x4] sm:$0xf]
        %v1172 = vld [vmem:[%s2 + $0x8] sm:$0xf]
        %v1173 = vld [vmem:[%s2 + $0xc] sm:$0xf]
        %v1174 = vld [vmem:[%s2 + $0x10] sm:$0xf]
        %v1175 = vld [vmem:[%s2 + $0x14] sm:$0xf]
        %v1176 = vld [vmem:[%s2 + $0x18] sm:$0xf]
        %v1177 = vld [vmem:[%s2 + $0x1c] sm:$0xf]
        %v1178 = vld [vmem:[%s2 + $0x20] sm:$0xf]
        %v1179 = vld [vmem:[%s2 + $0x24] sm:$0xf]
        %v1180 = vld [vmem:[%s2 + $0x28] sm:$0xf]
        %v1181 = vld [vmem:[%s2 + $0x2c] sm:$0xf]
        %v1182 = vld [vmem:[%s2 + $0x30] sm:$0xf]
        %v1183 = vld [vmem:[%s2 + $0x34] sm:$0xf]
        %v1184 = vld [vmem:[%s2 + $0x38] sm:$0xf]
        %v1185 = vld [vmem:[%s2 + $0x3c] sm:$0xf]
        %v1186 = vld [vmem:[%s2 + $0x40] sm:$0xf]
        %v1187 = vld [vmem:[%s2 + $0x44] sm:$0xf]
        %v1188 = vld [vmem:[%s2 + $0x48] sm:$0xf]
        %v1189 = vld [vmem:[%s2 + $0x4c] sm:$0xf]
        %v1190 = vld [vmem:[%s2 + $0x50] sm:$0xf]
        %v1191 = vld [vmem:[%s2 + $0x54] sm:$0xf]
        %v1192 = vld [vmem:[%s2 + $0x58] sm:$0xf]
        %v1193 = vld [vmem:[%s2 + $0x5c] sm:$0xf]
        %v1194 = vld [vmem:[%s2 + $0x60] sm:$0xf]
        %v1195 = vld [vmem:[%s2 + $0x64] sm:$0xf]
        %v1196 = vld [vmem:[%s2 + $0x68] sm:$0xf]
        %v1197 = vld [vmem:[%s2 + $0x6c] sm:$0xf]
        %v1198 = vld [vmem:[%s2 + $0x70] sm:$0xf]
        %v1199 = vld [vmem:[%s2 + $0x74] sm:$0xf]
        %v1200 = vld [vmem:[%s2 + $0x78] sm:$0xf]
        %v1201 = vld [vmem:[%s2 + $0x7c] sm:$0xf]
        %v1202 = vld [vmem:[%s2 + $0x80] sm:$0xf]
        %v1203 = vld [vmem:[%s2 + $0x84] sm:$0xf]
        %v1204 = vld [vmem:[%s2 + $0x88] sm:$0xf]
        %v1205 = vld [vmem:[%s2 + $0x8c] sm:$0xf]
        %v1206 = vld [vmem:[%s2 + $0x90] sm:$0xf]
        %v1207 = vld [vmem:[%s2 + $0x94] sm:$0xf]
        %v1208 = vld [vmem:[%s2 + $0x98] sm:$0xf]
        %v1209 = vld [vmem:[%s2 + $0x9c] sm:$0xf]
        %v1210 = vld [vmem:[%s2 + $0xa0] sm:$0xf]
        %v1211 = vld [vmem:[%s2 + $0xa4] sm:$0xf]
        %v1212 = vld [vmem:[%s2 + $0xa8] sm:$0xf]
        %v1213 = vld [vmem:[%s2 + $0xac] sm:$0xf]
        %v1214 = vld [vmem:[%s2 + $0xb0] sm:$0xf]
        %v1215 = vld [vmem:[%s2 + $0xb4] sm:$0xf]
        %v1216 = vld [vmem:[%s2 + $0xb8] sm:$0xf]
        %v1217 = vld [vmem:[%s2 + $0xbc] sm:$0xf]
        %v1218 = vld [vmem:[%s2 + $0xc0] sm:$0xf]
        %v1219 = vld [vmem:[%s2 + $0xc4] sm:$0xf]
        %v1220 = vld [vmem:[%s2 + $0xc8] sm:$0xf]
        %v1221 = vld [vmem:[%s2 + $0xcc] sm:$0xf]
        %v1222 = vld [vmem:[%s2 + $0xd0] sm:$0xf]
        %v1223 = vld [vmem:[%s2 + $0xd4] sm:$0xf]
        %v1224 = vld [vmem:[%s2 + $0xd8] sm:$0xf]
        %v1225 = vld [vmem:[%s2 + $0xdc] sm:$0xf]
        %v1226 = vld [vmem:[%s2 + $0xe0] sm:$0xf]
        %v1227 = vld [vmem:[%s2 + $0xe4] sm:$0xf]
        %v1228 = vld [vmem:[%s2 + $0xe8] sm:$0xf]
        %v1229 = vld [vmem:[%s2 + $0xec] sm:$0xf]
        %v1230 = vld [vmem:[%s2 + $0xf0] sm:$0xf]
        %v1231 = vld [vmem:[%s2 + $0xf4] sm:$0xf]
        %v1232 = vld [vmem:[%s2 + $0xf8] sm:$0xf]
        %v1233 = vld [vmem:[%s2 + $0xfc] sm:$0xf]
        %v1234 = vld [vmem:[%s6 + $0x1] sm:$0x1]
        %v1235 = vlaneseq
        %v1236 = vshrl.u32 %v1235, 7
        %v1237 = vsub.s32 0, %v1236
        %v1238 = vrot.slane %v1234, %v1237
        %v1303 = vunpack.c.l.b16 %v1170
        %v1304 = vunpack.c.l.b16 %v1171
        %v1305 = vunpack.c.l.b16 %v1172
        %v1306 = vunpack.c.l.b16 %v1173
        %v1307 = vunpack.c.l.b16 %v1174
        %v1308 = vunpack.c.l.b16 %v1175
        %v1309 = vunpack.c.l.b16 %v1176
        %v1310 = vunpack.c.l.b16 %v1177
        %v1311 = vunpack.c.l.b16 %v1178
        %v1312 = vunpack.c.l.b16 %v1179
        %v1313 = vunpack.c.l.b16 %v1180
        %v1314 = vunpack.c.l.b16 %v1181
        %v1315 = vunpack.c.l.b16 %v1182
        %v1316 = vunpack.c.l.b16 %v1183
        %v1317 = vunpack.c.l.b16 %v1184
        %v1318 = vunpack.c.l.b16 %v1185
        %v1319 = vunpack.c.l.b16 %v1186
        %v1320 = vunpack.c.l.b16 %v1187
        %v1321 = vunpack.c.l.b16 %v1188
        %v1322 = vunpack.c.l.b16 %v1189
        %v1323 = vunpack.c.l.b16 %v1190
        %v1324 = vunpack.c.l.b16 %v1191
        %v1325 = vunpack.c.l.b16 %v1192
        %v1326 = vunpack.c.l.b16 %v1193
        %v1327 = vunpack.c.l.b16 %v1194
        %v1328 = vunpack.c.l.b16 %v1195
        %v1329 = vunpack.c.l.b16 %v1196
        %v1330 = vunpack.c.l.b16 %v1197
        %v1331 = vunpack.c.l.b16 %v1198
        %v1332 = vunpack.c.l.b16 %v1199
        %v1333 = vunpack.c.l.b16 %v1200
        %v1334 = vunpack.c.l.b16 %v1201
        %v1335 = vunpack.c.l.b16 %v1202
        %v1336 = vunpack.c.l.b16 %v1203
        %v1337 = vunpack.c.l.b16 %v1204
        %v1338 = vunpack.c.l.b16 %v1205
        %v1339 = vunpack.c.l.b16 %v1206
        %v1340 = vunpack.c.l.b16 %v1207
        %v1341 = vunpack.c.l.b16 %v1208
        %v1342 = vunpack.c.l.b16 %v1209
        %v1343 = vunpack.c.l.b16 %v1210
        %v1344 = vunpack.c.l.b16 %v1211
        %v1345 = vunpack.c.l.b16 %v1212
        %v1346 = vunpack.c.l.b16 %v1213
        %v1347 = vunpack.c.l.b16 %v1214
        %v1348 = vunpack.c.l.b16 %v1215
        %v1349 = vunpack.c.l.b16 %v1216
        %v1350 = vunpack.c.l.b16 %v1217
        %v1351 = vunpack.c.l.b16 %v1218
        %v1352 = vunpack.c.l.b16 %v1219
        %v1353 = vunpack.c.l.b16 %v1220
        %v1354 = vunpack.c.l.b16 %v1221
        %v1355 = vunpack.c.l.b16 %v1222
        %v1356 = vunpack.c.l.b16 %v1223
        %v1357 = vunpack.c.l.b16 %v1224
        %v1358 = vunpack.c.l.b16 %v1225
        %v1359 = vunpack.c.l.b16 %v1226
        %v1360 = vunpack.c.l.b16 %v1227
        %v1361 = vunpack.c.l.b16 %v1228
        %v1362 = vunpack.c.l.b16 %v1229
        %v1363 = vunpack.c.l.b16 %v1230
        %v1364 = vunpack.c.l.b16 %v1231
        %v1365 = vunpack.c.l.b16 %v1232
        %v1366 = vunpack.c.l.b16 %v1233
        %v1367 = vpack.c.b16 %v1304, %v1303
        %v1368 = vpack.c.b16 %v1306, %v1305
        %v1369 = vpack.c.b16 %v1308, %v1307
        %v1370 = vpack.c.b16 %v1310, %v1309
        %v1371 = vpack.c.b16 %v1312, %v1311
        %v1372 = vpack.c.b16 %v1314, %v1313
        %v1373 = vpack.c.b16 %v1316, %v1315
        %v1374 = vpack.c.b16 %v1318, %v1317
        %v1375 = vpack.c.b16 %v1320, %v1319
        %v1376 = vpack.c.b16 %v1322, %v1321
        %v1377 = vpack.c.b16 %v1324, %v1323
        %v1378 = vpack.c.b16 %v1326, %v1325
        %v1379 = vpack.c.b16 %v1328, %v1327
        %v1380 = vpack.c.b16 %v1330, %v1329
        %v1381 = vpack.c.b16 %v1332, %v1331
        %v1382 = vpack.c.b16 %v1334, %v1333
        %v1383 = vpack.c.b16 %v1336, %v1335
        %v1384 = vpack.c.b16 %v1338, %v1337
        %v1385 = vpack.c.b16 %v1340, %v1339
        %v1386 = vpack.c.b16 %v1342, %v1341
        %v1387 = vpack.c.b16 %v1344, %v1343
        %v1388 = vpack.c.b16 %v1346, %v1345
        %v1389 = vpack.c.b16 %v1348, %v1347
        %v1390 = vpack.c.b16 %v1350, %v1349
        %v1391 = vpack.c.b16 %v1352, %v1351
        %v1392 = vpack.c.b16 %v1354, %v1353
        %v1393 = vpack.c.b16 %v1356, %v1355
        %v1394 = vpack.c.b16 %v1358, %v1357
        %v1395 = vpack.c.b16 %v1360, %v1359
        %v1396 = vpack.c.b16 %v1362, %v1361
        %v1397 = vpack.c.b16 %v1364, %v1363
        %v1398 = vpack.c.b16 %v1366, %v1365
        %1431 = vmatprep.subr.bf16.mxu0 0
        %1432 = vmatpush1.bf16.msra.mxu0 %v1367
        %1433 = vmatprep.subr.bf16.mxu0 0
        %1434 = vmatpush1.bf16.msra.mxu0 %v1368
        %1435 = vmatprep.subr.bf16.mxu0 0
        %1436 = vmatpush1.bf16.msra.mxu0 %v1369
        %1437 = vmatprep.subr.bf16.mxu0 0
        %1438 = vmatpush1.bf16.msra.mxu0 %v1370
        %1439 = vmatprep.subr.bf16.mxu0 0
        %1440 = vmatpush1.bf16.msra.mxu0 %v1371
        %1441 = vmatprep.subr.bf16.mxu0 0
        %1442 = vmatpush1.bf16.msra.mxu0 %v1372
        %1443 = vmatprep.subr.bf16.mxu0 0
        %1444 = vmatpush1.bf16.msra.mxu0 %v1373
        %1445 = vmatprep.subr.bf16.mxu0 0
        %1446 = vmatpush1.bf16.msra.mxu0 %v1374
        %1447 = vmatprep.subr.bf16.mxu0 0
        %1448 = vmatpush1.bf16.msra.mxu0 %v1375
        %1449 = vmatprep.subr.bf16.mxu0 0
        %1450 = vmatpush1.bf16.msra.mxu0 %v1376
        %1451 = vmatprep.subr.bf16.mxu0 0
        %1452 = vmatpush1.bf16.msra.mxu0 %v1377
        %1453 = vmatprep.subr.bf16.mxu0 0
        %1454 = vmatpush1.bf16.msra.mxu0 %v1378
        %1455 = vmatprep.subr.bf16.mxu0 0
        %1456 = vmatpush1.bf16.msra.mxu0 %v1379
        %1457 = vmatprep.subr.bf16.mxu0 0
        %1458 = vmatpush1.bf16.msra.mxu0 %v1380
        %1459 = vmatprep.subr.bf16.mxu0 0
        %1460 = vmatpush1.bf16.msra.mxu0 %v1381
        %1461 = vmatprep.subr.bf16.mxu0 0
        %1462 = vmatpush1.bf16.msra.mxu0 %v1382
        %1463 = vmatprep.mubr.bf16.mxu0 %v1155
        %1464 = vmatmul.mubr.bf16.gmra.mrb[0].mxu0 %v1154
        %v1465 = vpop.f32.mrb[0].mxu0
        %v1466 = vadd.f32 %v1238, %v1465
        %v1467 = vpop.f32.mrb[0].mxu0
        %v1468 = vpop.f32.mrb[0].mxu0
        %v1469 = vadd.f32 %v1238, %v1468
        %v1470 = vpop.f32.mrb[0].mxu0
        %1471 = vmatprep.mubr.bf16.mxu0 %v1159
        %1472 = vmatmul.mubr.bf16.gmra.mrb[0].mxu0 %v1158
        %v1473 = vpop.f32.mrb[0].mxu0
        %v1474 = vadd.f32 %v1238, %v1473
        %v1475 = vpop.f32.mrb[0].mxu0
        %v1476 = vpop.f32.mrb[0].mxu0
        %v1477 = vadd.f32 %v1238, %v1476
        %v1478 = vpop.f32.mrb[0].mxu0
        %1479 = vmatprep.mubr.bf16.mxu0 %v1163
        %1480 = vmatmul.mubr.bf16.gmra.mrb[0].mxu0 %v1162
        %v1481 = vpop.f32.mrb[0].mxu0
        %v1482 = vadd.f32 %v1238, %v1481
        %v1483 = vpop.f32.mrb[0].mxu0
        %v1484 = vpop.f32.mrb[0].mxu0
        %v1485 = vadd.f32 %v1238, %v1484
        %v1486 = vpop.f32.mrb[0].mxu0
        %1487 = vmatprep.mubr.bf16.mxu0 %v1167
        %1488 = vmatmul.mubr.bf16.gmra.mrb[0].mxu0 %v1166
        %v1489 = vpop.f32.mrb[0].mxu0
        %v1490 = vadd.f32 %v1238, %v1489
        %v1491 = vpop.f32.mrb[0].mxu0
        %v1492 = vpop.f32.mrb[0].mxu0
        %v1493 = vadd.f32 %v1238, %v1492
        %v1494 = vpop.f32.mrb[0].mxu0
        %1495 = vdwg.mxu0
        %1496 = vmatprep.subr.bf16.mxu0 0
        %1497 = vmatpush1.bf16.msra.mxu0 %v1383
        %1498 = vmatprep.subr.bf16.mxu0 0
        %1499 = vmatpush1.bf16.msra.mxu0 %v1384
        %1500 = vmatprep.subr.bf16.mxu0 0
        %1501 = vmatpush1.bf16.msra.mxu0 %v1385
        %1502 = vmatprep.subr.bf16.mxu0 0
        %1503 = vmatpush1.bf16.msra.mxu0 %v1386
        %1504 = vmatprep.subr.bf16.mxu0 0
        %1505 = vmatpush1.bf16.msra.mxu0 %v1387
        %1506 = vmatprep.subr.bf16.mxu0 0
        %1507 = vmatpush1.bf16.msra.mxu0 %v1388
        %1508 = vmatprep.subr.bf16.mxu0 0
        %1509 = vmatpush1.bf16.msra.mxu0 %v1389
        %1510 = vmatprep.subr.bf16.mxu0 0
        %1511 = vmatpush1.bf16.msra.mxu0 %v1390
        %1512 = vmatprep.subr.bf16.mxu0 0
        %1513 = vmatpush1.bf16.msra.mxu0 %v1391
        %1514 = vmatprep.subr.bf16.mxu0 0
        %1515 = vmatpush1.bf16.msra.mxu0 %v1392
        %1516 = vmatprep.subr.bf16.mxu0 0
        %1517 = vmatpush1.bf16.msra.mxu0 %v1393
        %1518 = vmatprep.subr.bf16.mxu0 0
        %1519 = vmatpush1.bf16.msra.mxu0 %v1394
        %1520 = vmatprep.subr.bf16.mxu0 0
        %1521 = vmatpush1.bf16.msra.mxu0 %v1395
        %1522 = vmatprep.subr.bf16.mxu0 0
        %1523 = vmatpush1.bf16.msra.mxu0 %v1396
        %1524 = vmatprep.subr.bf16.mxu0 0
        %1525 = vmatpush1.bf16.msra.mxu0 %v1397
        %1526 = vmatprep.subr.bf16.mxu0 0
        %1527 = vmatpush1.bf16.msra.mxu0 %v1398
        %1528 = vmatprep.mubr.bf16.mxu0 %v1157
        %1529 = vmatmul.mubr.bf16.gmra.mrb[0].mxu0 %v1156
        %v1530 = vpop.f32.mrb[0].mxu0
        %v1531 = vadd.f32 %v1466, %v1530
        %v1532 = vpop.f32.mrb[0].mxu0
        %v1533 = vpop.f32.mrb[0].mxu0
        %v1534 = vadd.f32 %v1469, %v1533
        %v1535 = vpop.f32.mrb[0].mxu0
        %1536 = vmatprep.mubr.bf16.mxu0 %v1161
        %1537 = vmatmul.mubr.bf16.gmra.mrb[0].mxu0 %v1160
        %v1538 = vpop.f32.mrb[0].mxu0
        %v1539 = vadd.f32 %v1474, %v1538
        %v1540 = vpop.f32.mrb[0].mxu0
        %v1541 = vpop.f32.mrb[0].mxu0
        %v1542 = vadd.f32 %v1477, %v1541
        %v1543 = vpop.f32.mrb[0].mxu0
        %1544 = vmatprep.mubr.bf16.mxu0 %v1165
        %1545 = vmatmul.mubr.bf16.gmra.mrb[0].mxu0 %v1164
        %v1546 = vpop.f32.mrb[0].mxu0
        %v1547 = vadd.f32 %v1482, %v1546
        %v1548 = vpop.f32.mrb[0].mxu0
        %v1549 = vpop.f32.mrb[0].mxu0
        %v1550 = vadd.f32 %v1485, %v1549
        %v1551 = vpop.f32.mrb[0].mxu0
        %1552 = vmatprep.mubr.bf16.mxu0 %v1169
        %1553 = vmatmul.mubr.bf16.gmra.mrb[0].mxu0 %v1168
        %v1554 = vpop.f32.mrb[0].mxu0
        %v1555 = vadd.f32 %v1490, %v1554
        %v1556 = vpop.f32.mrb[0].mxu0
        %v1557 = vpop.f32.mrb[0].mxu0
        %v1558 = vadd.f32 %v1493, %v1557
        %v1559 = vpop.f32.mrb[0].mxu0
        %1560 = vdwg.mxu0
        %vm1561 = vcmp.ge.f32.partialorder %v1531, 0.0
        %vm1562 = vcmp.ge.f32.partialorder %v1534, 0.0
        %vm1563 = vcmp.ge.f32.partialorder %v1539, 0.0
        %vm1564 = vcmp.ge.f32.partialorder %v1542, 0.0
        %vm1565 = vcmp.ge.f32.partialorder %v1547, 0.0
        %vm1566 = vcmp.ge.f32.partialorder %v1550, 0.0
        %vm1567 = vcmp.ge.f32.partialorder %v1555, 0.0
        %vm1568 = vcmp.ge.f32.partialorder %v1558, 0.0
        %v1569 = vmul.f32 %v1531, 0.01
        %v1570 = vmul.f32 %v1534, 0.01
        %v1571 = vmul.f32 %v1539, 0.01
        %v1572 = vmul.f32 %v1542, 0.01
        %v1573 = vmul.f32 %v1547, 0.01
        %v1574 = vmul.f32 %v1550, 0.01
        %v1575 = vmul.f32 %v1555, 0.01
        %v1576 = vmul.f32 %v1558, 0.01
        %v1577 = vsel %vm1561, %v1531, %v1569
        %v1578 = vsel %vm1562, %v1534, %v1570
        %v1579 = vsel %vm1563, %v1539, %v1571
        %v1580 = vsel %vm1564, %v1542, %v1572
        %v1581 = vsel %vm1565, %v1547, %v1573
        %v1582 = vsel %vm1566, %v1550, %v1574
        %v1583 = vsel %vm1567, %v1555, %v1575
        %v1584 = vsel %vm1568, %v1558, %v1576
        %1585 = vst [vmem:[#allocation3] sm:$0xff] 0.0
        %s1586 = scalar_lea.vmem [#allocation3], 8
        %1587 = vst [vmem:[%s1586] sm:$0xff] %v1577
        %1588 = vst [vmem:[%s1586 + $0x8] sm:$0xff] %v1578
        %1589 = vst [vmem:[%s1586 + $0x10] sm:$0xff] %v1579
        %1590 = vst [vmem:[%s1586 + $0x18] sm:$0xff] %v1580
        %1591 = vst [vmem:[%s1586 + $0x20] sm:$0xff] %v1581
        %1592 = vst [vmem:[%s1586 + $0x28] sm:$0xff] %v1582
        %1593 = vst [vmem:[%s1586 + $0x30] sm:$0xff] %v1583
        %1594 = vst [vmem:[%s1586 + $0x38] sm:$0xff] %v1584
        %s1595 = scalar_lea.vmem [#allocation3], 72
        %1596 = vst [vmem:[%s1595] sm:$0xff] 0.0
        %v1597 = vld [vmem:[#allocation3] sm:$0xff]
        %v1598 = vld [vmem:[#allocation3 + $0x10] sm:$0xff]
        %v1599 = vld [vmem:[#allocation3 + $0x20] sm:$0xff]
        %v1600 = vld [vmem:[#allocation3 + $0x30] sm:$0xff]
        %v1601 = vld [vmem:[%s1586] sm:$0xff]
        %v1602 = vld [vmem:[%s1586 + $0x10] sm:$0xff]
        %v1603 = vld [vmem:[%s1586 + $0x20] sm:$0xff]
        %v1604 = vld [vmem:[%s1586 + $0x30] sm:$0xff]
        %s1605 = scalar_lea.vmem [#allocation3], 16
        %v1606 = vld [vmem:[%s1605] sm:$0xff]
        %v1607 = vld [vmem:[%s1605 + $0x10] sm:$0xff]
        %v1608 = vld [vmem:[%s1605 + $0x20] sm:$0xff]
        %v1609 = vld [vmem:[%s1605 + $0x30] sm:$0xff]
        %s1610 = scalar_lea.vmem [#allocation3], 24
        %v1611 = vld [vmem:[%s1610] sm:$0xff]
        %v1612 = vld [vmem:[%s1610 + $0x10] sm:$0xff]
        %v1613 = vld [vmem:[%s1610 + $0x20] sm:$0xff]
        %v1614 = vld [vmem:[%s1610 + $0x30] sm:$0xff]
        %v1615 = vpack.c.bf16 %v1598, %v1597
        %v1616 = vpack.c.bf16 %v1602, %v1601
        %v1617 = vpack.c.bf16 %v1607, %v1606
        %v1618 = vpack.c.bf16 %v1612, %v1611
        %v1619 = vpack.c.bf16 %v1600, %v1599
        %v1620 = vpack.c.bf16 %v1604, %v1603
        %v1621 = vpack.c.bf16 %v1609, %v1608
        %v1622 = vpack.c.bf16 %v1614, %v1613
        %v1623 = vld [vmem:[%s3] sm:$0xf]
        %v1624 = vld [vmem:[%s3 + $0x4] sm:$0xf]
        %v1625 = vld [vmem:[%s3 + $0x8] sm:$0xf]
        %v1626 = vld [vmem:[%s3 + $0xc] sm:$0xf]
        %v1627 = vld [vmem:[%s3 + $0x10] sm:$0xf]
        %v1628 = vld [vmem:[%s3 + $0x14] sm:$0xf]
        %v1629 = vld [vmem:[%s3 + $0x18] sm:$0xf]
        %v1630 = vld [vmem:[%s3 + $0x1c] sm:$0xf]
        %v1631 = vld [vmem:[%s3 + $0x20] sm:$0xf]
        %v1632 = vld [vmem:[%s3 + $0x24] sm:$0xf]
        %v1633 = vld [vmem:[%s3 + $0x28] sm:$0xf]
        %v1634 = vld [vmem:[%s3 + $0x2c] sm:$0xf]
        %v1635 = vld [vmem:[%s3 + $0x30] sm:$0xf]
        %v1636 = vld [vmem:[%s3 + $0x34] sm:$0xf]
        %v1637 = vld [vmem:[%s3 + $0x38] sm:$0xf]
        %v1638 = vld [vmem:[%s3 + $0x3c] sm:$0xf]
        %v1639 = vld [vmem:[%s3 + $0x40] sm:$0xf]
        %v1640 = vld [vmem:[%s3 + $0x44] sm:$0xf]
        %v1641 = vld [vmem:[%s3 + $0x48] sm:$0xf]
        %v1642 = vld [vmem:[%s3 + $0x4c] sm:$0xf]
        %v1643 = vld [vmem:[%s3 + $0x50] sm:$0xf]
        %v1644 = vld [vmem:[%s3 + $0x54] sm:$0xf]
        %v1645 = vld [vmem:[%s3 + $0x58] sm:$0xf]
        %v1646 = vld [vmem:[%s3 + $0x5c] sm:$0xf]
        %v1647 = vld [vmem:[%s3 + $0x60] sm:$0xf]
        %v1648 = vld [vmem:[%s3 + $0x64] sm:$0xf]
        %v1649 = vld [vmem:[%s3 + $0x68] sm:$0xf]
        %v1650 = vld [vmem:[%s3 + $0x6c] sm:$0xf]
        %v1651 = vld [vmem:[%s3 + $0x70] sm:$0xf]
        %v1652 = vld [vmem:[%s3 + $0x74] sm:$0xf]
        %v1653 = vld [vmem:[%s3 + $0x78] sm:$0xf]
        %v1654 = vld [vmem:[%s3 + $0x7c] sm:$0xf]
        %v1655 = vld [vmem:[%s3 + $0x80] sm:$0xf]
        %v1656 = vld [vmem:[%s3 + $0x84] sm:$0xf]
        %v1657 = vld [vmem:[%s3 + $0x88] sm:$0xf]
        %v1658 = vld [vmem:[%s3 + $0x8c] sm:$0xf]
        %v1659 = vld [vmem:[%s3 + $0x90] sm:$0xf]
        %v1660 = vld [vmem:[%s3 + $0x94] sm:$0xf]
        %v1661 = vld [vmem:[%s3 + $0x98] sm:$0xf]
        %v1662 = vld [vmem:[%s3 + $0x9c] sm:$0xf]
        %v1663 = vld [vmem:[%s3 + $0xa0] sm:$0xf]
        %v1664 = vld [vmem:[%s3 + $0xa4] sm:$0xf]
        %v1665 = vld [vmem:[%s3 + $0xa8] sm:$0xf]
        %v1666 = vld [vmem:[%s3 + $0xac] sm:$0xf]
        %v1667 = vld [vmem:[%s3 + $0xb0] sm:$0xf]
        %v1668 = vld [vmem:[%s3 + $0xb4] sm:$0xf]
        %v1669 = vld [vmem:[%s3 + $0xb8] sm:$0xf]
        %v1670 = vld [vmem:[%s3 + $0xbc] sm:$0xf]
        %v1671 = vld [vmem:[%s3 + $0xc0] sm:$0xf]
        %v1672 = vld [vmem:[%s3 + $0xc4] sm:$0xf]
        %v1673 = vld [vmem:[%s3 + $0xc8] sm:$0xf]
        %v1674 = vld [vmem:[%s3 + $0xcc] sm:$0xf]
        %v1675 = vld [vmem:[%s3 + $0xd0] sm:$0xf]
        %v1676 = vld [vmem:[%s3 + $0xd4] sm:$0xf]
        %v1677 = vld [vmem:[%s3 + $0xd8] sm:$0xf]
        %v1678 = vld [vmem:[%s3 + $0xdc] sm:$0xf]
        %v1679 = vld [vmem:[%s3 + $0xe0] sm:$0xf]
        %v1680 = vld [vmem:[%s3 + $0xe4] sm:$0xf]
        %v1681 = vld [vmem:[%s3 + $0xe8] sm:$0xf]
        %v1682 = vld [vmem:[%s3 + $0xec] sm:$0xf]
        %v1683 = vld [vmem:[%s3 + $0xf0] sm:$0xf]
        %v1684 = vld [vmem:[%s3 + $0xf4] sm:$0xf]
        %v1685 = vld [vmem:[%s3 + $0xf8] sm:$0xf]
        %v1686 = vld [vmem:[%s3 + $0xfc] sm:$0xf]
        %v1687 = vld [vmem:[%s6 + $0x2] sm:$0x1]
        %v1688 = vlaneseq
        %v1689 = vshrl.u32 %v1688, 7
        %v1690 = vsub.s32 0, %v1689
        %v1691 = vrot.slane %v1687, %v1690
        %v1756 = vunpack.c.l.b16 %v1623
        %v1757 = vunpack.c.l.b16 %v1624
        %v1758 = vunpack.c.l.b16 %v1625
        %v1759 = vunpack.c.l.b16 %v1626
        %v1760 = vunpack.c.l.b16 %v1627
        %v1761 = vunpack.c.l.b16 %v1628
        %v1762 = vunpack.c.l.b16 %v1629
        %v1763 = vunpack.c.l.b16 %v1630
        %v1764 = vunpack.c.l.b16 %v1631
        %v1765 = vunpack.c.l.b16 %v1632
        %v1766 = vunpack.c.l.b16 %v1633
        %v1767 = vunpack.c.l.b16 %v1634
        %v1768 = vunpack.c.l.b16 %v1635
        %v1769 = vunpack.c.l.b16 %v1636
        %v1770 = vunpack.c.l.b16 %v1637
        %v1771 = vunpack.c.l.b16 %v1638
        %v1772 = vunpack.c.l.b16 %v1639
        %v1773 = vunpack.c.l.b16 %v1640
        %v1774 = vunpack.c.l.b16 %v1641
        %v1775 = vunpack.c.l.b16 %v1642
        %v1776 = vunpack.c.l.b16 %v1643
        %v1777 = vunpack.c.l.b16 %v1644
        %v1778 = vunpack.c.l.b16 %v1645
        %v1779 = vunpack.c.l.b16 %v1646
        %v1780 = vunpack.c.l.b16 %v1647
        %v1781 = vunpack.c.l.b16 %v1648
        %v1782 = vunpack.c.l.b16 %v1649
        %v1783 = vunpack.c.l.b16 %v1650
        %v1784 = vunpack.c.l.b16 %v1651
        %v1785 = vunpack.c.l.b16 %v1652
        %v1786 = vunpack.c.l.b16 %v1653
        %v1787 = vunpack.c.l.b16 %v1654
        %v1788 = vunpack.c.l.b16 %v1655
        %v1789 = vunpack.c.l.b16 %v1656
        %v1790 = vunpack.c.l.b16 %v1657
        %v1791 = vunpack.c.l.b16 %v1658
        %v1792 = vunpack.c.l.b16 %v1659
        %v1793 = vunpack.c.l.b16 %v1660
        %v1794 = vunpack.c.l.b16 %v1661
        %v1795 = vunpack.c.l.b16 %v1662
        %v1796 = vunpack.c.l.b16 %v1663
        %v1797 = vunpack.c.l.b16 %v1664
        %v1798 = vunpack.c.l.b16 %v1665
        %v1799 = vunpack.c.l.b16 %v1666
        %v1800 = vunpack.c.l.b16 %v1667
        %v1801 = vunpack.c.l.b16 %v1668
        %v1802 = vunpack.c.l.b16 %v1669
        %v1803 = vunpack.c.l.b16 %v1670
        %v1804 = vunpack.c.l.b16 %v1671
        %v1805 = vunpack.c.l.b16 %v1672
        %v1806 = vunpack.c.l.b16 %v1673
        %v1807 = vunpack.c.l.b16 %v1674
        %v1808 = vunpack.c.l.b16 %v1675
        %v1809 = vunpack.c.l.b16 %v1676
        %v1810 = vunpack.c.l.b16 %v1677
        %v1811 = vunpack.c.l.b16 %v1678
        %v1812 = vunpack.c.l.b16 %v1679
        %v1813 = vunpack.c.l.b16 %v1680
        %v1814 = vunpack.c.l.b16 %v1681
        %v1815 = vunpack.c.l.b16 %v1682
        %v1816 = vunpack.c.l.b16 %v1683
        %v1817 = vunpack.c.l.b16 %v1684
        %v1818 = vunpack.c.l.b16 %v1685
        %v1819 = vunpack.c.l.b16 %v1686
        %v1820 = vpack.c.b16 %v1757, %v1756
        %v1821 = vpack.c.b16 %v1759, %v1758
        %v1822 = vpack.c.b16 %v1761, %v1760
        %v1823 = vpack.c.b16 %v1763, %v1762
        %v1824 = vpack.c.b16 %v1765, %v1764
        %v1825 = vpack.c.b16 %v1767, %v1766
        %v1826 = vpack.c.b16 %v1769, %v1768
        %v1827 = vpack.c.b16 %v1771, %v1770
        %v1828 = vpack.c.b16 %v1773, %v1772
        %v1829 = vpack.c.b16 %v1775, %v1774
        %v1830 = vpack.c.b16 %v1777, %v1776
        %v1831 = vpack.c.b16 %v1779, %v1778
        %v1832 = vpack.c.b16 %v1781, %v1780
        %v1833 = vpack.c.b16 %v1783, %v1782
        %v1834 = vpack.c.b16 %v1785, %v1784
        %v1835 = vpack.c.b16 %v1787, %v1786
        %v1836 = vpack.c.b16 %v1789, %v1788
        %v1837 = vpack.c.b16 %v1791, %v1790
        %v1838 = vpack.c.b16 %v1793, %v1792
        %v1839 = vpack.c.b16 %v1795, %v1794
        %v1840 = vpack.c.b16 %v1797, %v1796
        %v1841 = vpack.c.b16 %v1799, %v1798
        %v1842 = vpack.c.b16 %v1801, %v1800
        %v1843 = vpack.c.b16 %v1803, %v1802
        %v1844 = vpack.c.b16 %v1805, %v1804
        %v1845 = vpack.c.b16 %v1807, %v1806
        %v1846 = vpack.c.b16 %v1809, %v1808
        %v1847 = vpack.c.b16 %v1811, %v1810
        %v1848 = vpack.c.b16 %v1813, %v1812
        %v1849 = vpack.c.b16 %v1815, %v1814
        %v1850 = vpack.c.b16 %v1817, %v1816
        %v1851 = vpack.c.b16 %v1819, %v1818
        %1884 = vmatprep.subr.bf16.mxu0 0
        %1885 = vmatpush1.bf16.msra.mxu0 %v1820
        %1886 = vmatprep.subr.bf16.mxu0 0
        %1887 = vmatpush1.bf16.msra.mxu0 %v1821
        %1888 = vmatprep.subr.bf16.mxu0 0
        %1889 = vmatpush1.bf16.msra.mxu0 %v1822
        %1890 = vmatprep.subr.bf16.mxu0 0
        %1891 = vmatpush1.bf16.msra.mxu0 %v1823
        %1892 = vmatprep.subr.bf16.mxu0 0
        %1893 = vmatpush1.bf16.msra.mxu0 %v1824
        %1894 = vmatprep.subr.bf16.mxu0 0
        %1895 = vmatpush1.bf16.msra.mxu0 %v1825
        %1896 = vmatprep.subr.bf16.mxu0 0
        %1897 = vmatpush1.bf16.msra.mxu0 %v1826
        %1898 = vmatprep.subr.bf16.mxu0 0
        %1899 = vmatpush1.bf16.msra.mxu0 %v1827
        %1900 = vmatprep.subr.bf16.mxu0 0
        %1901 = vmatpush1.bf16.msra.mxu0 %v1828
        %1902 = vmatprep.subr.bf16.mxu0 0
        %1903 = vmatpush1.bf16.msra.mxu0 %v1829
        %1904 = vmatprep.subr.bf16.mxu0 0
        %1905 = vmatpush1.bf16.msra.mxu0 %v1830
        %1906 = vmatprep.subr.bf16.mxu0 0
        %1907 = vmatpush1.bf16.msra.mxu0 %v1831
        %1908 = vmatprep.subr.bf16.mxu0 0
        %1909 = vmatpush1.bf16.msra.mxu0 %v1832
        %1910 = vmatprep.subr.bf16.mxu0 0
        %1911 = vmatpush1.bf16.msra.mxu0 %v1833
        %1912 = vmatprep.subr.bf16.mxu0 0
        %1913 = vmatpush1.bf16.msra.mxu0 %v1834
        %1914 = vmatprep.subr.bf16.mxu0 0
        %1915 = vmatpush1.bf16.msra.mxu0 %v1835
        %1916 = vmatprep.mubr.bf16.mxu0 %v1616
        %1917 = vmatmul.mubr.bf16.gmra.mrb[0].mxu0 %v1615
        %v1918 = vpop.f32.mrb[0].mxu0
        %v1919 = vadd.f32 %v1691, %v1918
        %v1920 = vpop.f32.mrb[0].mxu0
        %v1921 = vpop.f32.mrb[0].mxu0
        %v1922 = vadd.f32 %v1691, %v1921
        %v1923 = vpop.f32.mrb[0].mxu0
        %1924 = vmatprep.mubr.bf16.mxu0 %v1620
        %1925 = vmatmul.mubr.bf16.gmra.mrb[0].mxu0 %v1619
        %v1926 = vpop.f32.mrb[0].mxu0
        %v1927 = vadd.f32 %v1691, %v1926
        %v1928 = vpop.f32.mrb[0].mxu0
        %v1929 = vpop.f32.mrb[0].mxu0
        %v1930 = vadd.f32 %v1691, %v1929
        %v1931 = vpop.f32.mrb[0].mxu0
        %1932 = vdwg.mxu0
        %1933 = vmatprep.subr.bf16.mxu0 0
        %1934 = vmatpush1.bf16.msra.mxu0 %v1836
        %1935 = vmatprep.subr.bf16.mxu0 0
        %1936 = vmatpush1.bf16.msra.mxu0 %v1837
        %1937 = vmatprep.subr.bf16.mxu0 0
        %1938 = vmatpush1.bf16.msra.mxu0 %v1838
        %1939 = vmatprep.subr.bf16.mxu0 0
        %1940 = vmatpush1.bf16.msra.mxu0 %v1839
        %1941 = vmatprep.subr.bf16.mxu0 0
        %1942 = vmatpush1.bf16.msra.mxu0 %v1840
        %1943 = vmatprep.subr.bf16.mxu0 0
        %1944 = vmatpush1.bf16.msra.mxu0 %v1841
        %1945 = vmatprep.subr.bf16.mxu0 0
        %1946 = vmatpush1.bf16.msra.mxu0 %v1842
        %1947 = vmatprep.subr.bf16.mxu0 0
        %1948 = vmatpush1.bf16.msra.mxu0 %v1843
        %1949 = vmatprep.subr.bf16.mxu0 0
        %1950 = vmatpush1.bf16.msra.mxu0 %v1844
        %1951 = vmatprep.subr.bf16.mxu0 0
        %1952 = vmatpush1.bf16.msra.mxu0 %v1845
        %1953 = vmatprep.subr.bf16.mxu0 0
        %1954 = vmatpush1.bf16.msra.mxu0 %v1846
        %1955 = vmatprep.subr.bf16.mxu0 0
        %1956 = vmatpush1.bf16.msra.mxu0 %v1847
        %1957 = vmatprep.subr.bf16.mxu0 0
        %1958 = vmatpush1.bf16.msra.mxu0 %v1848
        %1959 = vmatprep.subr.bf16.mxu0 0
        %1960 = vmatpush1.bf16.msra.mxu0 %v1849
        %1961 = vmatprep.subr.bf16.mxu0 0
        %1962 = vmatpush1.bf16.msra.mxu0 %v1850
        %1963 = vmatprep.subr.bf16.mxu0 0
        %1964 = vmatpush1.bf16.msra.mxu0 %v1851
        %1965 = vmatprep.mubr.bf16.mxu0 %v1618
        %1966 = vmatmul.mubr.bf16.gmra.mrb[0].mxu0 %v1617
        %v1967 = vpop.f32.mrb[0].mxu0
        %v1968 = vadd.f32 %v1919, %v1967
        %v1969 = vpop.f32.mrb[0].mxu0
        %v1970 = vpop.f32.mrb[0].mxu0
        %v1971 = vadd.f32 %v1922, %v1970
        %v1972 = vpop.f32.mrb[0].mxu0
        %1973 = vmatprep.mubr.bf16.mxu0 %v1622
        %1974 = vmatmul.mubr.bf16.gmra.mrb[0].mxu0 %v1621
        %v1975 = vpop.f32.mrb[0].mxu0
        %v1976 = vadd.f32 %v1927, %v1975
        %v1977 = vpop.f32.mrb[0].mxu0
        %v1978 = vpop.f32.mrb[0].mxu0
        %v1979 = vadd.f32 %v1930, %v1978
        %v1980 = vpop.f32.mrb[0].mxu0
        %1981 = vdwg.mxu0
        %vm1982 = vcmp.ge.f32.partialorder %v1968, 0.0
        %vm1983 = vcmp.ge.f32.partialorder %v1971, 0.0
        %vm1984 = vcmp.ge.f32.partialorder %v1976, 0.0
        %vm1985 = vcmp.ge.f32.partialorder %v1979, 0.0
        %v1986 = vmul.f32 %v1968, 0.01
        %v1987 = vmul.f32 %v1971, 0.01
        %v1988 = vmul.f32 %v1976, 0.01
        %v1989 = vmul.f32 %v1979, 0.01
        %v1990 = vsel %vm1982, %v1968, %v1986
        %v1991 = vsel %vm1983, %v1971, %v1987
        %v1992 = vsel %vm1984, %v1976, %v1988
        %v1993 = vsel %vm1985, %v1979, %v1989
        %1994 = vst [vmem:[#allocation2] sm:$0xff] 0.0
        %1995 = vst [vmem:[%s1101] sm:$0xff] %v1990
        %1996 = vst [vmem:[%s1101 + $0x8] sm:$0xff] %v1991
        %1997 = vst [vmem:[%s1101 + $0x10] sm:$0xff] %v1992
        %1998 = vst [vmem:[%s1101 + $0x18] sm:$0xff] %v1993
        %s1999 = scalar_lea.vmem [#allocation2], 40
        %2000 = vst [vmem:[%s1999] sm:$0xff] 0.0
        %v2001 = vld [vmem:[#allocation2] sm:$0xff]
        %v2002 = vld [vmem:[#allocation2 + $0x10] sm:$0xff]
        %v2003 = vld [vmem:[%s1101] sm:$0xff]
        %v2004 = vld [vmem:[%s1101 + $0x10] sm:$0xff]
        %v2005 = vld [vmem:[%s1136] sm:$0xff]
        %v2006 = vld [vmem:[%s1136 + $0x10] sm:$0xff]
        %v2007 = vld [vmem:[%s1145] sm:$0xff]
        %v2008 = vld [vmem:[%s1145 + $0x10] sm:$0xff]
        %v2009 = vpack.c.bf16 %v2002, %v2001
        %v2010 = vpack.c.bf16 %v2004, %v2003
        %v2011 = vpack.c.bf16 %v2006, %v2005
        %v2012 = vpack.c.bf16 %v2008, %v2007
        %v2013 = vld [vmem:[%s4] sm:$0xf]
        %v2014 = vld [vmem:[%s4 + $0x4] sm:$0xf]
        %v2015 = vld [vmem:[%s4 + $0x8] sm:$0xf]
        %v2016 = vld [vmem:[%s4 + $0xc] sm:$0xf]
        %v2017 = vld [vmem:[%s4 + $0x10] sm:$0xf]
        %v2018 = vld [vmem:[%s4 + $0x14] sm:$0xf]
        %v2019 = vld [vmem:[%s4 + $0x18] sm:$0xf]
        %v2020 = vld [vmem:[%s4 + $0x1c] sm:$0xf]
        %v2021 = vld [vmem:[%s4 + $0x20] sm:$0xf]
        %v2022 = vld [vmem:[%s4 + $0x24] sm:$0xf]
        %v2023 = vld [vmem:[%s4 + $0x28] sm:$0xf]
        %v2024 = vld [vmem:[%s4 + $0x2c] sm:$0xf]
        %v2025 = vld [vmem:[%s4 + $0x30] sm:$0xf]
        %v2026 = vld [vmem:[%s4 + $0x34] sm:$0xf]
        %v2027 = vld [vmem:[%s4 + $0x38] sm:$0xf]
        %v2028 = vld [vmem:[%s4 + $0x3c] sm:$0xf]
        %v2029 = vld [vmem:[%s4 + $0x40] sm:$0xf]
        %v2030 = vld [vmem:[%s4 + $0x44] sm:$0xf]
        %v2031 = vld [vmem:[%s4 + $0x48] sm:$0xf]
        %v2032 = vld [vmem:[%s4 + $0x4c] sm:$0xf]
        %v2033 = vld [vmem:[%s4 + $0x50] sm:$0xf]
        %v2034 = vld [vmem:[%s4 + $0x54] sm:$0xf]
        %v2035 = vld [vmem:[%s4 + $0x58] sm:$0xf]
        %v2036 = vld [vmem:[%s4 + $0x5c] sm:$0xf]
        %v2037 = vld [vmem:[%s4 + $0x60] sm:$0xf]
        %v2038 = vld [vmem:[%s4 + $0x64] sm:$0xf]
        %v2039 = vld [vmem:[%s4 + $0x68] sm:$0xf]
        %v2040 = vld [vmem:[%s4 + $0x6c] sm:$0xf]
        %v2041 = vld [vmem:[%s4 + $0x70] sm:$0xf]
        %v2042 = vld [vmem:[%s4 + $0x74] sm:$0xf]
        %v2043 = vld [vmem:[%s4 + $0x78] sm:$0xf]
        %v2044 = vld [vmem:[%s4 + $0x7c] sm:$0xf]
        %v2045 = vld [vmem:[%s4 + $0x80] sm:$0xf]
        %v2046 = vld [vmem:[%s4 + $0x84] sm:$0xf]
        %v2047 = vld [vmem:[%s4 + $0x88] sm:$0xf]
        %v2048 = vld [vmem:[%s4 + $0x8c] sm:$0xf]
        %v2049 = vld [vmem:[%s4 + $0x90] sm:$0xf]
        %v2050 = vld [vmem:[%s4 + $0x94] sm:$0xf]
        %v2051 = vld [vmem:[%s4 + $0x98] sm:$0xf]
        %v2052 = vld [vmem:[%s4 + $0x9c] sm:$0xf]
        %v2053 = vld [vmem:[%s4 + $0xa0] sm:$0xf]
        %v2054 = vld [vmem:[%s4 + $0xa4] sm:$0xf]
        %v2055 = vld [vmem:[%s4 + $0xa8] sm:$0xf]
        %v2056 = vld [vmem:[%s4 + $0xac] sm:$0xf]
        %v2057 = vld [vmem:[%s4 + $0xb0] sm:$0xf]
        %v2058 = vld [vmem:[%s4 + $0xb4] sm:$0xf]
        %v2059 = vld [vmem:[%s4 + $0xb8] sm:$0xf]
        %v2060 = vld [vmem:[%s4 + $0xbc] sm:$0xf]
        %v2061 = vld [vmem:[%s4 + $0xc0] sm:$0xf]
        %v2062 = vld [vmem:[%s4 + $0xc4] sm:$0xf]
        %v2063 = vld [vmem:[%s4 + $0xc8] sm:$0xf]
        %v2064 = vld [vmem:[%s4 + $0xcc] sm:$0xf]
        %v2065 = vld [vmem:[%s4 + $0xd0] sm:$0xf]
        %v2066 = vld [vmem:[%s4 + $0xd4] sm:$0xf]
        %v2067 = vld [vmem:[%s4 + $0xd8] sm:$0xf]
        %v2068 = vld [vmem:[%s4 + $0xdc] sm:$0xf]
        %v2069 = vld [vmem:[%s4 + $0xe0] sm:$0xf]
        %v2070 = vld [vmem:[%s4 + $0xe4] sm:$0xf]
        %v2071 = vld [vmem:[%s4 + $0xe8] sm:$0xf]
        %v2072 = vld [vmem:[%s4 + $0xec] sm:$0xf]
        %v2073 = vld [vmem:[%s4 + $0xf0] sm:$0xf]
        %v2074 = vld [vmem:[%s4 + $0xf4] sm:$0xf]
        %v2075 = vld [vmem:[%s4 + $0xf8] sm:$0xf]
        %v2076 = vld [vmem:[%s4 + $0xfc] sm:$0xf]
        %v2077 = vld [vmem:[%s6 + $0x3] sm:$0x1]
        %v2078 = vlaneseq
        %v2079 = vshrl.u32 %v2078, 7
        %v2080 = vsub.s32 0, %v2079
        %v2081 = vrot.slane %v2077, %v2080
        %v2146 = vunpack.c.l.b16 %v2013
        %v2147 = vunpack.c.l.b16 %v2014
        %v2148 = vunpack.c.l.b16 %v2015
        %v2149 = vunpack.c.l.b16 %v2016
        %v2150 = vunpack.c.l.b16 %v2017
        %v2151 = vunpack.c.l.b16 %v2018
        %v2152 = vunpack.c.l.b16 %v2019
        %v2153 = vunpack.c.l.b16 %v2020
        %v2154 = vunpack.c.l.b16 %v2021
        %v2155 = vunpack.c.l.b16 %v2022
        %v2156 = vunpack.c.l.b16 %v2023
        %v2157 = vunpack.c.l.b16 %v2024
        %v2158 = vunpack.c.l.b16 %v2025
        %v2159 = vunpack.c.l.b16 %v2026
        %v2160 = vunpack.c.l.b16 %v2027
        %v2161 = vunpack.c.l.b16 %v2028
        %v2162 = vunpack.c.l.b16 %v2029
        %v2163 = vunpack.c.l.b16 %v2030
        %v2164 = vunpack.c.l.b16 %v2031
        %v2165 = vunpack.c.l.b16 %v2032
        %v2166 = vunpack.c.l.b16 %v2033
        %v2167 = vunpack.c.l.b16 %v2034
        %v2168 = vunpack.c.l.b16 %v2035
        %v2169 = vunpack.c.l.b16 %v2036
        %v2170 = vunpack.c.l.b16 %v2037
        %v2171 = vunpack.c.l.b16 %v2038
        %v2172 = vunpack.c.l.b16 %v2039
        %v2173 = vunpack.c.l.b16 %v2040
        %v2174 = vunpack.c.l.b16 %v2041
        %v2175 = vunpack.c.l.b16 %v2042
        %v2176 = vunpack.c.l.b16 %v2043
        %v2177 = vunpack.c.l.b16 %v2044
        %v2178 = vunpack.c.l.b16 %v2045
        %v2179 = vunpack.c.l.b16 %v2046
        %v2180 = vunpack.c.l.b16 %v2047
        %v2181 = vunpack.c.l.b16 %v2048
        %v2182 = vunpack.c.l.b16 %v2049
        %v2183 = vunpack.c.l.b16 %v2050
        %v2184 = vunpack.c.l.b16 %v2051
        %v2185 = vunpack.c.l.b16 %v2052
        %v2186 = vunpack.c.l.b16 %v2053
        %v2187 = vunpack.c.l.b16 %v2054
        %v2188 = vunpack.c.l.b16 %v2055
        %v2189 = vunpack.c.l.b16 %v2056
        %v2190 = vunpack.c.l.b16 %v2057
        %v2191 = vunpack.c.l.b16 %v2058
        %v2192 = vunpack.c.l.b16 %v2059
        %v2193 = vunpack.c.l.b16 %v2060
        %v2194 = vunpack.c.l.b16 %v2061
        %v2195 = vunpack.c.l.b16 %v2062
        %v2196 = vunpack.c.l.b16 %v2063
        %v2197 = vunpack.c.l.b16 %v2064
        %v2198 = vunpack.c.l.b16 %v2065
        %v2199 = vunpack.c.l.b16 %v2066
        %v2200 = vunpack.c.l.b16 %v2067
        %v2201 = vunpack.c.l.b16 %v2068
        %v2202 = vunpack.c.l.b16 %v2069
        %v2203 = vunpack.c.l.b16 %v2070
        %v2204 = vunpack.c.l.b16 %v2071
        %v2205 = vunpack.c.l.b16 %v2072
        %v2206 = vunpack.c.l.b16 %v2073
        %v2207 = vunpack.c.l.b16 %v2074
        %v2208 = vunpack.c.l.b16 %v2075
        %v2209 = vunpack.c.l.b16 %v2076
        %v2210 = vpack.c.b16 %v2147, %v2146
        %v2211 = vpack.c.b16 %v2149, %v2148
        %v2212 = vpack.c.b16 %v2151, %v2150
        %v2213 = vpack.c.b16 %v2153, %v2152
        %v2214 = vpack.c.b16 %v2155, %v2154
        %v2215 = vpack.c.b16 %v2157, %v2156
        %v2216 = vpack.c.b16 %v2159, %v2158
        %v2217 = vpack.c.b16 %v2161, %v2160
        %v2218 = vpack.c.b16 %v2163, %v2162
        %v2219 = vpack.c.b16 %v2165, %v2164
        %v2220 = vpack.c.b16 %v2167, %v2166
        %v2221 = vpack.c.b16 %v2169, %v2168
        %v2222 = vpack.c.b16 %v2171, %v2170
        %v2223 = vpack.c.b16 %v2173, %v2172
        %v2224 = vpack.c.b16 %v2175, %v2174
        %v2225 = vpack.c.b16 %v2177, %v2176
        %v2226 = vpack.c.b16 %v2179, %v2178
        %v2227 = vpack.c.b16 %v2181, %v2180
        %v2228 = vpack.c.b16 %v2183, %v2182
        %v2229 = vpack.c.b16 %v2185, %v2184
        %v2230 = vpack.c.b16 %v2187, %v2186
        %v2231 = vpack.c.b16 %v2189, %v2188
        %v2232 = vpack.c.b16 %v2191, %v2190
        %v2233 = vpack.c.b16 %v2193, %v2192
        %v2234 = vpack.c.b16 %v2195, %v2194
        %v2235 = vpack.c.b16 %v2197, %v2196
        %v2236 = vpack.c.b16 %v2199, %v2198
        %v2237 = vpack.c.b16 %v2201, %v2200
        %v2238 = vpack.c.b16 %v2203, %v2202
        %v2239 = vpack.c.b16 %v2205, %v2204
        %v2240 = vpack.c.b16 %v2207, %v2206
        %v2241 = vpack.c.b16 %v2209, %v2208
        %2274 = vmatprep.subr.bf16.mxu0 0
        %2275 = vmatpush1.bf16.msra.mxu0 %v2210
        %2276 = vmatprep.subr.bf16.mxu0 0
        %2277 = vmatpush1.bf16.msra.mxu0 %v2211
        %2278 = vmatprep.subr.bf16.mxu0 0
        %2279 = vmatpush1.bf16.msra.mxu0 %v2212
        %2280 = vmatprep.subr.bf16.mxu0 0
        %2281 = vmatpush1.bf16.msra.mxu0 %v2213
        %2282 = vmatprep.subr.bf16.mxu0 0
        %2283 = vmatpush1.bf16.msra.mxu0 %v2214
        %2284 = vmatprep.subr.bf16.mxu0 0
        %2285 = vmatpush1.bf16.msra.mxu0 %v2215
        %2286 = vmatprep.subr.bf16.mxu0 0
        %2287 = vmatpush1.bf16.msra.mxu0 %v2216
        %2288 = vmatprep.subr.bf16.mxu0 0
        %2289 = vmatpush1.bf16.msra.mxu0 %v2217
        %2290 = vmatprep.subr.bf16.mxu0 0
        %2291 = vmatpush1.bf16.msra.mxu0 %v2218
        %2292 = vmatprep.subr.bf16.mxu0 0
        %2293 = vmatpush1.bf16.msra.mxu0 %v2219
        %2294 = vmatprep.subr.bf16.mxu0 0
        %2295 = vmatpush1.bf16.msra.mxu0 %v2220
        %2296 = vmatprep.subr.bf16.mxu0 0
        %2297 = vmatpush1.bf16.msra.mxu0 %v2221
        %2298 = vmatprep.subr.bf16.mxu0 0
        %2299 = vmatpush1.bf16.msra.mxu0 %v2222
        %2300 = vmatprep.subr.bf16.mxu0 0
        %2301 = vmatpush1.bf16.msra.mxu0 %v2223
        %2302 = vmatprep.subr.bf16.mxu0 0
        %2303 = vmatpush1.bf16.msra.mxu0 %v2224
        %2304 = vmatprep.subr.bf16.mxu0 0
        %2305 = vmatpush1.bf16.msra.mxu0 %v2225
        %2306 = vmatprep.mubr.bf16.mxu0 %v2010
        %2307 = vmatmul.mubr.bf16.gmra.mrb[0].mxu0 %v2009
        %v2308 = vpop.f32.mrb[0].mxu0
        %v2309 = vadd.f32 %v2081, %v2308
        %v2310 = vpop.f32.mrb[0].mxu0
        %v2311 = vpop.f32.mrb[0].mxu0
        %v2312 = vadd.f32 %v2081, %v2311
        %v2313 = vpop.f32.mrb[0].mxu0
        %2314 = vdwg.mxu0
        %2315 = vmatprep.subr.bf16.mxu0 0
        %2316 = vmatpush1.bf16.msra.mxu0 %v2226
        %2317 = vmatprep.subr.bf16.mxu0 0
        %2318 = vmatpush1.bf16.msra.mxu0 %v2227
        %2319 = vmatprep.subr.bf16.mxu0 0
        %2320 = vmatpush1.bf16.msra.mxu0 %v2228
        %2321 = vmatprep.subr.bf16.mxu0 0
        %2322 = vmatpush1.bf16.msra.mxu0 %v2229
        %2323 = vmatprep.subr.bf16.mxu0 0
        %2324 = vmatpush1.bf16.msra.mxu0 %v2230
        %2325 = vmatprep.subr.bf16.mxu0 0
        %2326 = vmatpush1.bf16.msra.mxu0 %v2231
        %2327 = vmatprep.subr.bf16.mxu0 0
        %2328 = vmatpush1.bf16.msra.mxu0 %v2232
        %2329 = vmatprep.subr.bf16.mxu0 0
        %2330 = vmatpush1.bf16.msra.mxu0 %v2233
        %2331 = vmatprep.subr.bf16.mxu0 0
        %2332 = vmatpush1.bf16.msra.mxu0 %v2234
        %2333 = vmatprep.subr.bf16.mxu0 0
        %2334 = vmatpush1.bf16.msra.mxu0 %v2235
        %2335 = vmatprep.subr.bf16.mxu0 0
        %2336 = vmatpush1.bf16.msra.mxu0 %v2236
        %2337 = vmatprep.subr.bf16.mxu0 0
        %2338 = vmatpush1.bf16.msra.mxu0 %v2237
        %2339 = vmatprep.subr.bf16.mxu0 0
        %2340 = vmatpush1.bf16.msra.mxu0 %v2238
        %2341 = vmatprep.subr.bf16.mxu0 0
        %2342 = vmatpush1.bf16.msra.mxu0 %v2239
        %2343 = vmatprep.subr.bf16.mxu0 0
        %2344 = vmatpush1.bf16.msra.mxu0 %v2240
        %2345 = vmatprep.subr.bf16.mxu0 0
        %2346 = vmatpush1.bf16.msra.mxu0 %v2241
        %2347 = vmatprep.mubr.bf16.mxu0 %v2012
        %2348 = vmatmul.mubr.bf16.gmra.mrb[0].mxu0 %v2011
        %v2349 = vpop.f32.mrb[0].mxu0
        %v2350 = vadd.f32 %v2309, %v2349
        %v2351 = vpop.f32.mrb[0].mxu0
        %v2352 = vpop.f32.mrb[0].mxu0
        %v2353 = vadd.f32 %v2312, %v2352
        %v2354 = vpop.f32.mrb[0].mxu0
        %2355 = vdwg.mxu0
        %vm2356 = vcmp.ge.f32.partialorder %v2350, 0.0
        %vm2357 = vcmp.ge.f32.partialorder %v2353, 0.0
        %v2358 = vmul.f32 %v2350, 0.01
        %v2359 = vmul.f32 %v2353, 0.01
        %v2360 = vsel %vm2356, %v2350, %v2358
        %v2361 = vsel %vm2357, %v2353, %v2359
        %2362 = vst [vmem:[#allocation3] sm:$0xff] 0.0
        %2363 = vst [vmem:[%s1586] sm:$0xff] %v2360
        %2364 = vst [vmem:[%s1586 + $0x8] sm:$0xff] %v2361
        %2365 = vst [vmem:[%s1610] sm:$0xff] 0.0
        %v2366 = vld [vmem:[#allocation3] sm:$0xff]
        %v2367 = vld [vmem:[%s1586] sm:$0xff]
        %v2368 = vld [vmem:[%s1605] sm:$0xff]
        %v2369 = vld [vmem:[%s1610] sm:$0xff]
        %v2370 = vpack.c.bf16 %v2366, %v2366
        %v2371 = vpack.c.bf16 %v2367, %v2367
        %v2372 = vpack.c.bf16 %v2368, %v2368
        %v2373 = vpack.c.bf16 %v2369, %v2369
        %v2374 = vld [vmem:[%s5] sm:$0xf]
        %v2375 = vld [vmem:[%s5 + $0x4] sm:$0xf]
        %v2376 = vld [vmem:[%s5 + $0x8] sm:$0xf]
        %v2377 = vld [vmem:[%s5 + $0xc] sm:$0xf]
        %v2378 = vld [vmem:[%s5 + $0x10] sm:$0xf]
        %v2379 = vld [vmem:[%s5 + $0x14] sm:$0xf]
        %v2380 = vld [vmem:[%s5 + $0x18] sm:$0xf]
        %v2381 = vld [vmem:[%s5 + $0x1c] sm:$0xf]
        %v2382 = vld [vmem:[%s5 + $0x20] sm:$0xf]
        %v2383 = vld [vmem:[%s5 + $0x24] sm:$0xf]
        %v2384 = vld [vmem:[%s5 + $0x28] sm:$0xf]
        %v2385 = vld [vmem:[%s5 + $0x2c] sm:$0xf]
        %v2386 = vld [vmem:[%s5 + $0x30] sm:$0xf]
        %v2387 = vld [vmem:[%s5 + $0x34] sm:$0xf]
        %v2388 = vld [vmem:[%s5 + $0x38] sm:$0xf]
        %v2389 = vld [vmem:[%s5 + $0x3c] sm:$0xf]
        %v2390 = vld [vmem:[%s5 + $0x40] sm:$0xf]
        %v2391 = vld [vmem:[%s5 + $0x44] sm:$0xf]
        %v2392 = vld [vmem:[%s5 + $0x48] sm:$0xf]
        %v2393 = vld [vmem:[%s5 + $0x4c] sm:$0xf]
        %v2394 = vld [vmem:[%s5 + $0x50] sm:$0xf]
        %v2395 = vld [vmem:[%s5 + $0x54] sm:$0xf]
        %v2396 = vld [vmem:[%s5 + $0x58] sm:$0xf]
        %v2397 = vld [vmem:[%s5 + $0x5c] sm:$0xf]
        %v2398 = vld [vmem:[%s5 + $0x60] sm:$0xf]
        %v2399 = vld [vmem:[%s5 + $0x64] sm:$0xf]
        %v2400 = vld [vmem:[%s5 + $0x68] sm:$0xf]
        %v2401 = vld [vmem:[%s5 + $0x6c] sm:$0xf]
        %v2402 = vld [vmem:[%s5 + $0x70] sm:$0xf]
        %v2403 = vld [vmem:[%s5 + $0x74] sm:$0xf]
        %v2404 = vld [vmem:[%s5 + $0x78] sm:$0xf]
        %v2405 = vld [vmem:[%s5 + $0x7c] sm:$0xf]
        %v2406 = vld [vmem:[%s5 + $0x80] sm:$0xf]
        %v2407 = vld [vmem:[%s5 + $0x84] sm:$0xf]
        %v2408 = vld [vmem:[%s5 + $0x88] sm:$0xf]
        %v2409 = vld [vmem:[%s5 + $0x8c] sm:$0xf]
        %v2410 = vld [vmem:[%s5 + $0x90] sm:$0xf]
        %v2411 = vld [vmem:[%s5 + $0x94] sm:$0xf]
        %v2412 = vld [vmem:[%s5 + $0x98] sm:$0xf]
        %v2413 = vld [vmem:[%s5 + $0x9c] sm:$0xf]
        %v2414 = vld [vmem:[%s5 + $0xa0] sm:$0xf]
        %v2415 = vld [vmem:[%s5 + $0xa4] sm:$0xf]
        %v2416 = vld [vmem:[%s5 + $0xa8] sm:$0xf]
        %v2417 = vld [vmem:[%s5 + $0xac] sm:$0xf]
        %v2418 = vld [vmem:[%s5 + $0xb0] sm:$0xf]
        %v2419 = vld [vmem:[%s5 + $0xb4] sm:$0xf]
        %v2420 = vld [vmem:[%s5 + $0xb8] sm:$0xf]
        %v2421 = vld [vmem:[%s5 + $0xbc] sm:$0xf]
        %v2422 = vld [vmem:[%s5 + $0xc0] sm:$0xf]
        %v2423 = vld [vmem:[%s5 + $0xc4] sm:$0xf]
        %v2424 = vld [vmem:[%s5 + $0xc8] sm:$0xf]
        %v2425 = vld [vmem:[%s5 + $0xcc] sm:$0xf]
        %v2426 = vld [vmem:[%s5 + $0xd0] sm:$0xf]
        %v2427 = vld [vmem:[%s5 + $0xd4] sm:$0xf]
        %v2428 = vld [vmem:[%s5 + $0xd8] sm:$0xf]
        %v2429 = vld [vmem:[%s5 + $0xdc] sm:$0xf]
        %v2430 = vld [vmem:[%s5 + $0xe0] sm:$0xf]
        %v2431 = vld [vmem:[%s5 + $0xe4] sm:$0xf]
        %v2432 = vld [vmem:[%s5 + $0xe8] sm:$0xf]
        %v2433 = vld [vmem:[%s5 + $0xec] sm:$0xf]
        %v2434 = vld [vmem:[%s5 + $0xf0] sm:$0xf]
        %v2435 = vld [vmem:[%s5 + $0xf4] sm:$0xf]
        %v2436 = vld [vmem:[%s5 + $0xf8] sm:$0xf]
        %v2437 = vld [vmem:[%s5 + $0xfc] sm:$0xf]
        %v2438 = vld [vmem:[%s6 + $0x4] sm:$0x1]
        %v2439 = vlaneseq
        %v2440 = vshrl.u32 %v2439, 7
        %v2441 = vsub.s32 0, %v2440
        %v2442 = vrot.slane %v2438, %v2441
        %v2507 = vunpack.c.l.b16 %v2374
        %v2508 = vunpack.c.l.b16 %v2375
        %v2509 = vunpack.c.l.b16 %v2376
        %v2510 = vunpack.c.l.b16 %v2377
        %v2511 = vunpack.c.l.b16 %v2378
        %v2512 = vunpack.c.l.b16 %v2379
        %v2513 = vunpack.c.l.b16 %v2380
        %v2514 = vunpack.c.l.b16 %v2381
        %v2515 = vunpack.c.l.b16 %v2382
        %v2516 = vunpack.c.l.b16 %v2383
        %v2517 = vunpack.c.l.b16 %v2384
        %v2518 = vunpack.c.l.b16 %v2385
        %v2519 = vunpack.c.l.b16 %v2386
        %v2520 = vunpack.c.l.b16 %v2387
        %v2521 = vunpack.c.l.b16 %v2388
        %v2522 = vunpack.c.l.b16 %v2389
        %v2523 = vunpack.c.l.b16 %v2390
        %v2524 = vunpack.c.l.b16 %v2391
        %v2525 = vunpack.c.l.b16 %v2392
        %v2526 = vunpack.c.l.b16 %v2393
        %v2527 = vunpack.c.l.b16 %v2394
        %v2528 = vunpack.c.l.b16 %v2395
        %v2529 = vunpack.c.l.b16 %v2396
        %v2530 = vunpack.c.l.b16 %v2397
        %v2531 = vunpack.c.l.b16 %v2398
        %v2532 = vunpack.c.l.b16 %v2399
        %v2533 = vunpack.c.l.b16 %v2400
        %v2534 = vunpack.c.l.b16 %v2401
        %v2535 = vunpack.c.l.b16 %v2402
        %v2536 = vunpack.c.l.b16 %v2403
        %v2537 = vunpack.c.l.b16 %v2404
        %v2538 = vunpack.c.l.b16 %v2405
        %v2539 = vunpack.c.l.b16 %v2406
        %v2540 = vunpack.c.l.b16 %v2407
        %v2541 = vunpack.c.l.b16 %v2408
        %v2542 = vunpack.c.l.b16 %v2409
        %v2543 = vunpack.c.l.b16 %v2410
        %v2544 = vunpack.c.l.b16 %v2411
        %v2545 = vunpack.c.l.b16 %v2412
        %v2546 = vunpack.c.l.b16 %v2413
        %v2547 = vunpack.c.l.b16 %v2414
        %v2548 = vunpack.c.l.b16 %v2415
        %v2549 = vunpack.c.l.b16 %v2416
        %v2550 = vunpack.c.l.b16 %v2417
        %v2551 = vunpack.c.l.b16 %v2418
        %v2552 = vunpack.c.l.b16 %v2419
        %v2553 = vunpack.c.l.b16 %v2420
        %v2554 = vunpack.c.l.b16 %v2421
        %v2555 = vunpack.c.l.b16 %v2422
        %v2556 = vunpack.c.l.b16 %v2423
        %v2557 = vunpack.c.l.b16 %v2424
        %v2558 = vunpack.c.l.b16 %v2425
        %v2559 = vunpack.c.l.b16 %v2426
        %v2560 = vunpack.c.l.b16 %v2427
        %v2561 = vunpack.c.l.b16 %v2428
        %v2562 = vunpack.c.l.b16 %v2429
        %v2563 = vunpack.c.l.b16 %v2430
        %v2564 = vunpack.c.l.b16 %v2431
        %v2565 = vunpack.c.l.b16 %v2432
        %v2566 = vunpack.c.l.b16 %v2433
        %v2567 = vunpack.c.l.b16 %v2434
        %v2568 = vunpack.c.l.b16 %v2435
        %v2569 = vunpack.c.l.b16 %v2436
        %v2570 = vunpack.c.l.b16 %v2437
        %v2571 = vpack.c.b16 %v2508, %v2507
        %v2572 = vpack.c.b16 %v2510, %v2509
        %v2573 = vpack.c.b16 %v2512, %v2511
        %v2574 = vpack.c.b16 %v2514, %v2513
        %v2575 = vpack.c.b16 %v2516, %v2515
        %v2576 = vpack.c.b16 %v2518, %v2517
        %v2577 = vpack.c.b16 %v2520, %v2519
        %v2578 = vpack.c.b16 %v2522, %v2521
        %v2579 = vpack.c.b16 %v2524, %v2523
        %v2580 = vpack.c.b16 %v2526, %v2525
        %v2581 = vpack.c.b16 %v2528, %v2527
        %v2582 = vpack.c.b16 %v2530, %v2529
        %v2583 = vpack.c.b16 %v2532, %v2531
        %v2584 = vpack.c.b16 %v2534, %v2533
        %v2585 = vpack.c.b16 %v2536, %v2535
        %v2586 = vpack.c.b16 %v2538, %v2537
        %v2587 = vpack.c.b16 %v2540, %v2539
        %v2588 = vpack.c.b16 %v2542, %v2541
        %v2589 = vpack.c.b16 %v2544, %v2543
        %v2590 = vpack.c.b16 %v2546, %v2545
        %v2591 = vpack.c.b16 %v2548, %v2547
        %v2592 = vpack.c.b16 %v2550, %v2549
        %v2593 = vpack.c.b16 %v2552, %v2551
        %v2594 = vpack.c.b16 %v2554, %v2553
        %v2595 = vpack.c.b16 %v2556, %v2555
        %v2596 = vpack.c.b16 %v2558, %v2557
        %v2597 = vpack.c.b16 %v2560, %v2559
        %v2598 = vpack.c.b16 %v2562, %v2561
        %v2599 = vpack.c.b16 %v2564, %v2563
        %v2600 = vpack.c.b16 %v2566, %v2565
        %v2601 = vpack.c.b16 %v2568, %v2567
        %v2602 = vpack.c.b16 %v2570, %v2569
        %2635 = vmatprep.subr.bf16.mxu0 0
        %2636 = vmatpush1.bf16.msra.mxu0 %v2571
        %2637 = vmatprep.subr.bf16.mxu0 0
        %2638 = vmatpush1.bf16.msra.mxu0 %v2572
        %2639 = vmatprep.subr.bf16.mxu0 0
        %2640 = vmatpush1.bf16.msra.mxu0 %v2573
        %2641 = vmatprep.subr.bf16.mxu0 0
        %2642 = vmatpush1.bf16.msra.mxu0 %v2574
        %2643 = vmatprep.subr.bf16.mxu0 0
        %2644 = vmatpush1.bf16.msra.mxu0 %v2575
        %2645 = vmatprep.subr.bf16.mxu0 0
        %2646 = vmatpush1.bf16.msra.mxu0 %v2576
        %2647 = vmatprep.subr.bf16.mxu0 0
        %2648 = vmatpush1.bf16.msra.mxu0 %v2577
        %2649 = vmatprep.subr.bf16.mxu0 0
        %2650 = vmatpush1.bf16.msra.mxu0 %v2578
        %2651 = vmatprep.subr.bf16.mxu0 0
        %2652 = vmatpush1.bf16.msra.mxu0 %v2579
        %2653 = vmatprep.subr.bf16.mxu0 0
        %2654 = vmatpush1.bf16.msra.mxu0 %v2580
        %2655 = vmatprep.subr.bf16.mxu0 0
        %2656 = vmatpush1.bf16.msra.mxu0 %v2581
        %2657 = vmatprep.subr.bf16.mxu0 0
        %2658 = vmatpush1.bf16.msra.mxu0 %v2582
        %2659 = vmatprep.subr.bf16.mxu0 0
        %2660 = vmatpush1.bf16.msra.mxu0 %v2583
        %2661 = vmatprep.subr.bf16.mxu0 0
        %2662 = vmatpush1.bf16.msra.mxu0 %v2584
        %2663 = vmatprep.subr.bf16.mxu0 0
        %2664 = vmatpush1.bf16.msra.mxu0 %v2585
        %2665 = vmatprep.subr.bf16.mxu0 0
        %2666 = vmatpush1.bf16.msra.mxu0 %v2586
        %2667 = vmatprep.mubr.bf16.mxu0 %v2371
        %2668 = vmatmul.mubr.bf16.gmra.mrb[0].mxu0 %v2370
        %v2669 = vpop.f32.mrb[0].mxu0
        %v2670 = vadd.f32 %v2442, %v2669
        %v2671 = vpop.f32.mrb[0].mxu0
        %v2672 = vpop.f32.mrb[0].mxu0
        %v2673 = vpop.f32.mrb[0].mxu0
        %2674 = vdwg.mxu0
        %2675 = vmatprep.subr.bf16.mxu0 0
        %2676 = vmatpush1.bf16.msra.mxu0 %v2587
        %2677 = vmatprep.subr.bf16.mxu0 0
        %2678 = vmatpush1.bf16.msra.mxu0 %v2588
        %2679 = vmatprep.subr.bf16.mxu0 0
        %2680 = vmatpush1.bf16.msra.mxu0 %v2589
        %2681 = vmatprep.subr.bf16.mxu0 0
        %2682 = vmatpush1.bf16.msra.mxu0 %v2590
        %2683 = vmatprep.subr.bf16.mxu0 0
        %2684 = vmatpush1.bf16.msra.mxu0 %v2591
        %2685 = vmatprep.subr.bf16.mxu0 0
        %2686 = vmatpush1.bf16.msra.mxu0 %v2592
        %2687 = vmatprep.subr.bf16.mxu0 0
        %2688 = vmatpush1.bf16.msra.mxu0 %v2593
        %2689 = vmatprep.subr.bf16.mxu0 0
        %2690 = vmatpush1.bf16.msra.mxu0 %v2594
        %2691 = vmatprep.subr.bf16.mxu0 0
        %2692 = vmatpush1.bf16.msra.mxu0 %v2595
        %2693 = vmatprep.subr.bf16.mxu0 0
        %2694 = vmatpush1.bf16.msra.mxu0 %v2596
        %2695 = vmatprep.subr.bf16.mxu0 0
        %2696 = vmatpush1.bf16.msra.mxu0 %v2597
        %2697 = vmatprep.subr.bf16.mxu0 0
        %2698 = vmatpush1.bf16.msra.mxu0 %v2598
        %2699 = vmatprep.subr.bf16.mxu0 0
        %2700 = vmatpush1.bf16.msra.mxu0 %v2599
        %2701 = vmatprep.subr.bf16.mxu0 0
        %2702 = vmatpush1.bf16.msra.mxu0 %v2600
        %2703 = vmatprep.subr.bf16.mxu0 0
        %2704 = vmatpush1.bf16.msra.mxu0 %v2601
        %2705 = vmatprep.subr.bf16.mxu0 0
        %2706 = vmatpush1.bf16.msra.mxu0 %v2602
        %2707 = vmatprep.mubr.bf16.mxu0 %v2373
        %2708 = vmatmul.mubr.bf16.gmra.mrb[0].mxu0 %v2372
        %v2709 = vpop.f32.mrb[0].mxu0
        %v2710 = vadd.f32 %v2670, %v2709
        %v2711 = vpop.f32.mrb[0].mxu0
        %v2712 = vpop.f32.mrb[0].mxu0
        %v2713 = vpop.f32.mrb[0].mxu0
        %2714 = vdwg.mxu0
        %vm2715 = vcmp.ge.f32.partialorder %v2710, 0.0
        %v2716 = vmul.f32 %v2710, 0.01
        %v2717 = vsel %vm2715, %v2710, %v2716
        %v2718 = vpack.c.bf16 %v2717, %v2717
        %v2719 = vld [vmem:[%s7] sm:$0xf]
        %v2720 = vld [vmem:[%s7 + $0x4] sm:$0xf]
        %v2721 = vld [vmem:[%s7 + $0x8] sm:$0xf]
        %v2722 = vld [vmem:[%s7 + $0xc] sm:$0xf]
        %v2723 = vld [vmem:[%s7 + $0x10] sm:$0xf]
        %v2724 = vld [vmem:[%s7 + $0x14] sm:$0xf]
        %v2725 = vld [vmem:[%s7 + $0x18] sm:$0xf]
        %v2726 = vld [vmem:[%s7 + $0x1c] sm:$0xf]
        %v2727 = vld [vmem:[%s7 + $0x20] sm:$0xf]
        %v2728 = vld [vmem:[%s7 + $0x24] sm:$0xf]
        %v2729 = vld [vmem:[%s7 + $0x28] sm:$0xf]
        %v2730 = vld [vmem:[%s7 + $0x2c] sm:$0xf]
        %v2731 = vld [vmem:[%s7 + $0x30] sm:$0xf]
        %v2732 = vld [vmem:[%s7 + $0x34] sm:$0xf]
        %v2733 = vld [vmem:[%s7 + $0x38] sm:$0xf]
        %v2734 = vld [vmem:[%s7 + $0x3c] sm:$0xf]
        %v2735 = vld [vmem:[%s8] sm:$0x1]
        %v2737 = vlaneseq
        %v2738 = vshrl.u32 %v2737, 7
        %v2739 = vsub.s32 0, %v2738
        %v2740 = vrot.slane %v2735, %v2739
        %v2758 = vunpack.c.l.b16 %v2719
        %v2759 = vunpack.c.l.b16 %v2720
        %v2760 = vunpack.c.l.b16 %v2721
        %v2761 = vunpack.c.l.b16 %v2722
        %v2762 = vunpack.c.l.b16 %v2723
        %v2763 = vunpack.c.l.b16 %v2724
        %v2764 = vunpack.c.l.b16 %v2725
        %v2765 = vunpack.c.l.b16 %v2726
        %v2766 = vunpack.c.l.b16 %v2727
        %v2767 = vunpack.c.l.b16 %v2728
        %v2768 = vunpack.c.l.b16 %v2729
        %v2769 = vunpack.c.l.b16 %v2730
        %v2770 = vunpack.c.l.b16 %v2731
        %v2771 = vunpack.c.l.b16 %v2732
        %v2772 = vunpack.c.l.b16 %v2733
        %v2773 = vunpack.c.l.b16 %v2734
        %v2774 = vpack.c.b16 %v2759, %v2758
        %v2775 = vpack.c.b16 %v2761, %v2760
        %v2776 = vpack.c.b16 %v2763, %v2762
        %v2777 = vpack.c.b16 %v2765, %v2764
        %v2778 = vpack.c.b16 %v2767, %v2766
        %v2779 = vpack.c.b16 %v2769, %v2768
        %v2780 = vpack.c.b16 %v2771, %v2770
        %v2781 = vpack.c.b16 %v2773, %v2772
        %2790 = vmatprep.subr.bf16.mxu0 0
        %2791 = vmatpush1.bf16.msra.mxu0 %v2774
        %2792 = vmatprep.subr.bf16.mxu0 0
        %2793 = vmatpush1.bf16.msra.mxu0 %v2775
        %2794 = vmatprep.subr.bf16.mxu0 0
        %2795 = vmatpush1.bf16.msra.mxu0 %v2776
        %2796 = vmatprep.subr.bf16.mxu0 0
        %2797 = vmatpush1.bf16.msra.mxu0 %v2777
        %2798 = vmatprep.subr.bf16.mxu0 0
        %2799 = vmatpush1.bf16.msra.mxu0 %v2778
        %2800 = vmatprep.subr.bf16.mxu0 0
        %2801 = vmatpush1.bf16.msra.mxu0 %v2779
        %2802 = vmatprep.subr.bf16.mxu0 0
        %2803 = vmatpush1.bf16.msra.mxu0 %v2780
        %2804 = vmatprep.subr.bf16.mxu0 0
        %2805 = vmatpush1.bf16.msra.mxu0 %v2781
        %2806 = vmatprep.subr.bf16.mxu0 0
        %2807 = vmatpush1.bf16.msra.mxu0 0
        %2808 = vmatprep.subr.bf16.mxu0 0
        %2809 = vmatpush1.bf16.msra.mxu0 0
        %2810 = vmatprep.subr.bf16.mxu0 0
        %2811 = vmatpush1.bf16.msra.mxu0 0
        %2812 = vmatprep.subr.bf16.mxu0 0
        %2813 = vmatpush1.bf16.msra.mxu0 0
        %2814 = vmatprep.subr.bf16.mxu0 0
        %2815 = vmatpush1.bf16.msra.mxu0 0
        %2816 = vmatprep.subr.bf16.mxu0 0
        %2817 = vmatpush1.bf16.msra.mxu0 0
        %2818 = vmatprep.subr.bf16.mxu0 0
        %2819 = vmatpush1.bf16.msra.mxu0 0
        %2820 = vmatprep.subr.bf16.mxu0 0
        %2821 = vmatpush1.bf16.msra.mxu0 0
        %2822 = vmatprep.mubr.bf16.mxu0 0
        %2823 = vmatmul.mubr.bf16.gmra.mrb[0].mxu0 %v2718
        %v2824 = vpop.f32.mrb[0].mxu0
        %v2825 = vadd.f32 %v2740, %v2824
        %v2826 = vpop.f32.mrb[0].mxu0
        %v2827 = vpop.f32.mrb[0].mxu0
        %v2828 = vpop.f32.mrb[0].mxu0
        %2829 = vdwg.mxu0
        %vm2830 = vcmp.ge.f32.partialorder %v2825, 0.0
        %v2831 = vmul.f32 %v2825, 0.01
        %v2832 = vsel %vm2830, %v2825, %v2831
        %2833 = vst [vmem:[%s496] sm:$0xff] %v2832
        %p2834 = scmp.lt.s32.totalorder %s20, 1
        %s2835 = scalar_select %p2834, %s20, 1
        %s2836 = smul.addr %s2835, 8
        %s2837 = scalar_lea.vmem %s9, %s2836
        // Predicated region
        $region95: #{discriminator_forward.1} parent=89 // pred_check
          %p2838 = pneg %p232
        $region96: #{discriminator_forward.1} parent=89 // pred_check_branch
          %2840 = sbr.rel (%p2838) target = $region98
        $region97: #{discriminator_forward.1} parent=89 // pred_region
          _
        $region98: #{discriminator_forward.1} parent=89 // pred_fallthru
          _
      $region90: #{discriminator_forward.1} parent=5 // pred_fallthru
        _
      %p2841 = scmp.le.s32.totalorder 2, %s15
      // Predicated region
      $region99: #{discriminator_forward.1} parent=5 // pred_check
        %p2842 = pneg %p2841
      $region100: #{discriminator_forward.1} parent=5 // pred_check_branch
        %2844 = sbr.rel (%p2842) target = $region102
      $region101: #{discriminator_forward.1} parent=5 // pred_region
        %s2845 = ssub.s32 %s15, 2
        // Predicated region
        $region103: #{discriminator_forward.1} parent=101 // pred_check
          %p2846 = pneg %p238
        $region104: #{discriminator_forward.1} parent=101 // pred_check_branch
          %2848 = sbr.rel (%p2846) target = $region106
        $region105: #{discriminator_forward.1} parent=101 // pred_region
          %p2849 = scmp.lt.s32.totalorder %s21, 1
          %s2850 = scalar_select %p2849, %s21, 1
          %s2851 = smul.addr %s2850, 8
          %s2852 = scalar_lea.vmem %s9, %s2851
        $region106: #{discriminator_forward.1} parent=101 // pred_fallthru
          _
      $region102: #{discriminator_forward.1} parent=5 // pred_fallthru
        _
    $region6: #{discriminator_forward.1} parent=1 // loop_footer
      %s19 = sadd.s32 1, %s15
    $region7: #{discriminator_forward.1} parent=1 // loop_footer_branch
      %14 = sbr.rel target = $region3
    $region8: #{discriminator_forward.1} parent=1 // loop_exit
      _

</llo_original>
